<compile_context>
chip_gen: v7x
topology: tpu7x:2x2x1
jax: 0.10.0
libtpu: 0.0.40
codegen_flags: <defaults>
</compile_context>

<pallas_src>
import jax
import jax.numpy as jnp
from jax.experimental import pallas as pl
from jax.experimental.pallas import tpu as pltpu


# -----------------------------------------------------------------------------
# Pallas kernel: full bidirectional LSTM over the sequence (grid=(), all VMEM).
# -----------------------------------------------------------------------------
def _bilstm_kernel(
    x_ref,      # (S*Bp, E)   embedded inputs, time-major, flattened
    h0_ref,     # (2, Bp, H)  initial hidden state (0 = fwd, 1 = rev)
    c0_ref,     # (2, Bp, H)  initial cell state
    w_in_ref,   # (E, 8H)     bf16  [W_ih_f^T | W_ih_r^T]
    whh_ref,    # (2H, 8H)    bf16  block-diag: [[W_hh_f^T, 0], [0, W_hh_r^T]]
    b_ref,      # (1, 8H)     f32   [b_ih_f + b_hh_f | b_ih_r + b_hh_r]
    y_ref,      # (S, Bp, 2H) output: [..., :H] = fwd, [..., H:] = rev
    hn_ref,     # (2, Bp, H)  final hidden state
    cn_ref,     # (2, Bp, H)  final cell state
    xw_ref,     # (S*Bp, 8H)  f32 VMEM scratch: hoisted input projection
):
    S, Bp, H2 = y_ref.shape
    H = H2 // 2
    H4 = 4 * H

    # --- (1) hoisted input projection + bias: one big MXU call, out of the
    #     serial h-dependency chain.  Materialized in VMEM scratch so the
    #     unrolled recurrence only keeps one (Bp, 4H) slice live per direction.
    x_bf = x_ref[...].astype(jnp.bfloat16)                         # (S*Bp, E)
    xw_ref[...] = jnp.dot(x_bf, w_in_ref[...],
                          preferred_element_type=jnp.float32) + b_ref[...]

    whh = whh_ref[...]   # stationary RHS for every recurrence step

    h_f = h0_ref[0]
    c_f = c0_ref[0]
    h_r = h0_ref[1]
    c_r = c0_ref[1]

    def gate_math(g4, c):
        # g4: (Bp, 4H) pre-activations in torch gate order [i, f, g, o]
        i = jax.nn.sigmoid(g4[:, 0 * H:1 * H])
        f = jax.nn.sigmoid(g4[:, 1 * H:2 * H])
        g = jnp.tanh(g4[:, 2 * H:3 * H])
        o = jax.nn.sigmoid(g4[:, 3 * H:4 * H])
        c_new = f * c + i * g
        h_new = o * jnp.tanh(c_new)
        return h_new, c_new

    # --- (2)+(3) fused fwd/rev recurrence, fully unrolled (S is small/static).
    # One (Bp, 2H) x (2H, 8H) matmul per step drives BOTH directions; the two
    # gate blocks form independent chains the scheduler can interleave.
    for k in range(S):
        tf = k            # forward time index
        tr = S - 1 - k    # reverse time index
        h_cat = jnp.concatenate([h_f, h_r], axis=-1).astype(jnp.bfloat16)
        gh = jnp.dot(h_cat, whh, preferred_element_type=jnp.float32)  # (Bp, 8H)

        xw_f = xw_ref[tf * Bp:(tf + 1) * Bp, 0:H4]        # (Bp, 4H) fwd pre-act
        xw_r = xw_ref[tr * Bp:(tr + 1) * Bp, H4:8 * H]    # (Bp, 4H) rev pre-act

        h_f, c_f = gate_math(gh[:, :H4] + xw_f, c_f)
        h_r, c_r = gate_math(gh[:, H4:] + xw_r, c_r)

        y_ref[tf, :, 0:H] = h_f
        y_ref[tr, :, H:H2] = h_r

    hn_ref[0] = h_f
    hn_ref[1] = h_r
    cn_ref[0] = c_f
    cn_ref[1] = c_r


# -----------------------------------------------------------------------------
# Wrapper: embedding lookup, batch padding, pallas_call plumbing.
# -----------------------------------------------------------------------------
def _next_multiple(x, m):
    return ((x + m - 1) // m) * m


@jax.jit
def encoder_forward(inputs, h0, c0, params):
    """inputs: (B, S) int32 token ids; h0/c0: (2, B, H) float32."""
    emb = params["embedding"]                     # (V, E), row 0 zeroed
    B, S = inputs.shape
    H = h0.shape[-1]
    E = emb.shape[1]

    # Embedding lookup + dropout(p=0.0) == identity; go straight to time-major.
    # TODO(synk): fuse the gather into the kernel via scalar-prefetched token
    # ids once the vocabulary table is guaranteed VMEM-resident.
    x = jnp.take(emb, inputs.T, axis=0)           # (S, B, E)

    # Pad batch to a full sublane tile (8): full-vreg gate math + dense stores.
    Bp = _next_multiple(B, 8)
    if Bp != B:
        x = jnp.pad(x, ((0, 0), (0, Bp - B), (0, 0)))
        h0 = jnp.pad(h0, ((0, 0), (0, Bp - B), (0, 0)))
        c0 = jnp.pad(c0, ((0, 0), (0, Bp - B), (0, 0)))
    x = x.reshape(S * Bp, E)

    vmem = pl.BlockSpec(memory_space=pltpu.MemorySpace.VMEM)
    out_shapes = (
        jax.ShapeDtypeStruct((S, Bp, 2 * H), jnp.float32),   # y (both dirs)
        jax.ShapeDtypeStruct((2, Bp, H), jnp.float32),       # h_n
        jax.ShapeDtypeStruct((2, Bp, H), jnp.float32),       # c_n
    )

    # Whole problem is VMEM-resident at these sizes, so grid=().
    # TODO(synk): for large S*B*E (or on v7x with 64 MiB VMEM) tile the sequence
    # with a grid / split the two directions across the two TensorCores.
    y, h_n, c_n = pl.pallas_call(
        _bilstm_kernel,
        out_shape=out_shapes,
        in_specs=[vmem] * 6,
        out_specs=(vmem, vmem, vmem),
        scratch_shapes=[pltpu.VMEM((S * Bp, 8 * H), jnp.float32)],
    )(x, h0, c0, params["w_in"], params["whh_blk"], params["bias"])

    y = jnp.transpose(y[:, :B, :], (1, 0, 2))     # (B, S, 2H) batch-first
    return y, (h_n[:, :B, :], c_n[:, :B, :])


# -----------------------------------------------------------------------------
# Parameters (PyTorch-equivalent shapes) and kernel-layout packing.
# -----------------------------------------------------------------------------
def init_raw_params(key, vocabulary_size, embedding_size, hidden_size):
    V, E, H = vocabulary_size, embedding_size, hidden_size
    keys = jax.random.split(key, 9)
    scale = float(H) ** -0.5                      # PyTorch LSTM init range

    def uni(k, shape):
        return jax.random.uniform(k, shape, jnp.float32, -scale, scale)

    emb = jax.random.normal(keys[0], (V, E), jnp.float32)
    emb = emb.at[0].set(0.0)                      # padding_idx=0

    return dict(
        embedding=emb,
        wih_f=uni(keys[1], (4 * H, E)), whh_f=uni(keys[2], (4 * H, H)),
        b_ih_f=uni(keys[3], (4 * H,)),  b_hh_f=uni(keys[4], (4 * H,)),
        wih_r=uni(keys[5], (4 * H, E)), whh_r=uni(keys[6], (4 * H, H)),
        b_ih_r=uni(keys[7], (4 * H,)),  b_hh_r=uni(keys[8], (4 * H,)),
    )


def pack_params(raw):
    """Pack PyTorch-layout weights into the fused kernel layout."""
    H = raw["whh_f"].shape[1]
    # Combined input weights: (E, 8H) = [fwd i,f,g,o | rev i,f,g,o], bf16.
    w_in = jnp.concatenate([raw["wih_f"].T, raw["wih_r"].T],
                           axis=1).astype(jnp.bfloat16)
    # Block-diagonal hidden weights: (2H, 8H), bf16, stationary RHS.
    whh_blk = jnp.zeros((2 * H, 8 * H), jnp.float32)
    whh_blk = whh_blk.at[:H, :4 * H].set(raw["whh_f"].T)
    whh_blk = whh_blk.at[H:, 4 * H:].set(raw["whh_r"].T)
    # Combined bias (b_ih + b_hh per direction), f32, folded into x-projection.
    bias = jnp.concatenate([raw["b_ih_f"] + raw["b_hh_f"],
                            raw["b_ih_r"] + raw["b_hh_r"]]).reshape(1, 8 * H)
    return dict(embedding=raw["embedding"], w_in=w_in,
                whh_blk=whh_blk.astype(jnp.bfloat16), bias=bias)


# -----------------------------------------------------------------------------
# Pure-JAX reference (mirrors the kernel's bf16-weight / f32-accumulate math).
# -----------------------------------------------------------------------------
def reference_forward(inputs, h0, c0, raw):
    B, S = inputs.shape
    H = h0.shape[-1]
    x = jnp.take(raw["embedding"], inputs, axis=0)   # (B, S, E)

    def run_dir(wih, whh, b_ih, b_hh, h, c, reverse):
        w1 = wih.T.astype(jnp.bfloat16)
        w2 = whh.T.astype(jnp.bfloat16)
        b = (b_ih + b_hh)[None, :]
        ys = [None] * S
        order = range(S - 1, -1, -1) if reverse else range(S)
        for t in order:
            g = (jnp.dot(x[:, t, :].astype(jnp.bfloat16), w1,
                         preferred_element_type=jnp.float32)
                 + jnp.dot(h.astype(jnp.bfloat16), w2,
                           preferred_element_type=jnp.float32) + b)
            i = jax.nn.sigmoid(g[:, 0 * H:1 * H])
            f = jax.nn.sigmoid(g[:, 1 * H:2 * H])
            gg = jnp.tanh(g[:, 2 * H:3 * H])
            o = jax.nn.sigmoid(g[:, 3 * H:4 * H])
            c = f * c + i * gg
            h = o * jnp.tanh(c)
            ys[t] = h
        return jnp.stack(ys, axis=1), h, c

    yf, hf, cf = run_dir(raw["wih_f"], raw["whh_f"], raw["b_ih_f"],
                         raw["b_hh_f"], h0[0], c0[0], reverse=False)
    yr, hr, cr = run_dir(raw["wih_r"], raw["whh_r"], raw["b_ih_r"],
                         raw["b_hh_r"], h0[1], c0[1], reverse=True)
    y = jnp.concatenate([yf, yr], axis=-1)
    return y, (jnp.stack([hf, hr]), jnp.stack([cf, cr]))


if __name__ == "__main__":
    # Small shapes consistent with the module (lane-friendly: E = H = 128).
    V, E, H = 64, 128, 128
    B, S = 2, 8

    key = jax.random.PRNGKey(0)
    k_tok, k_h, k_c, k_par = jax.random.split(key, 4)

    inputs = jax.random.randint(k_tok, (B, S), 0, V, dtype=jnp.int32)  # (B, S)
    h0 = 0.1 * jax.random.normal(k_h, (2, B, H), jnp.float32)          # (2, B, H)
    c0 = 0.1 * jax.random.normal(k_c, (2, B, H), jnp.float32)          # (2, B, H)

    raw = init_raw_params(k_par, V, E, H)
    params = pack_params(raw)

    y, (h_n, c_n) = encoder_forward(inputs, h0, c0, params)
    jax.block_until_ready((y, h_n, c_n))

    assert y.shape == (B, S, 2 * H)
    assert h_n.shape == (2, B, H) and c_n.shape == (2, B, H)
    assert bool(jnp.isfinite(y).all()) and bool(jnp.isfinite(h_n).all())

    # Correctness vs. pure-JAX reference using the same bf16-weight math.
    y_ref, (h_ref, c_ref) = reference_forward(inputs, h0, c0, raw)
    assert float(jnp.max(jnp.abs(y - y_ref))) < 5e-3
    assert float(jnp.max(jnp.abs(h_n - h_ref))) < 5e-3
    assert float(jnp.max(jnp.abs(c_n - c_ref))) < 5e-3

    print("KERNEL_OK")
</pallas_src>

<mosaic_0001>
module attributes {stable_mosaic.version = 11 : i64} {
  func.func @_bilstm_kernel(%arg0: memref<64x128xf32, #tpu.memory_space<vmem>>, %arg1: memref<2x8x128xf32, #tpu.memory_space<vmem>>, %arg2: memref<2x8x128xf32, #tpu.memory_space<vmem>>, %arg3: memref<128x1024xbf16, #tpu.memory_space<vmem>>, %arg4: memref<256x1024xbf16, #tpu.memory_space<vmem>>, %arg5: memref<1x1024xf32, #tpu.memory_space<vmem>>, %arg6: memref<8x8x256xf32, #tpu.memory_space<vmem>>, %arg7: memref<2x8x128xf32, #tpu.memory_space<vmem>>, %arg8: memref<2x8x128xf32, #tpu.memory_space<vmem>>, %arg9: memref<64x1024xf32, #tpu.memory_space<vmem>>) attributes {dimension_semantics = [], scalar_prefetch = 0 : i64, scratch_operands = 1 : i64, tpu.core_type = #tpu.core_type<tc>} {
    %c0 = arith.constant 0 : index
    %c0_0 = arith.constant 0 : index
    %0 = vector.load %arg0[%c0, %c0_0] : memref<64x128xf32, #tpu.memory_space<vmem>>, vector<64x128xf32>
    %1 = arith.truncf %0 : vector<64x128xf32> to vector<64x128xbf16>
    %c0_1 = arith.constant 0 : index
    %c0_2 = arith.constant 0 : index
    %2 = vector.load %arg3[%c0_1, %c0_2] : memref<128x1024xbf16, #tpu.memory_space<vmem>>, vector<128x1024xbf16>
    %cst = arith.constant dense<0.000000e+00> : vector<64x1024xf32>
    %3 = tpu.matmul %1, %2, %cst {dimension_numbers = #tpu.dot_dimension_numbers<[1], [0], [0], [1], [0, 0, 1, 1], [], []>} : vector<64x128xbf16>, vector<128x1024xbf16>, vector<64x1024xf32> -> vector<64x1024xf32>
    %c0_3 = arith.constant 0 : index
    %c0_4 = arith.constant 0 : index
    %4 = vector.load %arg5[%c0_3, %c0_4] : memref<1x1024xf32, #tpu.memory_space<vmem>>, vector<1x1024xf32>
    %5 = vector.broadcast %4 : vector<1x1024xf32> to vector<64x1024xf32>
    %6 = arith.addf %3, %5 : vector<64x1024xf32>
    %c0_5 = arith.constant 0 : index
    %c0_6 = arith.constant 0 : index
    %7 = vector.load %arg9[%c0_5, %c0_6] : memref<64x1024xf32, #tpu.memory_space<vmem>>, vector<64x1024xf32>
    tpu.vector_store %arg9[%c0_5, %c0_6], %6 {strides = array<i32>} : memref<64x1024xf32, #tpu.memory_space<vmem>>, vector<64x1024xf32>,
    %c0_7 = arith.constant 0 : index
    %c0_8 = arith.constant 0 : index
    %8 = vector.load %arg4[%c0_7, %c0_8] : memref<256x1024xbf16, #tpu.memory_space<vmem>>, vector<256x1024xbf16>
    %c0_9 = arith.constant 0 : index
    %c0_10 = arith.constant 0 : index
    %c0_11 = arith.constant 0 : index
    %9 = vector.load %arg1[%c0_9, %c0_10, %c0_11] : memref<2x8x128xf32, #tpu.memory_space<vmem>>, vector<1x8x128xf32>
    %10 = vector.shape_cast %9 : vector<1x8x128xf32> to vector<8x128xf32>
    %c0_12 = arith.constant 0 : index
    %c0_13 = arith.constant 0 : index
    %c0_14 = arith.constant 0 : index
    %11 = vector.load %arg2[%c0_12, %c0_13, %c0_14] : memref<2x8x128xf32, #tpu.memory_space<vmem>>, vector<1x8x128xf32>
    %12 = vector.shape_cast %11 : vector<1x8x128xf32> to vector<8x128xf32>
    %c1 = arith.constant 1 : index
    %c0_15 = arith.constant 0 : index
    %c0_16 = arith.constant 0 : index
    %13 = vector.load %arg1[%c1, %c0_15, %c0_16] : memref<2x8x128xf32, #tpu.memory_space<vmem>>, vector<1x8x128xf32>
    %14 = vector.shape_cast %13 : vector<1x8x128xf32> to vector<8x128xf32>
    %c1_17 = arith.constant 1 : index
    %c0_18 = arith.constant 0 : index
    %c0_19 = arith.constant 0 : index
    %15 = vector.load %arg2[%c1_17, %c0_18, %c0_19] : memref<2x8x128xf32, #tpu.memory_space<vmem>>, vector<1x8x128xf32>
    %16 = vector.shape_cast %15 : vector<1x8x128xf32> to vector<8x128xf32>
    %17 = tpu.concatenate %10, %14 in 1 : vector<8x128xf32>, vector<8x128xf32> -> vector<8x256xf32>
    %18 = arith.truncf %17 : vector<8x256xf32> to vector<8x256xbf16>
    %cst_20 = arith.constant dense<0.000000e+00> : vector<8x1024xf32>
    %19 = tpu.matmul %18, %8, %cst_20 {dimension_numbers = #tpu.dot_dimension_numbers<[1], [0], [0], [1], [0, 0, 1, 1], [], []>} : vector<8x256xbf16>, vector<256x1024xbf16>, vector<8x1024xf32> -> vector<8x1024xf32>
    %c0_21 = arith.constant 0 : index
    %c0_22 = arith.constant 0 : index
    %20 = vector.load %arg9[%c0_21, %c0_22] : memref<64x1024xf32, #tpu.memory_space<vmem>>, vector<8x512xf32>
    %c56 = arith.constant 56 : index
    %c512 = arith.constant 512 : index
    %21 = vector.load %arg9[%c56, %c512] : memref<64x1024xf32, #tpu.memory_space<vmem>>, vector<8x512xf32>
    %22 = vector.extract_strided_slice %19 {offsets = [0, 0], sizes = [8, 512], strides = [1, 1]} : vector<8x1024xf32> to vector<8x512xf32>
    %23 = arith.addf %22, %20 : vector<8x512xf32>
    %24 = vector.extract_strided_slice %23 {offsets = [0, 0], sizes = [8, 128], strides = [1, 1]} : vector<8x512xf32> to vector<8x128xf32>
    %25 = arith.negf %24 : vector<8x128xf32>
    %26 = math.exp %25 : vector<8x128xf32>
    %cst_23 = arith.constant 1.000000e+00 : f32
    %27 = vector.broadcast %cst_23 : f32 to vector<8x128xf32>
    %28 = arith.addf %27, %26 : vector<8x128xf32>
    %29 = arith.divf %27, %28 : vector<8x128xf32>
    %30 = vector.extract_strided_slice %23 {offsets = [0, 128], sizes = [8, 128], strides = [1, 1]} : vector<8x512xf32> to vector<8x128xf32>
    %31 = arith.negf %30 : vector<8x128xf32>
    %32 = math.exp %31 : vector<8x128xf32>
    %cst_24 = arith.constant 1.000000e+00 : f32
    %33 = vector.broadcast %cst_24 : f32 to vector<8x128xf32>
    %34 = arith.addf %33, %32 : vector<8x128xf32>
    %35 = arith.divf %33, %34 : vector<8x128xf32>
    %36 = vector.extract_strided_slice %23 {offsets = [0, 256], sizes = [8, 128], strides = [1, 1]} : vector<8x512xf32> to vector<8x128xf32>
    %37 = math.tanh %36 : vector<8x128xf32>
    %38 = vector.extract_strided_slice %23 {offsets = [0, 384], sizes = [8, 128], strides = [1, 1]} : vector<8x512xf32> to vector<8x128xf32>
    %39 = arith.negf %38 : vector<8x128xf32>
    %40 = math.exp %39 : vector<8x128xf32>
    %cst_25 = arith.constant 1.000000e+00 : f32
    %41 = vector.broadcast %cst_25 : f32 to vector<8x128xf32>
    %42 = arith.addf %41, %40 : vector<8x128xf32>
    %43 = arith.divf %41, %42 : vector<8x128xf32>
    %44 = arith.mulf %35, %12 : vector<8x128xf32>
    %45 = arith.mulf %29, %37 : vector<8x128xf32>
    %46 = arith.addf %44, %45 : vector<8x128xf32>
    %47 = math.tanh %46 : vector<8x128xf32>
    %48 = arith.mulf %43, %47 : vector<8x128xf32>
    %49 = vector.extract_strided_slice %19 {offsets = [0, 512], sizes = [8, 512], strides = [1, 1]} : vector<8x1024xf32> to vector<8x512xf32>
    %50 = arith.addf %49, %21 : vector<8x512xf32>
    %51 = vector.extract_strided_slice %50 {offsets = [0, 0], sizes = [8, 128], strides = [1, 1]} : vector<8x512xf32> to vector<8x128xf32>
    %52 = arith.negf %51 : vector<8x128xf32>
    %53 = math.exp %52 : vector<8x128xf32>
    %cst_26 = arith.constant 1.000000e+00 : f32
    %54 = vector.broadcast %cst_26 : f32 to vector<8x128xf32>
    %55 = arith.addf %54, %53 : vector<8x128xf32>
    %56 = arith.divf %54, %55 : vector<8x128xf32>
    %57 = vector.extract_strided_slice %50 {offsets = [0, 128], sizes = [8, 128], strides = [1, 1]} : vector<8x512xf32> to vector<8x128xf32>
    %58 = arith.negf %57 : vector<8x128xf32>
    %59 = math.exp %58 : vector<8x128xf32>
    %cst_27 = arith.constant 1.000000e+00 : f32
    %60 = vector.broadcast %cst_27 : f32 to vector<8x128xf32>
    %61 = arith.addf %60, %59 : vector<8x128xf32>
    %62 = arith.divf %60, %61 : vector<8x128xf32>
    %63 = vector.extract_strided_slice %50 {offsets = [0, 256], sizes = [8, 128], strides = [1, 1]} : vector<8x512xf32> to vector<8x128xf32>
    %64 = math.tanh %63 : vector<8x128xf32>
    %65 = vector.extract_strided_slice %50 {offsets = [0, 384], sizes = [8, 128], strides = [1, 1]} : vector<8x512xf32> to vector<8x128xf32>
    %66 = arith.negf %65 : vector<8x128xf32>
    %67 = math.exp %66 : vector<8x128xf32>
    %cst_28 = arith.constant 1.000000e+00 : f32
    %68 = vector.broadcast %cst_28 : f32 to vector<8x128xf32>
    %69 = arith.addf %68, %67 : vector<8x128xf32>
    %70 = arith.divf %68, %69 : vector<8x128xf32>
    %71 = arith.mulf %62, %16 : vector<8x128xf32>
    %72 = arith.mulf %56, %64 : vector<8x128xf32>
    %73 = arith.addf %71, %72 : vector<8x128xf32>
    %74 = math.tanh %73 : vector<8x128xf32>
    %75 = arith.mulf %70, %74 : vector<8x128xf32>
    %c0_29 = arith.constant 0 : index
    %c0_30 = arith.constant 0 : index
    %c0_31 = arith.constant 0 : index
    %76 = vector.load %arg6[%c0_29, %c0_30, %c0_31] : memref<8x8x256xf32, #tpu.memory_space<vmem>>, vector<1x8x128xf32>
    %77 = vector.shape_cast %76 : vector<1x8x128xf32> to vector<8x128xf32>
    %78 = vector.shape_cast %48 : vector<8x128xf32> to vector<1x8x128xf32>
    tpu.vector_store %arg6[%c0_29, %c0_30, %c0_31], %78 {strides = array<i32>} : memref<8x8x256xf32, #tpu.memory_space<vmem>>, vector<1x8x128xf32>,
    %c7 = arith.constant 7 : index
    %c0_32 = arith.constant 0 : index
    %c128 = arith.constant 128 : index
    %79 = vector.load %arg6[%c7, %c0_32, %c128] : memref<8x8x256xf32, #tpu.memory_space<vmem>>, vector<1x8x128xf32>
    %80 = vector.shape_cast %79 : vector<1x8x128xf32> to vector<8x128xf32>
    %81 = vector.shape_cast %75 : vector<8x128xf32> to vector<1x8x128xf32>
    tpu.vector_store %arg6[%c7, %c0_32, %c128], %81 {strides = array<i32>} : memref<8x8x256xf32, #tpu.memory_space<vmem>>, vector<1x8x128xf32>,
    %82 = tpu.concatenate %48, %75 in 1 : vector<8x128xf32>, vector<8x128xf32> -> vector<8x256xf32>
    %83 = arith.truncf %82 : vector<8x256xf32> to vector<8x256xbf16>
    %cst_33 = arith.constant dense<0.000000e+00> : vector<8x1024xf32>
    %84 = tpu.matmul %83, %8, %cst_33 {dimension_numbers = #tpu.dot_dimension_numbers<[1], [0], [0], [1], [0, 0, 1, 1], [], []>} : vector<8x256xbf16>, vector<256x1024xbf16>, vector<8x1024xf32> -> vector<8x1024xf32>
    %c8 = arith.constant 8 : index
    %c0_34 = arith.constant 0 : index
    %85 = vector.load %arg9[%c8, %c0_34] : memref<64x1024xf32, #tpu.memory_space<vmem>>, vector<8x512xf32>
    %c48 = arith.constant 48 : index
    %c512_35 = arith.constant 512 : index
    %86 = vector.load %arg9[%c48, %c512_35] : memref<64x1024xf32, #tpu.memory_space<vmem>>, vector<8x512xf32>
    %87 = vector.extract_strided_slice %84 {offsets = [0, 0], sizes = [8, 512], strides = [1, 1]} : vector<8x1024xf32> to vector<8x512xf32>
    %88 = arith.addf %87, %85 : vector<8x512xf32>
    %89 = vector.extract_strided_slice %88 {offsets = [0, 0], sizes = [8, 128], strides = [1, 1]} : vector<8x512xf32> to vector<8x128xf32>
    %90 = arith.negf %89 : vector<8x128xf32>
    %91 = math.exp %90 : vector<8x128xf32>
    %cst_36 = arith.constant 1.000000e+00 : f32
    %92 = vector.broadcast %cst_36 : f32 to vector<8x128xf32>
    %93 = arith.addf %92, %91 : vector<8x128xf32>
    %94 = arith.divf %92, %93 : vector<8x128xf32>
    %95 = vector.extract_strided_slice %88 {offsets = [0, 128], sizes = [8, 128], strides = [1, 1]} : vector<8x512xf32> to vector<8x128xf32>
    %96 = arith.negf %95 : vector<8x128xf32>
    %97 = math.exp %96 : vector<8x128xf32>
    %cst_37 = arith.constant 1.000000e+00 : f32
    %98 = vector.broadcast %cst_37 : f32 to vector<8x128xf32>
    %99 = arith.addf %98, %97 : vector<8x128xf32>
    %100 = arith.divf %98, %99 : vector<8x128xf32>
    %101 = vector.extract_strided_slice %88 {offsets = [0, 256], sizes = [8, 128], strides = [1, 1]} : vector<8x512xf32> to vector<8x128xf32>
    %102 = math.tanh %101 : vector<8x128xf32>
    %103 = vector.extract_strided_slice %88 {offsets = [0, 384], sizes = [8, 128], strides = [1, 1]} : vector<8x512xf32> to vector<8x128xf32>
    %104 = arith.negf %103 : vector<8x128xf32>
    %105 = math.exp %104 : vector<8x128xf32>
    %cst_38 = arith.constant 1.000000e+00 : f32
    %106 = vector.broadcast %cst_38 : f32 to vector<8x128xf32>
    %107 = arith.addf %106, %105 : vector<8x128xf32>
    %108 = arith.divf %106, %107 : vector<8x128xf32>
    %109 = arith.mulf %100, %46 : vector<8x128xf32>
    %110 = arith.mulf %94, %102 : vector<8x128xf32>
    %111 = arith.addf %109, %110 : vector<8x128xf32>
    %112 = math.tanh %111 : vector<8x128xf32>
    %113 = arith.mulf %108, %112 : vector<8x128xf32>
    %114 = vector.extract_strided_slice %84 {offsets = [0, 512], sizes = [8, 512], strides = [1, 1]} : vector<8x1024xf32> to vector<8x512xf32>
    %115 = arith.addf %114, %86 : vector<8x512xf32>
    %116 = vector.extract_strided_slice %115 {offsets = [0, 0], sizes = [8, 128], strides = [1, 1]} : vector<8x512xf32> to vector<8x128xf32>
    %117 = arith.negf %116 : vector<8x128xf32>
    %118 = math.exp %117 : vector<8x128xf32>
    %cst_39 = arith.constant 1.000000e+00 : f32
    %119 = vector.broadcast %cst_39 : f32 to vector<8x128xf32>
    %120 = arith.addf %119, %118 : vector<8x128xf32>
    %121 = arith.divf %119, %120 : vector<8x128xf32>
    %122 = vector.extract_strided_slice %115 {offsets = [0, 128], sizes = [8, 128], strides = [1, 1]} : vector<8x512xf32> to vector<8x128xf32>
    %123 = arith.negf %122 : vector<8x128xf32>
    %124 = math.exp %123 : vector<8x128xf32>
    %cst_40 = arith.constant 1.000000e+00 : f32
    %125 = vector.broadcast %cst_40 : f32 to vector<8x128xf32>
    %126 = arith.addf %125, %124 : vector<8x128xf32>
    %127 = arith.divf %125, %126 : vector<8x128xf32>
    %128 = vector.extract_strided_slice %115 {offsets = [0, 256], sizes = [8, 128], strides = [1, 1]} : vector<8x512xf32> to vector<8x128xf32>
    %129 = math.tanh %128 : vector<8x128xf32>
    %130 = vector.extract_strided_slice %115 {offsets = [0, 384], sizes = [8, 128], strides = [1, 1]} : vector<8x512xf32> to vector<8x128xf32>
    %131 = arith.negf %130 : vector<8x128xf32>
    %132 = math.exp %131 : vector<8x128xf32>
    %cst_41 = arith.constant 1.000000e+00 : f32
    %133 = vector.broadcast %cst_41 : f32 to vector<8x128xf32>
    %134 = arith.addf %133, %132 : vector<8x128xf32>
    %135 = arith.divf %133, %134 : vector<8x128xf32>
    %136 = arith.mulf %127, %73 : vector<8x128xf32>
    %137 = arith.mulf %121, %129 : vector<8x128xf32>
    %138 = arith.addf %136, %137 : vector<8x128xf32>
    %139 = math.tanh %138 : vector<8x128xf32>
    %140 = arith.mulf %135, %139 : vector<8x128xf32>
    %c1_42 = arith.constant 1 : index
    %c0_43 = arith.constant 0 : index
    %c0_44 = arith.constant 0 : index
    %141 = vector.load %arg6[%c1_42, %c0_43, %c0_44] : memref<8x8x256xf32, #tpu.memory_space<vmem>>, vector<1x8x128xf32>
    %142 = vector.shape_cast %141 : vector<1x8x128xf32> to vector<8x128xf32>
    %143 = vector.shape_cast %113 : vector<8x128xf32> to vector<1x8x128xf32>
    tpu.vector_store %arg6[%c1_42, %c0_43, %c0_44], %143 {strides = array<i32>} : memref<8x8x256xf32, #tpu.memory_space<vmem>>, vector<1x8x128xf32>,
    %c6 = arith.constant 6 : index
    %c0_45 = arith.constant 0 : index
    %c128_46 = arith.constant 128 : index
    %144 = vector.load %arg6[%c6, %c0_45, %c128_46] : memref<8x8x256xf32, #tpu.memory_space<vmem>>, vector<1x8x128xf32>
    %145 = vector.shape_cast %144 : vector<1x8x128xf32> to vector<8x128xf32>
    %146 = vector.shape_cast %140 : vector<8x128xf32> to vector<1x8x128xf32>
    tpu.vector_store %arg6[%c6, %c0_45, %c128_46], %146 {strides = array<i32>} : memref<8x8x256xf32, #tpu.memory_space<vmem>>, vector<1x8x128xf32>,
    %147 = tpu.concatenate %113, %140 in 1 : vector<8x128xf32>, vector<8x128xf32> -> vector<8x256xf32>
    %148 = arith.truncf %147 : vector<8x256xf32> to vector<8x256xbf16>
    %cst_47 = arith.constant dense<0.000000e+00> : vector<8x1024xf32>
    %149 = tpu.matmul %148, %8, %cst_47 {dimension_numbers = #tpu.dot_dimension_numbers<[1], [0], [0], [1], [0, 0, 1, 1], [], []>} : vector<8x256xbf16>, vector<256x1024xbf16>, vector<8x1024xf32> -> vector<8x1024xf32>
    %c16 = arith.constant 16 : index
    %c0_48 = arith.constant 0 : index
    %150 = vector.load %arg9[%c16, %c0_48] : memref<64x1024xf32, #tpu.memory_space<vmem>>, vector<8x512xf32>
    %c40 = arith.constant 40 : index
    %c512_49 = arith.constant 512 : index
    %151 = vector.load %arg9[%c40, %c512_49] : memref<64x1024xf32, #tpu.memory_space<vmem>>, vector<8x512xf32>
    %152 = vector.extract_strided_slice %149 {offsets = [0, 0], sizes = [8, 512], strides = [1, 1]} : vector<8x1024xf32> to vector<8x512xf32>
    %153 = arith.addf %152, %150 : vector<8x512xf32>
    %154 = vector.extract_strided_slice %153 {offsets = [0, 0], sizes = [8, 128], strides = [1, 1]} : vector<8x512xf32> to vector<8x128xf32>
    %155 = arith.negf %154 : vector<8x128xf32>
    %156 = math.exp %155 : vector<8x128xf32>
    %cst_50 = arith.constant 1.000000e+00 : f32
    %157 = vector.broadcast %cst_50 : f32 to vector<8x128xf32>
    %158 = arith.addf %157, %156 : vector<8x128xf32>
    %159 = arith.divf %157, %158 : vector<8x128xf32>
    %160 = vector.extract_strided_slice %153 {offsets = [0, 128], sizes = [8, 128], strides = [1, 1]} : vector<8x512xf32> to vector<8x128xf32>
    %161 = arith.negf %160 : vector<8x128xf32>
    %162 = math.exp %161 : vector<8x128xf32>
    %cst_51 = arith.constant 1.000000e+00 : f32
    %163 = vector.broadcast %cst_51 : f32 to vector<8x128xf32>
    %164 = arith.addf %163, %162 : vector<8x128xf32>
    %165 = arith.divf %163, %164 : vector<8x128xf32>
    %166 = vector.extract_strided_slice %153 {offsets = [0, 256], sizes = [8, 128], strides = [1, 1]} : vector<8x512xf32> to vector<8x128xf32>
    %167 = math.tanh %166 : vector<8x128xf32>
    %168 = vector.extract_strided_slice %153 {offsets = [0, 384], sizes = [8, 128], strides = [1, 1]} : vector<8x512xf32> to vector<8x128xf32>
    %169 = arith.negf %168 : vector<8x128xf32>
    %170 = math.exp %169 : vector<8x128xf32>
    %cst_52 = arith.constant 1.000000e+00 : f32
    %171 = vector.broadcast %cst_52 : f32 to vector<8x128xf32>
    %172 = arith.addf %171, %170 : vector<8x128xf32>
    %173 = arith.divf %171, %172 : vector<8x128xf32>
    %174 = arith.mulf %165, %111 : vector<8x128xf32>
    %175 = arith.mulf %159, %167 : vector<8x128xf32>
    %176 = arith.addf %174, %175 : vector<8x128xf32>
    %177 = math.tanh %176 : vector<8x128xf32>
    %178 = arith.mulf %173, %177 : vector<8x128xf32>
    %179 = vector.extract_strided_slice %149 {offsets = [0, 512], sizes = [8, 512], strides = [1, 1]} : vector<8x1024xf32> to vector<8x512xf32>
    %180 = arith.addf %179, %151 : vector<8x512xf32>
    %181 = vector.extract_strided_slice %180 {offsets = [0, 0], sizes = [8, 128], strides = [1, 1]} : vector<8x512xf32> to vector<8x128xf32>
    %182 = arith.negf %181 : vector<8x128xf32>
    %183 = math.exp %182 : vector<8x128xf32>
    %cst_53 = arith.constant 1.000000e+00 : f32
    %184 = vector.broadcast %cst_53 : f32 to vector<8x128xf32>
    %185 = arith.addf %184, %183 : vector<8x128xf32>
    %186 = arith.divf %184, %185 : vector<8x128xf32>
    %187 = vector.extract_strided_slice %180 {offsets = [0, 128], sizes = [8, 128], strides = [1, 1]} : vector<8x512xf32> to vector<8x128xf32>
    %188 = arith.negf %187 : vector<8x128xf32>
    %189 = math.exp %188 : vector<8x128xf32>
    %cst_54 = arith.constant 1.000000e+00 : f32
    %190 = vector.broadcast %cst_54 : f32 to vector<8x128xf32>
    %191 = arith.addf %190, %189 : vector<8x128xf32>
    %192 = arith.divf %190, %191 : vector<8x128xf32>
    %193 = vector.extract_strided_slice %180 {offsets = [0, 256], sizes = [8, 128], strides = [1, 1]} : vector<8x512xf32> to vector<8x128xf32>
    %194 = math.tanh %193 : vector<8x128xf32>
    %195 = vector.extract_strided_slice %180 {offsets = [0, 384], sizes = [8, 128], strides = [1, 1]} : vector<8x512xf32> to vector<8x128xf32>
    %196 = arith.negf %195 : vector<8x128xf32>
    %197 = math.exp %196 : vector<8x128xf32>
    %cst_55 = arith.constant 1.000000e+00 : f32
    %198 = vector.broadcast %cst_55 : f32 to vector<8x128xf32>
    %199 = arith.addf %198, %197 : vector<8x128xf32>
    %200 = arith.divf %198, %199 : vector<8x128xf32>
    %201 = arith.mulf %192, %138 : vector<8x128xf32>
    %202 = arith.mulf %186, %194 : vector<8x128xf32>
    %203 = arith.addf %201, %202 : vector<8x128xf32>
    %204 = math.tanh %203 : vector<8x128xf32>
    %205 = arith.mulf %200, %204 : vector<8x128xf32>
    %c2 = arith.constant 2 : index
    %c0_56 = arith.constant 0 : index
    %c0_57 = arith.constant 0 : index
    %206 = vector.load %arg6[%c2, %c0_56, %c0_57] : memref<8x8x256xf32, #tpu.memory_space<vmem>>, vector<1x8x128xf32>
    %207 = vector.shape_cast %206 : vector<1x8x128xf32> to vector<8x128xf32>
    %208 = vector.shape_cast %178 : vector<8x128xf32> to vector<1x8x128xf32>
    tpu.vector_store %arg6[%c2, %c0_56, %c0_57], %208 {strides = array<i32>} : memref<8x8x256xf32, #tpu.memory_space<vmem>>, vector<1x8x128xf32>,
    %c5 = arith.constant 5 : index
    %c0_58 = arith.constant 0 : index
    %c128_59 = arith.constant 128 : index
    %209 = vector.load %arg6[%c5, %c0_58, %c128_59] : memref<8x8x256xf32, #tpu.memory_space<vmem>>, vector<1x8x128xf32>
    %210 = vector.shape_cast %209 : vector<1x8x128xf32> to vector<8x128xf32>
    %211 = vector.shape_cast %205 : vector<8x128xf32> to vector<1x8x128xf32>
    tpu.vector_store %arg6[%c5, %c0_58, %c128_59], %211 {strides = array<i32>} : memref<8x8x256xf32, #tpu.memory_space<vmem>>, vector<1x8x128xf32>,
    %212 = tpu.concatenate %178, %205 in 1 : vector<8x128xf32>, vector<8x128xf32> -> vector<8x256xf32>
    %213 = arith.truncf %212 : vector<8x256xf32> to vector<8x256xbf16>
    %cst_60 = arith.constant dense<0.000000e+00> : vector<8x1024xf32>
    %214 = tpu.matmul %213, %8, %cst_60 {dimension_numbers = #tpu.dot_dimension_numbers<[1], [0], [0], [1], [0, 0, 1, 1], [], []>} : vector<8x256xbf16>, vector<256x1024xbf16>, vector<8x1024xf32> -> vector<8x1024xf32>
    %c24 = arith.constant 24 : index
    %c0_61 = arith.constant 0 : index
    %215 = vector.load %arg9[%c24, %c0_61] : memref<64x1024xf32, #tpu.memory_space<vmem>>, vector<8x512xf32>
    %c32 = arith.constant 32 : index
    %c512_62 = arith.constant 512 : index
    %216 = vector.load %arg9[%c32, %c512_62] : memref<64x1024xf32, #tpu.memory_space<vmem>>, vector<8x512xf32>
    %217 = vector.extract_strided_slice %214 {offsets = [0, 0], sizes = [8, 512], strides = [1, 1]} : vector<8x1024xf32> to vector<8x512xf32>
    %218 = arith.addf %217, %215 : vector<8x512xf32>
    %219 = vector.extract_strided_slice %218 {offsets = [0, 0], sizes = [8, 128], strides = [1, 1]} : vector<8x512xf32> to vector<8x128xf32>
    %220 = arith.negf %219 : vector<8x128xf32>
    %221 = math.exp %220 : vector<8x128xf32>
    %cst_63 = arith.constant 1.000000e+00 : f32
    %222 = vector.broadcast %cst_63 : f32 to vector<8x128xf32>
    %223 = arith.addf %222, %221 : vector<8x128xf32>
    %224 = arith.divf %222, %223 : vector<8x128xf32>
    %225 = vector.extract_strided_slice %218 {offsets = [0, 128], sizes = [8, 128], strides = [1, 1]} : vector<8x512xf32> to vector<8x128xf32>
    %226 = arith.negf %225 : vector<8x128xf32>
    %227 = math.exp %226 : vector<8x128xf32>
    %cst_64 = arith.constant 1.000000e+00 : f32
    %228 = vector.broadcast %cst_64 : f32 to vector<8x128xf32>
    %229 = arith.addf %228, %227 : vector<8x128xf32>
    %230 = arith.divf %228, %229 : vector<8x128xf32>
    %231 = vector.extract_strided_slice %218 {offsets = [0, 256], sizes = [8, 128], strides = [1, 1]} : vector<8x512xf32> to vector<8x128xf32>
    %232 = math.tanh %231 : vector<8x128xf32>
    %233 = vector.extract_strided_slice %218 {offsets = [0, 384], sizes = [8, 128], strides = [1, 1]} : vector<8x512xf32> to vector<8x128xf32>
    %234 = arith.negf %233 : vector<8x128xf32>
    %235 = math.exp %234 : vector<8x128xf32>
    %cst_65 = arith.constant 1.000000e+00 : f32
    %236 = vector.broadcast %cst_65 : f32 to vector<8x128xf32>
    %237 = arith.addf %236, %235 : vector<8x128xf32>
    %238 = arith.divf %236, %237 : vector<8x128xf32>
    %239 = arith.mulf %230, %176 : vector<8x128xf32>
    %240 = arith.mulf %224, %232 : vector<8x128xf32>
    %241 = arith.addf %239, %240 : vector<8x128xf32>
    %242 = math.tanh %241 : vector<8x128xf32>
    %243 = arith.mulf %238, %242 : vector<8x128xf32>
    %244 = vector.extract_strided_slice %214 {offsets = [0, 512], sizes = [8, 512], strides = [1, 1]} : vector<8x1024xf32> to vector<8x512xf32>
    %245 = arith.addf %244, %216 : vector<8x512xf32>
    %246 = vector.extract_strided_slice %245 {offsets = [0, 0], sizes = [8, 128], strides = [1, 1]} : vector<8x512xf32> to vector<8x128xf32>
    %247 = arith.negf %246 : vector<8x128xf32>
    %248 = math.exp %247 : vector<8x128xf32>
    %cst_66 = arith.constant 1.000000e+00 : f32
    %249 = vector.broadcast %cst_66 : f32 to vector<8x128xf32>
    %250 = arith.addf %249, %248 : vector<8x128xf32>
    %251 = arith.divf %249, %250 : vector<8x128xf32>
    %252 = vector.extract_strided_slice %245 {offsets = [0, 128], sizes = [8, 128], strides = [1, 1]} : vector<8x512xf32> to vector<8x128xf32>
    %253 = arith.negf %252 : vector<8x128xf32>
    %254 = math.exp %253 : vector<8x128xf32>
    %cst_67 = arith.constant 1.000000e+00 : f32
    %255 = vector.broadcast %cst_67 : f32 to vector<8x128xf32>
    %256 = arith.addf %255, %254 : vector<8x128xf32>
    %257 = arith.divf %255, %256 : vector<8x128xf32>
    %258 = vector.extract_strided_slice %245 {offsets = [0, 256], sizes = [8, 128], strides = [1, 1]} : vector<8x512xf32> to vector<8x128xf32>
    %259 = math.tanh %258 : vector<8x128xf32>
    %260 = vector.extract_strided_slice %245 {offsets = [0, 384], sizes = [8, 128], strides = [1, 1]} : vector<8x512xf32> to vector<8x128xf32>
    %261 = arith.negf %260 : vector<8x128xf32>
    %262 = math.exp %261 : vector<8x128xf32>
    %cst_68 = arith.constant 1.000000e+00 : f32
    %263 = vector.broadcast %cst_68 : f32 to vector<8x128xf32>
    %264 = arith.addf %263, %262 : vector<8x128xf32>
    %265 = arith.divf %263, %264 : vector<8x128xf32>
    %266 = arith.mulf %257, %203 : vector<8x128xf32>
    %267 = arith.mulf %251, %259 : vector<8x128xf32>
    %268 = arith.addf %266, %267 : vector<8x128xf32>
    %269 = math.tanh %268 : vector<8x128xf32>
    %270 = arith.mulf %265, %269 : vector<8x128xf32>
    %c3 = arith.constant 3 : index
    %c0_69 = arith.constant 0 : index
    %c0_70 = arith.constant 0 : index
    %271 = vector.load %arg6[%c3, %c0_69, %c0_70] : memref<8x8x256xf32, #tpu.memory_space<vmem>>, vector<1x8x128xf32>
    %272 = vector.shape_cast %271 : vector<1x8x128xf32> to vector<8x128xf32>
    %273 = vector.shape_cast %243 : vector<8x128xf32> to vector<1x8x128xf32>
    tpu.vector_store %arg6[%c3, %c0_69, %c0_70], %273 {strides = array<i32>} : memref<8x8x256xf32, #tpu.memory_space<vmem>>, vector<1x8x128xf32>,
    %c4 = arith.constant 4 : index
    %c0_71 = arith.constant 0 : index
    %c128_72 = arith.constant 128 : index
    %274 = vector.load %arg6[%c4, %c0_71, %c128_72] : memref<8x8x256xf32, #tpu.memory_space<vmem>>, vector<1x8x128xf32>
    %275 = vector.shape_cast %274 : vector<1x8x128xf32> to vector<8x128xf32>
    %276 = vector.shape_cast %270 : vector<8x128xf32> to vector<1x8x128xf32>
    tpu.vector_store %arg6[%c4, %c0_71, %c128_72], %276 {strides = array<i32>} : memref<8x8x256xf32, #tpu.memory_space<vmem>>, vector<1x8x128xf32>,
    %277 = tpu.concatenate %243, %270 in 1 : vector<8x128xf32>, vector<8x128xf32> -> vector<8x256xf32>
    %278 = arith.truncf %277 : vector<8x256xf32> to vector<8x256xbf16>
    %cst_73 = arith.constant dense<0.000000e+00> : vector<8x1024xf32>
    %279 = tpu.matmul %278, %8, %cst_73 {dimension_numbers = #tpu.dot_dimension_numbers<[1], [0], [0], [1], [0, 0, 1, 1], [], []>} : vector<8x256xbf16>, vector<256x1024xbf16>, vector<8x1024xf32> -> vector<8x1024xf32>
    %c32_74 = arith.constant 32 : index
    %c0_75 = arith.constant 0 : index
    %280 = vector.load %arg9[%c32_74, %c0_75] : memref<64x1024xf32, #tpu.memory_space<vmem>>, vector<8x512xf32>
    %c24_76 = arith.constant 24 : index
    %c512_77 = arith.constant 512 : index
    %281 = vector.load %arg9[%c24_76, %c512_77] : memref<64x1024xf32, #tpu.memory_space<vmem>>, vector<8x512xf32>
    %282 = vector.extract_strided_slice %279 {offsets = [0, 0], sizes = [8, 512], strides = [1, 1]} : vector<8x1024xf32> to vector<8x512xf32>
    %283 = arith.addf %282, %280 : vector<8x512xf32>
    %284 = vector.extract_strided_slice %283 {offsets = [0, 0], sizes = [8, 128], strides = [1, 1]} : vector<8x512xf32> to vector<8x128xf32>
    %285 = arith.negf %284 : vector<8x128xf32>
    %286 = math.exp %285 : vector<8x128xf32>
    %cst_78 = arith.constant 1.000000e+00 : f32
    %287 = vector.broadcast %cst_78 : f32 to vector<8x128xf32>
    %288 = arith.addf %287, %286 : vector<8x128xf32>
    %289 = arith.divf %287, %288 : vector<8x128xf32>
    %290 = vector.extract_strided_slice %283 {offsets = [0, 128], sizes = [8, 128], strides = [1, 1]} : vector<8x512xf32> to vector<8x128xf32>
    %291 = arith.negf %290 : vector<8x128xf32>
    %292 = math.exp %291 : vector<8x128xf32>
    %cst_79 = arith.constant 1.000000e+00 : f32
    %293 = vector.broadcast %cst_79 : f32 to vector<8x128xf32>
    %294 = arith.addf %293, %292 : vector<8x128xf32>
    %295 = arith.divf %293, %294 : vector<8x128xf32>
    %296 = vector.extract_strided_slice %283 {offsets = [0, 256], sizes = [8, 128], strides = [1, 1]} : vector<8x512xf32> to vector<8x128xf32>
    %297 = math.tanh %296 : vector<8x128xf32>
    %298 = vector.extract_strided_slice %283 {offsets = [0, 384], sizes = [8, 128], strides = [1, 1]} : vector<8x512xf32> to vector<8x128xf32>
    %299 = arith.negf %298 : vector<8x128xf32>
    %300 = math.exp %299 : vector<8x128xf32>
    %cst_80 = arith.constant 1.000000e+00 : f32
    %301 = vector.broadcast %cst_80 : f32 to vector<8x128xf32>
    %302 = arith.addf %301, %300 : vector<8x128xf32>
    %303 = arith.divf %301, %302 : vector<8x128xf32>
    %304 = arith.mulf %295, %241 : vector<8x128xf32>
    %305 = arith.mulf %289, %297 : vector<8x128xf32>
    %306 = arith.addf %304, %305 : vector<8x128xf32>
    %307 = math.tanh %306 : vector<8x128xf32>
    %308 = arith.mulf %303, %307 : vector<8x128xf32>
    %309 = vector.extract_strided_slice %279 {offsets = [0, 512], sizes = [8, 512], strides = [1, 1]} : vector<8x1024xf32> to vector<8x512xf32>
    %310 = arith.addf %309, %281 : vector<8x512xf32>
    %311 = vector.extract_strided_slice %310 {offsets = [0, 0], sizes = [8, 128], strides = [1, 1]} : vector<8x512xf32> to vector<8x128xf32>
    %312 = arith.negf %311 : vector<8x128xf32>
    %313 = math.exp %312 : vector<8x128xf32>
    %cst_81 = arith.constant 1.000000e+00 : f32
    %314 = vector.broadcast %cst_81 : f32 to vector<8x128xf32>
    %315 = arith.addf %314, %313 : vector<8x128xf32>
    %316 = arith.divf %314, %315 : vector<8x128xf32>
    %317 = vector.extract_strided_slice %310 {offsets = [0, 128], sizes = [8, 128], strides = [1, 1]} : vector<8x512xf32> to vector<8x128xf32>
    %318 = arith.negf %317 : vector<8x128xf32>
    %319 = math.exp %318 : vector<8x128xf32>
    %cst_82 = arith.constant 1.000000e+00 : f32
    %320 = vector.broadcast %cst_82 : f32 to vector<8x128xf32>
    %321 = arith.addf %320, %319 : vector<8x128xf32>
    %322 = arith.divf %320, %321 : vector<8x128xf32>
    %323 = vector.extract_strided_slice %310 {offsets = [0, 256], sizes = [8, 128], strides = [1, 1]} : vector<8x512xf32> to vector<8x128xf32>
    %324 = math.tanh %323 : vector<8x128xf32>
    %325 = vector.extract_strided_slice %310 {offsets = [0, 384], sizes = [8, 128], strides = [1, 1]} : vector<8x512xf32> to vector<8x128xf32>
    %326 = arith.negf %325 : vector<8x128xf32>
    %327 = math.exp %326 : vector<8x128xf32>
    %cst_83 = arith.constant 1.000000e+00 : f32
    %328 = vector.broadcast %cst_83 : f32 to vector<8x128xf32>
    %329 = arith.addf %328, %327 : vector<8x128xf32>
    %330 = arith.divf %328, %329 : vector<8x128xf32>
    %331 = arith.mulf %322, %268 : vector<8x128xf32>
    %332 = arith.mulf %316, %324 : vector<8x128xf32>
    %333 = arith.addf %331, %332 : vector<8x128xf32>
    %334 = math.tanh %333 : vector<8x128xf32>
    %335 = arith.mulf %330, %334 : vector<8x128xf32>
    %c4_84 = arith.constant 4 : index
    %c0_85 = arith.constant 0 : index
    %c0_86 = arith.constant 0 : index
    %336 = vector.load %arg6[%c4_84, %c0_85, %c0_86] : memref<8x8x256xf32, #tpu.memory_space<vmem>>, vector<1x8x128xf32>
    %337 = vector.shape_cast %336 : vector<1x8x128xf32> to vector<8x128xf32>
    %338 = vector.shape_cast %308 : vector<8x128xf32> to vector<1x8x128xf32>
    tpu.vector_store %arg6[%c4_84, %c0_85, %c0_86], %338 {strides = array<i32>} : memref<8x8x256xf32, #tpu.memory_space<vmem>>, vector<1x8x128xf32>,
    %c3_87 = arith.constant 3 : index
    %c0_88 = arith.constant 0 : index
    %c128_89 = arith.constant 128 : index
    %339 = vector.load %arg6[%c3_87, %c0_88, %c128_89] : memref<8x8x256xf32, #tpu.memory_space<vmem>>, vector<1x8x128xf32>
    %340 = vector.shape_cast %339 : vector<1x8x128xf32> to vector<8x128xf32>
    %341 = vector.shape_cast %335 : vector<8x128xf32> to vector<1x8x128xf32>
    tpu.vector_store %arg6[%c3_87, %c0_88, %c128_89], %341 {strides = array<i32>} : memref<8x8x256xf32, #tpu.memory_space<vmem>>, vector<1x8x128xf32>,
    %342 = tpu.concatenate %308, %335 in 1 : vector<8x128xf32>, vector<8x128xf32> -> vector<8x256xf32>
    %343 = arith.truncf %342 : vector<8x256xf32> to vector<8x256xbf16>
    %cst_90 = arith.constant dense<0.000000e+00> : vector<8x1024xf32>
    %344 = tpu.matmul %343, %8, %cst_90 {dimension_numbers = #tpu.dot_dimension_numbers<[1], [0], [0], [1], [0, 0, 1, 1], [], []>} : vector<8x256xbf16>, vector<256x1024xbf16>, vector<8x1024xf32> -> vector<8x1024xf32>
    %c40_91 = arith.constant 40 : index
    %c0_92 = arith.constant 0 : index
    %345 = vector.load %arg9[%c40_91, %c0_92] : memref<64x1024xf32, #tpu.memory_space<vmem>>, vector<8x512xf32>
    %c16_93 = arith.constant 16 : index
    %c512_94 = arith.constant 512 : index
    %346 = vector.load %arg9[%c16_93, %c512_94] : memref<64x1024xf32, #tpu.memory_space<vmem>>, vector<8x512xf32>
    %347 = vector.extract_strided_slice %344 {offsets = [0, 0], sizes = [8, 512], strides = [1, 1]} : vector<8x1024xf32> to vector<8x512xf32>
    %348 = arith.addf %347, %345 : vector<8x512xf32>
    %349 = vector.extract_strided_slice %348 {offsets = [0, 0], sizes = [8, 128], strides = [1, 1]} : vector<8x512xf32> to vector<8x128xf32>
    %350 = arith.negf %349 : vector<8x128xf32>
    %351 = math.exp %350 : vector<8x128xf32>
    %cst_95 = arith.constant 1.000000e+00 : f32
    %352 = vector.broadcast %cst_95 : f32 to vector<8x128xf32>
    %353 = arith.addf %352, %351 : vector<8x128xf32>
    %354 = arith.divf %352, %353 : vector<8x128xf32>
    %355 = vector.extract_strided_slice %348 {offsets = [0, 128], sizes = [8, 128], strides = [1, 1]} : vector<8x512xf32> to vector<8x128xf32>
    %356 = arith.negf %355 : vector<8x128xf32>
    %357 = math.exp %356 : vector<8x128xf32>
    %cst_96 = arith.constant 1.000000e+00 : f32
    %358 = vector.broadcast %cst_96 : f32 to vector<8x128xf32>
    %359 = arith.addf %358, %357 : vector<8x128xf32>
    %360 = arith.divf %358, %359 : vector<8x128xf32>
    %361 = vector.extract_strided_slice %348 {offsets = [0, 256], sizes = [8, 128], strides = [1, 1]} : vector<8x512xf32> to vector<8x128xf32>
    %362 = math.tanh %361 : vector<8x128xf32>
    %363 = vector.extract_strided_slice %348 {offsets = [0, 384], sizes = [8, 128], strides = [1, 1]} : vector<8x512xf32> to vector<8x128xf32>
    %364 = arith.negf %363 : vector<8x128xf32>
    %365 = math.exp %364 : vector<8x128xf32>
    %cst_97 = arith.constant 1.000000e+00 : f32
    %366 = vector.broadcast %cst_97 : f32 to vector<8x128xf32>
    %367 = arith.addf %366, %365 : vector<8x128xf32>
    %368 = arith.divf %366, %367 : vector<8x128xf32>
    %369 = arith.mulf %360, %306 : vector<8x128xf32>
    %370 = arith.mulf %354, %362 : vector<8x128xf32>
    %371 = arith.addf %369, %370 : vector<8x128xf32>
    %372 = math.tanh %371 : vector<8x128xf32>
    %373 = arith.mulf %368, %372 : vector<8x128xf32>
    %374 = vector.extract_strided_slice %344 {offsets = [0, 512], sizes = [8, 512], strides = [1, 1]} : vector<8x1024xf32> to vector<8x512xf32>
    %375 = arith.addf %374, %346 : vector<8x512xf32>
    %376 = vector.extract_strided_slice %375 {offsets = [0, 0], sizes = [8, 128], strides = [1, 1]} : vector<8x512xf32> to vector<8x128xf32>
    %377 = arith.negf %376 : vector<8x128xf32>
    %378 = math.exp %377 : vector<8x128xf32>
    %cst_98 = arith.constant 1.000000e+00 : f32
    %379 = vector.broadcast %cst_98 : f32 to vector<8x128xf32>
    %380 = arith.addf %379, %378 : vector<8x128xf32>
    %381 = arith.divf %379, %380 : vector<8x128xf32>
    %382 = vector.extract_strided_slice %375 {offsets = [0, 128], sizes = [8, 128], strides = [1, 1]} : vector<8x512xf32> to vector<8x128xf32>
    %383 = arith.negf %382 : vector<8x128xf32>
    %384 = math.exp %383 : vector<8x128xf32>
    %cst_99 = arith.constant 1.000000e+00 : f32
    %385 = vector.broadcast %cst_99 : f32 to vector<8x128xf32>
    %386 = arith.addf %385, %384 : vector<8x128xf32>
    %387 = arith.divf %385, %386 : vector<8x128xf32>
    %388 = vector.extract_strided_slice %375 {offsets = [0, 256], sizes = [8, 128], strides = [1, 1]} : vector<8x512xf32> to vector<8x128xf32>
    %389 = math.tanh %388 : vector<8x128xf32>
    %390 = vector.extract_strided_slice %375 {offsets = [0, 384], sizes = [8, 128], strides = [1, 1]} : vector<8x512xf32> to vector<8x128xf32>
    %391 = arith.negf %390 : vector<8x128xf32>
    %392 = math.exp %391 : vector<8x128xf32>
    %cst_100 = arith.constant 1.000000e+00 : f32
    %393 = vector.broadcast %cst_100 : f32 to vector<8x128xf32>
    %394 = arith.addf %393, %392 : vector<8x128xf32>
    %395 = arith.divf %393, %394 : vector<8x128xf32>
    %396 = arith.mulf %387, %333 : vector<8x128xf32>
    %397 = arith.mulf %381, %389 : vector<8x128xf32>
    %398 = arith.addf %396, %397 : vector<8x128xf32>
    %399 = math.tanh %398 : vector<8x128xf32>
    %400 = arith.mulf %395, %399 : vector<8x128xf32>
    %c5_101 = arith.constant 5 : index
    %c0_102 = arith.constant 0 : index
    %c0_103 = arith.constant 0 : index
    %401 = vector.load %arg6[%c5_101, %c0_102, %c0_103] : memref<8x8x256xf32, #tpu.memory_space<vmem>>, vector<1x8x128xf32>
    %402 = vector.shape_cast %401 : vector<1x8x128xf32> to vector<8x128xf32>
    %403 = vector.shape_cast %373 : vector<8x128xf32> to vector<1x8x128xf32>
    tpu.vector_store %arg6[%c5_101, %c0_102, %c0_103], %403 {strides = array<i32>} : memref<8x8x256xf32, #tpu.memory_space<vmem>>, vector<1x8x128xf32>,
    %c2_104 = arith.constant 2 : index
    %c0_105 = arith.constant 0 : index
    %c128_106 = arith.constant 128 : index
    %404 = vector.load %arg6[%c2_104, %c0_105, %c128_106] : memref<8x8x256xf32, #tpu.memory_space<vmem>>, vector<1x8x128xf32>
    %405 = vector.shape_cast %404 : vector<1x8x128xf32> to vector<8x128xf32>
    %406 = vector.shape_cast %400 : vector<8x128xf32> to vector<1x8x128xf32>
    tpu.vector_store %arg6[%c2_104, %c0_105, %c128_106], %406 {strides = array<i32>} : memref<8x8x256xf32, #tpu.memory_space<vmem>>, vector<1x8x128xf32>,
    %407 = tpu.concatenate %373, %400 in 1 : vector<8x128xf32>, vector<8x128xf32> -> vector<8x256xf32>
    %408 = arith.truncf %407 : vector<8x256xf32> to vector<8x256xbf16>
    %cst_107 = arith.constant dense<0.000000e+00> : vector<8x1024xf32>
    %409 = tpu.matmul %408, %8, %cst_107 {dimension_numbers = #tpu.dot_dimension_numbers<[1], [0], [0], [1], [0, 0, 1, 1], [], []>} : vector<8x256xbf16>, vector<256x1024xbf16>, vector<8x1024xf32> -> vector<8x1024xf32>
    %c48_108 = arith.constant 48 : index
    %c0_109 = arith.constant 0 : index
    %410 = vector.load %arg9[%c48_108, %c0_109] : memref<64x1024xf32, #tpu.memory_space<vmem>>, vector<8x512xf32>
    %c8_110 = arith.constant 8 : index
    %c512_111 = arith.constant 512 : index
    %411 = vector.load %arg9[%c8_110, %c512_111] : memref<64x1024xf32, #tpu.memory_space<vmem>>, vector<8x512xf32>
    %412 = vector.extract_strided_slice %409 {offsets = [0, 0], sizes = [8, 512], strides = [1, 1]} : vector<8x1024xf32> to vector<8x512xf32>
    %413 = arith.addf %412, %410 : vector<8x512xf32>
    %414 = vector.extract_strided_slice %413 {offsets = [0, 0], sizes = [8, 128], strides = [1, 1]} : vector<8x512xf32> to vector<8x128xf32>
    %415 = arith.negf %414 : vector<8x128xf32>
    %416 = math.exp %415 : vector<8x128xf32>
    %cst_112 = arith.constant 1.000000e+00 : f32
    %417 = vector.broadcast %cst_112 : f32 to vector<8x128xf32>
    %418 = arith.addf %417, %416 : vector<8x128xf32>
    %419 = arith.divf %417, %418 : vector<8x128xf32>
    %420 = vector.extract_strided_slice %413 {offsets = [0, 128], sizes = [8, 128], strides = [1, 1]} : vector<8x512xf32> to vector<8x128xf32>
    %421 = arith.negf %420 : vector<8x128xf32>
    %422 = math.exp %421 : vector<8x128xf32>
    %cst_113 = arith.constant 1.000000e+00 : f32
    %423 = vector.broadcast %cst_113 : f32 to vector<8x128xf32>
    %424 = arith.addf %423, %422 : vector<8x128xf32>
    %425 = arith.divf %423, %424 : vector<8x128xf32>
    %426 = vector.extract_strided_slice %413 {offsets = [0, 256], sizes = [8, 128], strides = [1, 1]} : vector<8x512xf32> to vector<8x128xf32>
    %427 = math.tanh %426 : vector<8x128xf32>
    %428 = vector.extract_strided_slice %413 {offsets = [0, 384], sizes = [8, 128], strides = [1, 1]} : vector<8x512xf32> to vector<8x128xf32>
    %429 = arith.negf %428 : vector<8x128xf32>
    %430 = math.exp %429 : vector<8x128xf32>
    %cst_114 = arith.constant 1.000000e+00 : f32
    %431 = vector.broadcast %cst_114 : f32 to vector<8x128xf32>
    %432 = arith.addf %431, %430 : vector<8x128xf32>
    %433 = arith.divf %431, %432 : vector<8x128xf32>
    %434 = arith.mulf %425, %371 : vector<8x128xf32>
    %435 = arith.mulf %419, %427 : vector<8x128xf32>
    %436 = arith.addf %434, %435 : vector<8x128xf32>
    %437 = math.tanh %436 : vector<8x128xf32>
    %438 = arith.mulf %433, %437 : vector<8x128xf32>
    %439 = vector.extract_strided_slice %409 {offsets = [0, 512], sizes = [8, 512], strides = [1, 1]} : vector<8x1024xf32> to vector<8x512xf32>
    %440 = arith.addf %439, %411 : vector<8x512xf32>
    %441 = vector.extract_strided_slice %440 {offsets = [0, 0], sizes = [8, 128], strides = [1, 1]} : vector<8x512xf32> to vector<8x128xf32>
    %442 = arith.negf %441 : vector<8x128xf32>
    %443 = math.exp %442 : vector<8x128xf32>
    %cst_115 = arith.constant 1.000000e+00 : f32
    %444 = vector.broadcast %cst_115 : f32 to vector<8x128xf32>
    %445 = arith.addf %444, %443 : vector<8x128xf32>
    %446 = arith.divf %444, %445 : vector<8x128xf32>
    %447 = vector.extract_strided_slice %440 {offsets = [0, 128], sizes = [8, 128], strides = [1, 1]} : vector<8x512xf32> to vector<8x128xf32>
    %448 = arith.negf %447 : vector<8x128xf32>
    %449 = math.exp %448 : vector<8x128xf32>
    %cst_116 = arith.constant 1.000000e+00 : f32
    %450 = vector.broadcast %cst_116 : f32 to vector<8x128xf32>
    %451 = arith.addf %450, %449 : vector<8x128xf32>
    %452 = arith.divf %450, %451 : vector<8x128xf32>
    %453 = vector.extract_strided_slice %440 {offsets = [0, 256], sizes = [8, 128], strides = [1, 1]} : vector<8x512xf32> to vector<8x128xf32>
    %454 = math.tanh %453 : vector<8x128xf32>
    %455 = vector.extract_strided_slice %440 {offsets = [0, 384], sizes = [8, 128], strides = [1, 1]} : vector<8x512xf32> to vector<8x128xf32>
    %456 = arith.negf %455 : vector<8x128xf32>
    %457 = math.exp %456 : vector<8x128xf32>
    %cst_117 = arith.constant 1.000000e+00 : f32
    %458 = vector.broadcast %cst_117 : f32 to vector<8x128xf32>
    %459 = arith.addf %458, %457 : vector<8x128xf32>
    %460 = arith.divf %458, %459 : vector<8x128xf32>
    %461 = arith.mulf %452, %398 : vector<8x128xf32>
    %462 = arith.mulf %446, %454 : vector<8x128xf32>
    %463 = arith.addf %461, %462 : vector<8x128xf32>
    %464 = math.tanh %463 : vector<8x128xf32>
    %465 = arith.mulf %460, %464 : vector<8x128xf32>
    %c6_118 = arith.constant 6 : index
    %c0_119 = arith.constant 0 : index
    %c0_120 = arith.constant 0 : index
    %466 = vector.load %arg6[%c6_118, %c0_119, %c0_120] : memref<8x8x256xf32, #tpu.memory_space<vmem>>, vector<1x8x128xf32>
    %467 = vector.shape_cast %466 : vector<1x8x128xf32> to vector<8x128xf32>
    %468 = vector.shape_cast %438 : vector<8x128xf32> to vector<1x8x128xf32>
    tpu.vector_store %arg6[%c6_118, %c0_119, %c0_120], %468 {strides = array<i32>} : memref<8x8x256xf32, #tpu.memory_space<vmem>>, vector<1x8x128xf32>,
    %c1_121 = arith.constant 1 : index
    %c0_122 = arith.constant 0 : index
    %c128_123 = arith.constant 128 : index
    %469 = vector.load %arg6[%c1_121, %c0_122, %c128_123] : memref<8x8x256xf32, #tpu.memory_space<vmem>>, vector<1x8x128xf32>
    %470 = vector.shape_cast %469 : vector<1x8x128xf32> to vector<8x128xf32>
    %471 = vector.shape_cast %465 : vector<8x128xf32> to vector<1x8x128xf32>
    tpu.vector_store %arg6[%c1_121, %c0_122, %c128_123], %471 {strides = array<i32>} : memref<8x8x256xf32, #tpu.memory_space<vmem>>, vector<1x8x128xf32>,
    %472 = tpu.concatenate %438, %465 in 1 : vector<8x128xf32>, vector<8x128xf32> -> vector<8x256xf32>
    %473 = arith.truncf %472 : vector<8x256xf32> to vector<8x256xbf16>
    %cst_124 = arith.constant dense<0.000000e+00> : vector<8x1024xf32>
    %474 = tpu.matmul %473, %8, %cst_124 {dimension_numbers = #tpu.dot_dimension_numbers<[1], [0], [0], [1], [0, 0, 1, 1], [], []>} : vector<8x256xbf16>, vector<256x1024xbf16>, vector<8x1024xf32> -> vector<8x1024xf32>
    %c56_125 = arith.constant 56 : index
    %c0_126 = arith.constant 0 : index
    %475 = vector.load %arg9[%c56_125, %c0_126] : memref<64x1024xf32, #tpu.memory_space<vmem>>, vector<8x512xf32>
    %c0_127 = arith.constant 0 : index
    %c512_128 = arith.constant 512 : index
    %476 = vector.load %arg9[%c0_127, %c512_128] : memref<64x1024xf32, #tpu.memory_space<vmem>>, vector<8x512xf32>
    %477 = vector.extract_strided_slice %474 {offsets = [0, 0], sizes = [8, 512], strides = [1, 1]} : vector<8x1024xf32> to vector<8x512xf32>
    %478 = arith.addf %477, %475 : vector<8x512xf32>
    %479 = vector.extract_strided_slice %478 {offsets = [0, 0], sizes = [8, 128], strides = [1, 1]} : vector<8x512xf32> to vector<8x128xf32>
    %480 = arith.negf %479 : vector<8x128xf32>
    %481 = math.exp %480 : vector<8x128xf32>
    %cst_129 = arith.constant 1.000000e+00 : f32
    %482 = vector.broadcast %cst_129 : f32 to vector<8x128xf32>
    %483 = arith.addf %482, %481 : vector<8x128xf32>
    %484 = arith.divf %482, %483 : vector<8x128xf32>
    %485 = vector.extract_strided_slice %478 {offsets = [0, 128], sizes = [8, 128], strides = [1, 1]} : vector<8x512xf32> to vector<8x128xf32>
    %486 = arith.negf %485 : vector<8x128xf32>
    %487 = math.exp %486 : vector<8x128xf32>
    %cst_130 = arith.constant 1.000000e+00 : f32
    %488 = vector.broadcast %cst_130 : f32 to vector<8x128xf32>
    %489 = arith.addf %488, %487 : vector<8x128xf32>
    %490 = arith.divf %488, %489 : vector<8x128xf32>
    %491 = vector.extract_strided_slice %478 {offsets = [0, 256], sizes = [8, 128], strides = [1, 1]} : vector<8x512xf32> to vector<8x128xf32>
    %492 = math.tanh %491 : vector<8x128xf32>
    %493 = vector.extract_strided_slice %478 {offsets = [0, 384], sizes = [8, 128], strides = [1, 1]} : vector<8x512xf32> to vector<8x128xf32>
    %494 = arith.negf %493 : vector<8x128xf32>
    %495 = math.exp %494 : vector<8x128xf32>
    %cst_131 = arith.constant 1.000000e+00 : f32
    %496 = vector.broadcast %cst_131 : f32 to vector<8x128xf32>
    %497 = arith.addf %496, %495 : vector<8x128xf32>
    %498 = arith.divf %496, %497 : vector<8x128xf32>
    %499 = arith.mulf %490, %436 : vector<8x128xf32>
    %500 = arith.mulf %484, %492 : vector<8x128xf32>
    %501 = arith.addf %499, %500 : vector<8x128xf32>
    %502 = math.tanh %501 : vector<8x128xf32>
    %503 = arith.mulf %498, %502 : vector<8x128xf32>
    %504 = vector.extract_strided_slice %474 {offsets = [0, 512], sizes = [8, 512], strides = [1, 1]} : vector<8x1024xf32> to vector<8x512xf32>
    %505 = arith.addf %504, %476 : vector<8x512xf32>
    %506 = vector.extract_strided_slice %505 {offsets = [0, 0], sizes = [8, 128], strides = [1, 1]} : vector<8x512xf32> to vector<8x128xf32>
    %507 = arith.negf %506 : vector<8x128xf32>
    %508 = math.exp %507 : vector<8x128xf32>
    %cst_132 = arith.constant 1.000000e+00 : f32
    %509 = vector.broadcast %cst_132 : f32 to vector<8x128xf32>
    %510 = arith.addf %509, %508 : vector<8x128xf32>
    %511 = arith.divf %509, %510 : vector<8x128xf32>
    %512 = vector.extract_strided_slice %505 {offsets = [0, 128], sizes = [8, 128], strides = [1, 1]} : vector<8x512xf32> to vector<8x128xf32>
    %513 = arith.negf %512 : vector<8x128xf32>
    %514 = math.exp %513 : vector<8x128xf32>
    %cst_133 = arith.constant 1.000000e+00 : f32
    %515 = vector.broadcast %cst_133 : f32 to vector<8x128xf32>
    %516 = arith.addf %515, %514 : vector<8x128xf32>
    %517 = arith.divf %515, %516 : vector<8x128xf32>
    %518 = vector.extract_strided_slice %505 {offsets = [0, 256], sizes = [8, 128], strides = [1, 1]} : vector<8x512xf32> to vector<8x128xf32>
    %519 = math.tanh %518 : vector<8x128xf32>
    %520 = vector.extract_strided_slice %505 {offsets = [0, 384], sizes = [8, 128], strides = [1, 1]} : vector<8x512xf32> to vector<8x128xf32>
    %521 = arith.negf %520 : vector<8x128xf32>
    %522 = math.exp %521 : vector<8x128xf32>
    %cst_134 = arith.constant 1.000000e+00 : f32
    %523 = vector.broadcast %cst_134 : f32 to vector<8x128xf32>
    %524 = arith.addf %523, %522 : vector<8x128xf32>
    %525 = arith.divf %523, %524 : vector<8x128xf32>
    %526 = arith.mulf %517, %463 : vector<8x128xf32>
    %527 = arith.mulf %511, %519 : vector<8x128xf32>
    %528 = arith.addf %526, %527 : vector<8x128xf32>
    %529 = math.tanh %528 : vector<8x128xf32>
    %530 = arith.mulf %525, %529 : vector<8x128xf32>
    %c7_135 = arith.constant 7 : index
    %c0_136 = arith.constant 0 : index
    %c0_137 = arith.constant 0 : index
    %531 = vector.load %arg6[%c7_135, %c0_136, %c0_137] : memref<8x8x256xf32, #tpu.memory_space<vmem>>, vector<1x8x128xf32>
    %532 = vector.shape_cast %531 : vector<1x8x128xf32> to vector<8x128xf32>
    %533 = vector.shape_cast %503 : vector<8x128xf32> to vector<1x8x128xf32>
    tpu.vector_store %arg6[%c7_135, %c0_136, %c0_137], %533 {strides = array<i32>} : memref<8x8x256xf32, #tpu.memory_space<vmem>>, vector<1x8x128xf32>,
    %c0_138 = arith.constant 0 : index
    %c0_139 = arith.constant 0 : index
    %c128_140 = arith.constant 128 : index
    %534 = vector.load %arg6[%c0_138, %c0_139, %c128_140] : memref<8x8x256xf32, #tpu.memory_space<vmem>>, vector<1x8x128xf32>
    %535 = vector.shape_cast %534 : vector<1x8x128xf32> to vector<8x128xf32>
    %536 = vector.shape_cast %530 : vector<8x128xf32> to vector<1x8x128xf32>
    tpu.vector_store %arg6[%c0_138, %c0_139, %c128_140], %536 {strides = array<i32>} : memref<8x8x256xf32, #tpu.memory_space<vmem>>, vector<1x8x128xf32>,
    %c0_141 = arith.constant 0 : index
    %c0_142 = arith.constant 0 : index
    %c0_143 = arith.constant 0 : index
    %537 = vector.load %arg7[%c0_141, %c0_142, %c0_143] : memref<2x8x128xf32, #tpu.memory_space<vmem>>, vector<1x8x128xf32>
    %538 = vector.shape_cast %537 : vector<1x8x128xf32> to vector<8x128xf32>
    %539 = vector.shape_cast %503 : vector<8x128xf32> to vector<1x8x128xf32>
    tpu.vector_store %arg7[%c0_141, %c0_142, %c0_143], %539 {strides = array<i32>} : memref<2x8x128xf32, #tpu.memory_space<vmem>>, vector<1x8x128xf32>,
    %c1_144 = arith.constant 1 : index
    %c0_145 = arith.constant 0 : index
    %c0_146 = arith.constant 0 : index
    %540 = vector.load %arg7[%c1_144, %c0_145, %c0_146] : memref<2x8x128xf32, #tpu.memory_space<vmem>>, vector<1x8x128xf32>
    %541 = vector.shape_cast %540 : vector<1x8x128xf32> to vector<8x128xf32>
    %542 = vector.shape_cast %530 : vector<8x128xf32> to vector<1x8x128xf32>
    tpu.vector_store %arg7[%c1_144, %c0_145, %c0_146], %542 {strides = array<i32>} : memref<2x8x128xf32, #tpu.memory_space<vmem>>, vector<1x8x128xf32>,
    %c0_147 = arith.constant 0 : index
    %c0_148 = arith.constant 0 : index
    %c0_149 = arith.constant 0 : index
    %543 = vector.load %arg8[%c0_147, %c0_148, %c0_149] : memref<2x8x128xf32, #tpu.memory_space<vmem>>, vector<1x8x128xf32>
    %544 = vector.shape_cast %543 : vector<1x8x128xf32> to vector<8x128xf32>
    %545 = vector.shape_cast %501 : vector<8x128xf32> to vector<1x8x128xf32>
    tpu.vector_store %arg8[%c0_147, %c0_148, %c0_149], %545 {strides = array<i32>} : memref<2x8x128xf32, #tpu.memory_space<vmem>>, vector<1x8x128xf32>,
    %c1_150 = arith.constant 1 : index
    %c0_151 = arith.constant 0 : index
    %c0_152 = arith.constant 0 : index
    %546 = vector.load %arg8[%c1_150, %c0_151, %c0_152] : memref<2x8x128xf32, #tpu.memory_space<vmem>>, vector<1x8x128xf32>
    %547 = vector.shape_cast %546 : vector<1x8x128xf32> to vector<8x128xf32>
    %548 = vector.shape_cast %528 : vector<8x128xf32> to vector<1x8x128xf32>
    tpu.vector_store %arg8[%c1_150, %c0_151, %c0_152], %548 {strides = array<i32>} : memref<2x8x128xf32, #tpu.memory_space<vmem>>, vector<1x8x128xf32>,
    return
  }
}

</mosaic_0001>

<llo_original>
// kernel: encoder_forward.1
$region0: #{encoder_forward.1}
  #allocation0 [shape = 'u32[]', space=smem, size = 0x4, offset = 0x4, fixed_abs, tag = 'smem constant byte address 0x4 - core index']
  #allocation1 [shape = 'u32[144,128]{1,0:T(1,128)}', space=vmem, size = 0x12000, scoped, tag = 'internal scratch']
  #allocation2 [shape = 'f32[64,1024]{1,0:T(8,128)}', space=vmem, size = 0x40000, scoped, tag = 'scratch operand']
  %s0 = inlined_call_operand.vmem [shape: f32[64,128], index: 0, kind: input, shape index: {}]
  %s1 = inlined_call_operand.vmem [shape: f32[2,8,128], index: 1, kind: input, shape index: {}]
  %s2 = inlined_call_operand.vmem [shape: f32[2,8,128], index: 2, kind: input, shape index: {}]
  %s3 = inlined_call_operand.hbm [shape: bf16[128,1024], index: 3, kind: input, shape index: {}]
  %s4 = inlined_call_operand.hbm [shape: bf16[256,1024], index: 4, kind: input, shape index: {}]
  %s5 = inlined_call_operand.vmem [shape: f32[1,1024], index: 5, kind: input, shape index: {}]
  %s6 = inlined_call_operand.vmem [shape: f32[8,8,256], index: 6, kind: output, shape index: {0}]
  %s7 = inlined_call_operand.vmem [shape: f32[2,8,128], index: 7, kind: output, shape index: {1}]
  %s8 = inlined_call_operand.vmem [shape: f32[2,8,128], index: 8, kind: output, shape index: {2}]
  %9 = xla_tuple %s6, %s7, %s8
  %s10 = sld [smem:[#allocation0]]
  $region58: #{encoder_forward.1} parent=0
    _
  %s12 = ssub.s32 1, %s10
  %s13 = scalar_select 0, %s12, %s10
  $region1: #{encoder_forward.1} parent=0
    #allocation3 [shape = 'u8[262144]{0}', space=vmem, size = 0x40000, scoped, tag = 'input window, operand 3, single buffered']
    #allocation4 [shape = 's32[1]{0}', space=sflag, size = 0x4, scoped, tag = 'scoped memory for encoder_forward.1']
    #allocation5 [shape = 'u8[524288]{0}', space=vmem, size = 0x80000, scoped, tag = 'input window, operand 4, single buffered']
    #allocation6 [shape = 's32[1]{0}', space=sflag, size = 0x4, scoped, tag = 'scoped memory for encoder_forward.1']
    %14 = vsyncpa [#allocation4], 0
    %15 = vsyncpa [#allocation6], 0
    // Predicated region
    $region2: #{encoder_forward.1} parent=1 // pred_check
      _
    $region3: #{encoder_forward.1} parent=1 // pred_check_branch
      %17 = sbr.rel (0) target = $region5
    $region4: #{encoder_forward.1} parent=1 // pred_region
      _
    $region5: #{encoder_forward.1} parent=1 // pred_fallthru
      _
    // Predicated region
    $region6: #{encoder_forward.1} parent=1 // pred_check
      _
    $region7: #{encoder_forward.1} parent=1 // pred_check_branch
      %19 = sbr.rel (0) target = $region9
    $region8: #{encoder_forward.1} parent=1 // pred_region
      _
    $region9: #{encoder_forward.1} parent=1 // pred_fallthru
      _
    // Predicated region
    $region10: #{encoder_forward.1} parent=1 // pred_check
      _
    $region11: #{encoder_forward.1} parent=1 // pred_check_branch
      %21 = sbr.rel (0) target = $region13
    $region12: #{encoder_forward.1} parent=1 // pred_region
      _
    $region13: #{encoder_forward.1} parent=1 // pred_fallthru
      _
    // Predicated region
    $region14: #{encoder_forward.1} parent=1 // pred_check
      _
    $region15: #{encoder_forward.1} parent=1 // pred_check_branch
      %23 = sbr.rel (0) target = $region17
    $region16: #{encoder_forward.1} parent=1 // pred_region
      %s25 = ssub.s32 8192, 8192
      %26 = vsyncadd [#allocation4], %s25
      %s27 = sshll.u32 [#allocation3], 4
      %s28 = int_to_ptr.vmem [resolvable:$true] %s27
      %33 = dma.hbm_to_vmem [thread:$0]  %s3, 8192, %s28, [#allocation4], 512, 512, 32
    $region17: #{encoder_forward.1} parent=1 // pred_fallthru
      _
    // Predicated region
    $region18: #{encoder_forward.1} parent=1 // pred_check
      _
    $region19: #{encoder_forward.1} parent=1 // pred_check_branch
      %35 = sbr.rel (0) target = $region21
    $region20: #{encoder_forward.1} parent=1 // pred_region
      %s37 = ssub.s32 16384, 16384
      %38 = vsyncadd [#allocation6], %s37
      %s39 = sshll.u32 [#allocation5], 4
      %s40 = int_to_ptr.vmem [resolvable:$true] %s39
      %45 = dma.hbm_to_vmem [thread:$0]  %s4, 16384, %s40, [#allocation6], 512, 512, 32
    $region21: #{encoder_forward.1} parent=1 // pred_fallthru
      _
    // Predicated region
    $region22: #{encoder_forward.1} parent=1 // pred_check
      _
    $region23: #{encoder_forward.1} parent=1 // pred_check_branch
      %47 = sbr.rel (0) target = $region25
    $region24: #{encoder_forward.1} parent=1 // pred_region
      _
    $region25: #{encoder_forward.1} parent=1 // pred_fallthru
      _
    // Predicated region
    $region26: #{encoder_forward.1} parent=1 // pred_check
      _
    $region27: #{encoder_forward.1} parent=1 // pred_check_branch
      %49 = sbr.rel (0) target = $region29
    $region28: #{encoder_forward.1} parent=1 // pred_region
      %50 = dma.done [#allocation4], 8192
    $region29: #{encoder_forward.1} parent=1 // pred_fallthru
      _
    // Predicated region
    $region30: #{encoder_forward.1} parent=1 // pred_check
      _
    $region31: #{encoder_forward.1} parent=1 // pred_check_branch
      %52 = sbr.rel (0) target = $region33
    $region32: #{encoder_forward.1} parent=1 // pred_region
      %53 = dma.done [#allocation6], 16384
    $region33: #{encoder_forward.1} parent=1 // pred_fallthru
      _
    %v55 = vld [vmem:[%s0] sm:$0xff]
    %v56 = vld [vmem:[%s0 + $0x8] sm:$0xff]
    %v57 = vld [vmem:[%s0 + $0x10] sm:$0xff]
    %v58 = vld [vmem:[%s0 + $0x18] sm:$0xff]
    %v59 = vld [vmem:[%s0 + $0x20] sm:$0xff]
    %v60 = vld [vmem:[%s0 + $0x28] sm:$0xff]
    %v61 = vld [vmem:[%s0 + $0x30] sm:$0xff]
    %v62 = vld [vmem:[%s0 + $0x38] sm:$0xff]
    %v63 = vpack.c.bf16 %v56, %v55
    %v64 = vpack.c.bf16 %v58, %v57
    %v65 = vpack.c.bf16 %v60, %v59
    %v66 = vpack.c.bf16 %v62, %v61
    %v67 = vld [vmem:[#allocation3] sm:$0xff]
    %v68 = vld [vmem:[#allocation3 + $0x8] sm:$0xff]
    %v69 = vld [vmem:[#allocation3 + $0x10] sm:$0xff]
    %v70 = vld [vmem:[#allocation3 + $0x18] sm:$0xff]
    %v71 = vld [vmem:[#allocation3 + $0x20] sm:$0xff]
    %v72 = vld [vmem:[#allocation3 + $0x28] sm:$0xff]
    %v73 = vld [vmem:[#allocation3 + $0x30] sm:$0xff]
    %v74 = vld [vmem:[#allocation3 + $0x38] sm:$0xff]
    %v75 = vld [vmem:[#allocation3 + $0x40] sm:$0xff]
    %v76 = vld [vmem:[#allocation3 + $0x48] sm:$0xff]
    %v77 = vld [vmem:[#allocation3 + $0x50] sm:$0xff]
    %v78 = vld [vmem:[#allocation3 + $0x58] sm:$0xff]
    %v79 = vld [vmem:[#allocation3 + $0x60] sm:$0xff]
    %v80 = vld [vmem:[#allocation3 + $0x68] sm:$0xff]
    %v81 = vld [vmem:[#allocation3 + $0x70] sm:$0xff]
    %v82 = vld [vmem:[#allocation3 + $0x78] sm:$0xff]
    %v83 = vld [vmem:[#allocation3 + $0x80] sm:$0xff]
    %v84 = vld [vmem:[#allocation3 + $0x88] sm:$0xff]
    %v85 = vld [vmem:[#allocation3 + $0x90] sm:$0xff]
    %v86 = vld [vmem:[#allocation3 + $0x98] sm:$0xff]
    %v87 = vld [vmem:[#allocation3 + $0xa0] sm:$0xff]
    %v88 = vld [vmem:[#allocation3 + $0xa8] sm:$0xff]
    %v89 = vld [vmem:[#allocation3 + $0xb0] sm:$0xff]
    %v90 = vld [vmem:[#allocation3 + $0xb8] sm:$0xff]
    %v91 = vld [vmem:[#allocation3 + $0xc0] sm:$0xff]
    %v92 = vld [vmem:[#allocation3 + $0xc8] sm:$0xff]
    %v93 = vld [vmem:[#allocation3 + $0xd0] sm:$0xff]
    %v94 = vld [vmem:[#allocation3 + $0xd8] sm:$0xff]
    %v95 = vld [vmem:[#allocation3 + $0xe0] sm:$0xff]
    %v96 = vld [vmem:[#allocation3 + $0xe8] sm:$0xff]
    %v97 = vld [vmem:[#allocation3 + $0xf0] sm:$0xff]
    %v98 = vld [vmem:[#allocation3 + $0xf8] sm:$0xff]
    %v99 = vld [vmem:[#allocation3 + $0x100] sm:$0xff]
    %v100 = vld [vmem:[#allocation3 + $0x108] sm:$0xff]
    %v101 = vld [vmem:[#allocation3 + $0x110] sm:$0xff]
    %v102 = vld [vmem:[#allocation3 + $0x118] sm:$0xff]
    %v103 = vld [vmem:[#allocation3 + $0x120] sm:$0xff]
    %v104 = vld [vmem:[#allocation3 + $0x128] sm:$0xff]
    %v105 = vld [vmem:[#allocation3 + $0x130] sm:$0xff]
    %v106 = vld [vmem:[#allocation3 + $0x138] sm:$0xff]
    %v107 = vld [vmem:[#allocation3 + $0x140] sm:$0xff]
    %v108 = vld [vmem:[#allocation3 + $0x148] sm:$0xff]
    %v109 = vld [vmem:[#allocation3 + $0x150] sm:$0xff]
    %v110 = vld [vmem:[#allocation3 + $0x158] sm:$0xff]
    %v111 = vld [vmem:[#allocation3 + $0x160] sm:$0xff]
    %v112 = vld [vmem:[#allocation3 + $0x168] sm:$0xff]
    %v113 = vld [vmem:[#allocation3 + $0x170] sm:$0xff]
    %v114 = vld [vmem:[#allocation3 + $0x178] sm:$0xff]
    %v115 = vld [vmem:[#allocation3 + $0x180] sm:$0xff]
    %v116 = vld [vmem:[#allocation3 + $0x188] sm:$0xff]
    %v117 = vld [vmem:[#allocation3 + $0x190] sm:$0xff]
    %v118 = vld [vmem:[#allocation3 + $0x198] sm:$0xff]
    %v119 = vld [vmem:[#allocation3 + $0x1a0] sm:$0xff]
    %v120 = vld [vmem:[#allocation3 + $0x1a8] sm:$0xff]
    %v121 = vld [vmem:[#allocation3 + $0x1b0] sm:$0xff]
    %v122 = vld [vmem:[#allocation3 + $0x1b8] sm:$0xff]
    %v123 = vld [vmem:[#allocation3 + $0x1c0] sm:$0xff]
    %v124 = vld [vmem:[#allocation3 + $0x1c8] sm:$0xff]
    %v125 = vld [vmem:[#allocation3 + $0x1d0] sm:$0xff]
    %v126 = vld [vmem:[#allocation3 + $0x1d8] sm:$0xff]
    %v127 = vld [vmem:[#allocation3 + $0x1e0] sm:$0xff]
    %v128 = vld [vmem:[#allocation3 + $0x1e8] sm:$0xff]
    %v129 = vld [vmem:[#allocation3 + $0x1f0] sm:$0xff]
    %v130 = vld [vmem:[#allocation3 + $0x1f8] sm:$0xff]
    %v131 = vld [vmem:[%s5] sm:$0xff]
    %v133 = vlaneseq
    %v134 = vshrl.u32 %v133, 7
    %v135 = vsub.s32 0, %v134
    %v136 = vrot.slane %v131, %v135
    %v137 = vlaneseq
    %v138 = vshrl.u32 %v137, 7
    %v139 = vsub.s32 1, %v138
    %v140 = vrot.slane %v131, %v139
    %v141 = vlaneseq
    %v142 = vshrl.u32 %v141, 7
    %v143 = vsub.s32 2, %v142
    %v144 = vrot.slane %v131, %v143
    %v145 = vlaneseq
    %v146 = vshrl.u32 %v145, 7
    %v147 = vsub.s32 3, %v146
    %v148 = vrot.slane %v131, %v147
    %v149 = vlaneseq
    %v150 = vshrl.u32 %v149, 7
    %v151 = vsub.s32 4, %v150
    %v152 = vrot.slane %v131, %v151
    %v153 = vlaneseq
    %v154 = vshrl.u32 %v153, 7
    %v155 = vsub.s32 5, %v154
    %v156 = vrot.slane %v131, %v155
    %v157 = vlaneseq
    %v158 = vshrl.u32 %v157, 7
    %v159 = vsub.s32 6, %v158
    %v160 = vrot.slane %v131, %v159
    %v161 = vlaneseq
    %v162 = vshrl.u32 %v161, 7
    %v163 = vsub.s32 7, %v162
    %v164 = vrot.slane %v131, %v163
    %v237 = vunpack.c.l.b16 %v67
    %v238 = vunpack.c.h.b16 %v67
    %v239 = vunpack.c.l.b16 %v68
    %v240 = vunpack.c.h.b16 %v68
    %v241 = vunpack.c.l.b16 %v69
    %v242 = vunpack.c.h.b16 %v69
    %v243 = vunpack.c.l.b16 %v70
    %v244 = vunpack.c.h.b16 %v70
    %v245 = vunpack.c.l.b16 %v71
    %v246 = vunpack.c.h.b16 %v71
    %v247 = vunpack.c.l.b16 %v72
    %v248 = vunpack.c.h.b16 %v72
    %v249 = vunpack.c.l.b16 %v73
    %v250 = vunpack.c.h.b16 %v73
    %v251 = vunpack.c.l.b16 %v74
    %v252 = vunpack.c.h.b16 %v74
    %v253 = vunpack.c.l.b16 %v75
    %v254 = vunpack.c.h.b16 %v75
    %v255 = vunpack.c.l.b16 %v76
    %v256 = vunpack.c.h.b16 %v76
    %v257 = vunpack.c.l.b16 %v77
    %v258 = vunpack.c.h.b16 %v77
    %v259 = vunpack.c.l.b16 %v78
    %v260 = vunpack.c.h.b16 %v78
    %v261 = vunpack.c.l.b16 %v79
    %v262 = vunpack.c.h.b16 %v79
    %v263 = vunpack.c.l.b16 %v80
    %v264 = vunpack.c.h.b16 %v80
    %v265 = vunpack.c.l.b16 %v81
    %v266 = vunpack.c.h.b16 %v81
    %v267 = vunpack.c.l.b16 %v82
    %v268 = vunpack.c.h.b16 %v82
    %v269 = vunpack.c.l.b16 %v83
    %v270 = vunpack.c.h.b16 %v83
    %v271 = vunpack.c.l.b16 %v84
    %v272 = vunpack.c.h.b16 %v84
    %v273 = vunpack.c.l.b16 %v85
    %v274 = vunpack.c.h.b16 %v85
    %v275 = vunpack.c.l.b16 %v86
    %v276 = vunpack.c.h.b16 %v86
    %v277 = vunpack.c.l.b16 %v87
    %v278 = vunpack.c.h.b16 %v87
    %v279 = vunpack.c.l.b16 %v88
    %v280 = vunpack.c.h.b16 %v88
    %v281 = vunpack.c.l.b16 %v89
    %v282 = vunpack.c.h.b16 %v89
    %v283 = vunpack.c.l.b16 %v90
    %v284 = vunpack.c.h.b16 %v90
    %v285 = vunpack.c.l.b16 %v91
    %v286 = vunpack.c.h.b16 %v91
    %v287 = vunpack.c.l.b16 %v92
    %v288 = vunpack.c.h.b16 %v92
    %v289 = vunpack.c.l.b16 %v93
    %v290 = vunpack.c.h.b16 %v93
    %v291 = vunpack.c.l.b16 %v94
    %v292 = vunpack.c.h.b16 %v94
    %v293 = vunpack.c.l.b16 %v95
    %v294 = vunpack.c.h.b16 %v95
    %v295 = vunpack.c.l.b16 %v96
    %v296 = vunpack.c.h.b16 %v96
    %v297 = vunpack.c.l.b16 %v97
    %v298 = vunpack.c.h.b16 %v97
    %v299 = vunpack.c.l.b16 %v98
    %v300 = vunpack.c.h.b16 %v98
    %v301 = vunpack.c.l.b16 %v99
    %v302 = vunpack.c.h.b16 %v99
    %v303 = vunpack.c.l.b16 %v100
    %v304 = vunpack.c.h.b16 %v100
    %v305 = vunpack.c.l.b16 %v101
    %v306 = vunpack.c.h.b16 %v101
    %v307 = vunpack.c.l.b16 %v102
    %v308 = vunpack.c.h.b16 %v102
    %v309 = vunpack.c.l.b16 %v103
    %v310 = vunpack.c.h.b16 %v103
    %v311 = vunpack.c.l.b16 %v104
    %v312 = vunpack.c.h.b16 %v104
    %v313 = vunpack.c.l.b16 %v105
    %v314 = vunpack.c.h.b16 %v105
    %v315 = vunpack.c.l.b16 %v106
    %v316 = vunpack.c.h.b16 %v106
    %v317 = vunpack.c.l.b16 %v107
    %v318 = vunpack.c.h.b16 %v107
    %v319 = vunpack.c.l.b16 %v108
    %v320 = vunpack.c.h.b16 %v108
    %v321 = vunpack.c.l.b16 %v109
    %v322 = vunpack.c.h.b16 %v109
    %v323 = vunpack.c.l.b16 %v110
    %v324 = vunpack.c.h.b16 %v110
    %v325 = vunpack.c.l.b16 %v111
    %v326 = vunpack.c.h.b16 %v111
    %v327 = vunpack.c.l.b16 %v112
    %v328 = vunpack.c.h.b16 %v112
    %v329 = vunpack.c.l.b16 %v113
    %v330 = vunpack.c.h.b16 %v113
    %v331 = vunpack.c.l.b16 %v114
    %v332 = vunpack.c.h.b16 %v114
    %v333 = vunpack.c.l.b16 %v115
    %v334 = vunpack.c.h.b16 %v115
    %v335 = vunpack.c.l.b16 %v116
    %v336 = vunpack.c.h.b16 %v116
    %v337 = vunpack.c.l.b16 %v117
    %v338 = vunpack.c.h.b16 %v117
    %v339 = vunpack.c.l.b16 %v118
    %v340 = vunpack.c.h.b16 %v118
    %v341 = vunpack.c.l.b16 %v119
    %v342 = vunpack.c.h.b16 %v119
    %v343 = vunpack.c.l.b16 %v120
    %v344 = vunpack.c.h.b16 %v120
    %v345 = vunpack.c.l.b16 %v121
    %v346 = vunpack.c.h.b16 %v121
    %v347 = vunpack.c.l.b16 %v122
    %v348 = vunpack.c.h.b16 %v122
    %v349 = vunpack.c.l.b16 %v123
    %v350 = vunpack.c.h.b16 %v123
    %v351 = vunpack.c.l.b16 %v124
    %v352 = vunpack.c.h.b16 %v124
    %v353 = vunpack.c.l.b16 %v125
    %v354 = vunpack.c.h.b16 %v125
    %v355 = vunpack.c.l.b16 %v126
    %v356 = vunpack.c.h.b16 %v126
    %v357 = vunpack.c.l.b16 %v127
    %v358 = vunpack.c.h.b16 %v127
    %v359 = vunpack.c.l.b16 %v128
    %v360 = vunpack.c.h.b16 %v128
    %v361 = vunpack.c.l.b16 %v129
    %v362 = vunpack.c.h.b16 %v129
    %v363 = vunpack.c.l.b16 %v130
    %v364 = vunpack.c.h.b16 %v130
    %v365 = vpack.c.b16 %v245, %v237
    %v366 = vpack.c.b16 %v246, %v238
    %v367 = vpack.c.b16 %v247, %v239
    %v368 = vpack.c.b16 %v248, %v240
    %v369 = vpack.c.b16 %v249, %v241
    %v370 = vpack.c.b16 %v250, %v242
    %v371 = vpack.c.b16 %v251, %v243
    %v372 = vpack.c.b16 %v252, %v244
    %v373 = vpack.c.b16 %v261, %v253
    %v374 = vpack.c.b16 %v262, %v254
    %v375 = vpack.c.b16 %v263, %v255
    %v376 = vpack.c.b16 %v264, %v256
    %v377 = vpack.c.b16 %v265, %v257
    %v378 = vpack.c.b16 %v266, %v258
    %v379 = vpack.c.b16 %v267, %v259
    %v380 = vpack.c.b16 %v268, %v260
    %v381 = vpack.c.b16 %v277, %v269
    %v382 = vpack.c.b16 %v278, %v270
    %v383 = vpack.c.b16 %v279, %v271
    %v384 = vpack.c.b16 %v280, %v272
    %v385 = vpack.c.b16 %v281, %v273
    %v386 = vpack.c.b16 %v282, %v274
    %v387 = vpack.c.b16 %v283, %v275
    %v388 = vpack.c.b16 %v284, %v276
    %v389 = vpack.c.b16 %v293, %v285
    %v390 = vpack.c.b16 %v294, %v286
    %v391 = vpack.c.b16 %v295, %v287
    %v392 = vpack.c.b16 %v296, %v288
    %v393 = vpack.c.b16 %v297, %v289
    %v394 = vpack.c.b16 %v298, %v290
    %v395 = vpack.c.b16 %v299, %v291
    %v396 = vpack.c.b16 %v300, %v292
    %v397 = vpack.c.b16 %v309, %v301
    %v398 = vpack.c.b16 %v310, %v302
    %v399 = vpack.c.b16 %v311, %v303
    %v400 = vpack.c.b16 %v312, %v304
    %v401 = vpack.c.b16 %v313, %v305
    %v402 = vpack.c.b16 %v314, %v306
    %v403 = vpack.c.b16 %v315, %v307
    %v404 = vpack.c.b16 %v316, %v308
    %v405 = vpack.c.b16 %v325, %v317
    %v406 = vpack.c.b16 %v326, %v318
    %v407 = vpack.c.b16 %v327, %v319
    %v408 = vpack.c.b16 %v328, %v320
    %v409 = vpack.c.b16 %v329, %v321
    %v410 = vpack.c.b16 %v330, %v322
    %v411 = vpack.c.b16 %v331, %v323
    %v412 = vpack.c.b16 %v332, %v324
    %v413 = vpack.c.b16 %v341, %v333
    %v414 = vpack.c.b16 %v342, %v334
    %v415 = vpack.c.b16 %v343, %v335
    %v416 = vpack.c.b16 %v344, %v336
    %v417 = vpack.c.b16 %v345, %v337
    %v418 = vpack.c.b16 %v346, %v338
    %v419 = vpack.c.b16 %v347, %v339
    %v420 = vpack.c.b16 %v348, %v340
    %v421 = vpack.c.b16 %v357, %v349
    %v422 = vpack.c.b16 %v358, %v350
    %v423 = vpack.c.b16 %v359, %v351
    %v424 = vpack.c.b16 %v360, %v352
    %v425 = vpack.c.b16 %v361, %v353
    %v426 = vpack.c.b16 %v362, %v354
    %v427 = vpack.c.b16 %v363, %v355
    %v428 = vpack.c.b16 %v364, %v356
    %493 = vmatprep.subr.bf16.mxu0 %v366
    %494 = vmatpush1.bf16.msra.mxu0 %v365
    %495 = vmatprep.subr.bf16.mxu0 %v374
    %496 = vmatpush1.bf16.msra.mxu0 %v373
    %497 = vmatprep.subr.bf16.mxu0 %v382
    %498 = vmatpush1.bf16.msra.mxu0 %v381
    %499 = vmatprep.subr.bf16.mxu0 %v390
    %500 = vmatpush1.bf16.msra.mxu0 %v389
    %501 = vmatprep.subr.bf16.mxu0 %v398
    %502 = vmatpush1.bf16.msra.mxu0 %v397
    %503 = vmatprep.subr.bf16.mxu0 %v406
    %504 = vmatpush1.bf16.msra.mxu0 %v405
    %505 = vmatprep.subr.bf16.mxu0 %v414
    %506 = vmatpush1.bf16.msra.mxu0 %v413
    %507 = vmatprep.subr.bf16.mxu0 %v422
    %508 = vmatpush1.bf16.msra.mxu0 %v421
    %509 = vmatprep.subr.bf16.mxu0 0
    %510 = vmatpush1.bf16.msra.mxu0 0
    %511 = vmatprep.subr.bf16.mxu0 0
    %512 = vmatpush1.bf16.msra.mxu0 0
    %513 = vmatprep.subr.bf16.mxu0 0
    %514 = vmatpush1.bf16.msra.mxu0 0
    %515 = vmatprep.subr.bf16.mxu0 0
    %516 = vmatpush1.bf16.msra.mxu0 0
    %517 = vmatprep.subr.bf16.mxu0 0
    %518 = vmatpush1.bf16.msra.mxu0 0
    %519 = vmatprep.subr.bf16.mxu0 0
    %520 = vmatpush1.bf16.msra.mxu0 0
    %521 = vmatprep.subr.bf16.mxu0 0
    %522 = vmatpush1.bf16.msra.mxu0 0
    %523 = vmatprep.subr.bf16.mxu0 0
    %524 = vmatpush1.bf16.msra.mxu0 0
    %525 = vmatprep.mubr.bf16.mxu0 0
    %526 = vmatmul.mubr.bf16.gmra.mrb[0].mxu0 %v63
    %v527 = vpop.f32.mrb[0].mxu0
    %v528 = vadd.f32 %v136, %v527
    %v529 = vpop.f32.mrb[0].mxu0
    %v530 = vadd.f32 %v140, %v529
    %v531 = vpop.f32.mrb[0].mxu0
    %v532 = vadd.f32 %v136, %v531
    %v533 = vpop.f32.mrb[0].mxu0
    %v534 = vadd.f32 %v140, %v533
    %535 = vmatprep.mubr.bf16.mxu0 0
    %536 = vmatmul.mubr.bf16.gmra.mrb[0].mxu0 %v64
    %v537 = vpop.f32.mrb[0].mxu0
    %v538 = vadd.f32 %v136, %v537
    %v539 = vpop.f32.mrb[0].mxu0
    %v540 = vadd.f32 %v140, %v539
    %v541 = vpop.f32.mrb[0].mxu0
    %v542 = vadd.f32 %v136, %v541
    %v543 = vpop.f32.mrb[0].mxu0
    %v544 = vadd.f32 %v140, %v543
    %545 = vmatprep.mubr.bf16.mxu0 0
    %546 = vmatmul.mubr.bf16.gmra.mrb[0].mxu0 %v65
    %v547 = vpop.f32.mrb[0].mxu0
    %v548 = vadd.f32 %v136, %v547
    %v549 = vpop.f32.mrb[0].mxu0
    %v550 = vadd.f32 %v140, %v549
    %v551 = vpop.f32.mrb[0].mxu0
    %v552 = vadd.f32 %v136, %v551
    %v553 = vpop.f32.mrb[0].mxu0
    %v554 = vadd.f32 %v140, %v553
    %555 = vmatprep.mubr.bf16.mxu0 0
    %556 = vmatmul.mubr.bf16.gmra.mrb[0].mxu0 %v66
    %v557 = vpop.f32.mrb[0].mxu0
    %v558 = vadd.f32 %v136, %v557
    %v559 = vpop.f32.mrb[0].mxu0
    %v560 = vadd.f32 %v140, %v559
    %v561 = vpop.f32.mrb[0].mxu0
    %v562 = vadd.f32 %v136, %v561
    %v563 = vpop.f32.mrb[0].mxu0
    %v564 = vadd.f32 %v140, %v563
    %565 = vdwg.mxu0
    %566 = vmatprep.subr.bf16.mxu0 %v368
    %567 = vmatpush1.bf16.msra.mxu0 %v367
    %568 = vmatprep.subr.bf16.mxu0 %v376
    %569 = vmatpush1.bf16.msra.mxu0 %v375
    %570 = vmatprep.subr.bf16.mxu0 %v384
    %571 = vmatpush1.bf16.msra.mxu0 %v383
    %572 = vmatprep.subr.bf16.mxu0 %v392
    %573 = vmatpush1.bf16.msra.mxu0 %v391
    %574 = vmatprep.subr.bf16.mxu0 %v400
    %575 = vmatpush1.bf16.msra.mxu0 %v399
    %576 = vmatprep.subr.bf16.mxu0 %v408
    %577 = vmatpush1.bf16.msra.mxu0 %v407
    %578 = vmatprep.subr.bf16.mxu0 %v416
    %579 = vmatpush1.bf16.msra.mxu0 %v415
    %580 = vmatprep.subr.bf16.mxu0 %v424
    %581 = vmatpush1.bf16.msra.mxu0 %v423
    %582 = vmatprep.subr.bf16.mxu0 0
    %583 = vmatpush1.bf16.msra.mxu0 0
    %584 = vmatprep.subr.bf16.mxu0 0
    %585 = vmatpush1.bf16.msra.mxu0 0
    %586 = vmatprep.subr.bf16.mxu0 0
    %587 = vmatpush1.bf16.msra.mxu0 0
    %588 = vmatprep.subr.bf16.mxu0 0
    %589 = vmatpush1.bf16.msra.mxu0 0
    %590 = vmatprep.subr.bf16.mxu0 0
    %591 = vmatpush1.bf16.msra.mxu0 0
    %592 = vmatprep.subr.bf16.mxu0 0
    %593 = vmatpush1.bf16.msra.mxu0 0
    %594 = vmatprep.subr.bf16.mxu0 0
    %595 = vmatpush1.bf16.msra.mxu0 0
    %596 = vmatprep.subr.bf16.mxu0 0
    %597 = vmatpush1.bf16.msra.mxu0 0
    %598 = vmatprep.mubr.bf16.mxu0 0
    %599 = vmatmul.mubr.bf16.gmra.mrb[0].mxu0 %v63
    %v600 = vpop.f32.mrb[0].mxu0
    %v601 = vadd.f32 %v144, %v600
    %v602 = vpop.f32.mrb[0].mxu0
    %v603 = vadd.f32 %v148, %v602
    %v604 = vpop.f32.mrb[0].mxu0
    %v605 = vadd.f32 %v144, %v604
    %v606 = vpop.f32.mrb[0].mxu0
    %v607 = vadd.f32 %v148, %v606
    %608 = vmatprep.mubr.bf16.mxu0 0
    %609 = vmatmul.mubr.bf16.gmra.mrb[0].mxu0 %v64
    %v610 = vpop.f32.mrb[0].mxu0
    %v611 = vadd.f32 %v144, %v610
    %v612 = vpop.f32.mrb[0].mxu0
    %v613 = vadd.f32 %v148, %v612
    %v614 = vpop.f32.mrb[0].mxu0
    %v615 = vadd.f32 %v144, %v614
    %v616 = vpop.f32.mrb[0].mxu0
    %v617 = vadd.f32 %v148, %v616
    %618 = vmatprep.mubr.bf16.mxu0 0
    %619 = vmatmul.mubr.bf16.gmra.mrb[0].mxu0 %v65
    %v620 = vpop.f32.mrb[0].mxu0
    %v621 = vadd.f32 %v144, %v620
    %v622 = vpop.f32.mrb[0].mxu0
    %v623 = vadd.f32 %v148, %v622
    %v624 = vpop.f32.mrb[0].mxu0
    %v625 = vadd.f32 %v144, %v624
    %v626 = vpop.f32.mrb[0].mxu0
    %v627 = vadd.f32 %v148, %v626
    %628 = vmatprep.mubr.bf16.mxu0 0
    %629 = vmatmul.mubr.bf16.gmra.mrb[0].mxu0 %v66
    %v630 = vpop.f32.mrb[0].mxu0
    %v631 = vadd.f32 %v144, %v630
    %v632 = vpop.f32.mrb[0].mxu0
    %v633 = vadd.f32 %v148, %v632
    %v634 = vpop.f32.mrb[0].mxu0
    %v635 = vadd.f32 %v144, %v634
    %v636 = vpop.f32.mrb[0].mxu0
    %v637 = vadd.f32 %v148, %v636
    %638 = vdwg.mxu0
    %639 = vmatprep.subr.bf16.mxu0 %v370
    %640 = vmatpush1.bf16.msra.mxu0 %v369
    %641 = vmatprep.subr.bf16.mxu0 %v378
    %642 = vmatpush1.bf16.msra.mxu0 %v377
    %643 = vmatprep.subr.bf16.mxu0 %v386
    %644 = vmatpush1.bf16.msra.mxu0 %v385
    %645 = vmatprep.subr.bf16.mxu0 %v394
    %646 = vmatpush1.bf16.msra.mxu0 %v393
    %647 = vmatprep.subr.bf16.mxu0 %v402
    %648 = vmatpush1.bf16.msra.mxu0 %v401
    %649 = vmatprep.subr.bf16.mxu0 %v410
    %650 = vmatpush1.bf16.msra.mxu0 %v409
    %651 = vmatprep.subr.bf16.mxu0 %v418
    %652 = vmatpush1.bf16.msra.mxu0 %v417
    %653 = vmatprep.subr.bf16.mxu0 %v426
    %654 = vmatpush1.bf16.msra.mxu0 %v425
    %655 = vmatprep.subr.bf16.mxu0 0
    %656 = vmatpush1.bf16.msra.mxu0 0
    %657 = vmatprep.subr.bf16.mxu0 0
    %658 = vmatpush1.bf16.msra.mxu0 0
    %659 = vmatprep.subr.bf16.mxu0 0
    %660 = vmatpush1.bf16.msra.mxu0 0
    %661 = vmatprep.subr.bf16.mxu0 0
    %662 = vmatpush1.bf16.msra.mxu0 0
    %663 = vmatprep.subr.bf16.mxu0 0
    %664 = vmatpush1.bf16.msra.mxu0 0
    %665 = vmatprep.subr.bf16.mxu0 0
    %666 = vmatpush1.bf16.msra.mxu0 0
    %667 = vmatprep.subr.bf16.mxu0 0
    %668 = vmatpush1.bf16.msra.mxu0 0
    %669 = vmatprep.subr.bf16.mxu0 0
    %670 = vmatpush1.bf16.msra.mxu0 0
    %671 = vmatprep.mubr.bf16.mxu0 0
    %672 = vmatmul.mubr.bf16.gmra.mrb[0].mxu0 %v63
    %v673 = vpop.f32.mrb[0].mxu0
    %v674 = vadd.f32 %v152, %v673
    %v675 = vpop.f32.mrb[0].mxu0
    %v676 = vadd.f32 %v156, %v675
    %v677 = vpop.f32.mrb[0].mxu0
    %v678 = vadd.f32 %v152, %v677
    %v679 = vpop.f32.mrb[0].mxu0
    %v680 = vadd.f32 %v156, %v679
    %681 = vmatprep.mubr.bf16.mxu0 0
    %682 = vmatmul.mubr.bf16.gmra.mrb[0].mxu0 %v64
    %v683 = vpop.f32.mrb[0].mxu0
    %v684 = vadd.f32 %v152, %v683
    %v685 = vpop.f32.mrb[0].mxu0
    %v686 = vadd.f32 %v156, %v685
    %v687 = vpop.f32.mrb[0].mxu0
    %v688 = vadd.f32 %v152, %v687
    %v689 = vpop.f32.mrb[0].mxu0
    %v690 = vadd.f32 %v156, %v689
    %691 = vmatprep.mubr.bf16.mxu0 0
    %692 = vmatmul.mubr.bf16.gmra.mrb[0].mxu0 %v65
    %v693 = vpop.f32.mrb[0].mxu0
    %v694 = vadd.f32 %v152, %v693
    %v695 = vpop.f32.mrb[0].mxu0
    %v696 = vadd.f32 %v156, %v695
    %v697 = vpop.f32.mrb[0].mxu0
    %v698 = vadd.f32 %v152, %v697
    %v699 = vpop.f32.mrb[0].mxu0
    %v700 = vadd.f32 %v156, %v699
    %701 = vmatprep.mubr.bf16.mxu0 0
    %702 = vmatmul.mubr.bf16.gmra.mrb[0].mxu0 %v66
    %v703 = vpop.f32.mrb[0].mxu0
    %v704 = vadd.f32 %v152, %v703
    %v705 = vpop.f32.mrb[0].mxu0
    %v706 = vadd.f32 %v156, %v705
    %v707 = vpop.f32.mrb[0].mxu0
    %v708 = vadd.f32 %v152, %v707
    %v709 = vpop.f32.mrb[0].mxu0
    %v710 = vadd.f32 %v156, %v709
    %711 = vdwg.mxu0
    %712 = vmatprep.subr.bf16.mxu0 %v372
    %713 = vmatpush1.bf16.msra.mxu0 %v371
    %714 = vmatprep.subr.bf16.mxu0 %v380
    %715 = vmatpush1.bf16.msra.mxu0 %v379
    %716 = vmatprep.subr.bf16.mxu0 %v388
    %717 = vmatpush1.bf16.msra.mxu0 %v387
    %718 = vmatprep.subr.bf16.mxu0 %v396
    %719 = vmatpush1.bf16.msra.mxu0 %v395
    %720 = vmatprep.subr.bf16.mxu0 %v404
    %721 = vmatpush1.bf16.msra.mxu0 %v403
    %722 = vmatprep.subr.bf16.mxu0 %v412
    %723 = vmatpush1.bf16.msra.mxu0 %v411
    %724 = vmatprep.subr.bf16.mxu0 %v420
    %725 = vmatpush1.bf16.msra.mxu0 %v419
    %726 = vmatprep.subr.bf16.mxu0 %v428
    %727 = vmatpush1.bf16.msra.mxu0 %v427
    %728 = vmatprep.subr.bf16.mxu0 0
    %729 = vmatpush1.bf16.msra.mxu0 0
    %730 = vmatprep.subr.bf16.mxu0 0
    %731 = vmatpush1.bf16.msra.mxu0 0
    %732 = vmatprep.subr.bf16.mxu0 0
    %733 = vmatpush1.bf16.msra.mxu0 0
    %734 = vmatprep.subr.bf16.mxu0 0
    %735 = vmatpush1.bf16.msra.mxu0 0
    %736 = vmatprep.subr.bf16.mxu0 0
    %737 = vmatpush1.bf16.msra.mxu0 0
    %738 = vmatprep.subr.bf16.mxu0 0
    %739 = vmatpush1.bf16.msra.mxu0 0
    %740 = vmatprep.subr.bf16.mxu0 0
    %741 = vmatpush1.bf16.msra.mxu0 0
    %742 = vmatprep.subr.bf16.mxu0 0
    %743 = vmatpush1.bf16.msra.mxu0 0
    %744 = vmatprep.mubr.bf16.mxu0 0
    %745 = vmatmul.mubr.bf16.gmra.mrb[0].mxu0 %v63
    %v746 = vpop.f32.mrb[0].mxu0
    %v747 = vadd.f32 %v160, %v746
    %v748 = vpop.f32.mrb[0].mxu0
    %v749 = vadd.f32 %v164, %v748
    %v750 = vpop.f32.mrb[0].mxu0
    %v751 = vadd.f32 %v160, %v750
    %v752 = vpop.f32.mrb[0].mxu0
    %v753 = vadd.f32 %v164, %v752
    %754 = vmatprep.mubr.bf16.mxu0 0
    %755 = vmatmul.mubr.bf16.gmra.mrb[0].mxu0 %v64
    %v756 = vpop.f32.mrb[0].mxu0
    %v757 = vadd.f32 %v160, %v756
    %v758 = vpop.f32.mrb[0].mxu0
    %v759 = vadd.f32 %v164, %v758
    %v760 = vpop.f32.mrb[0].mxu0
    %v761 = vadd.f32 %v160, %v760
    %v762 = vpop.f32.mrb[0].mxu0
    %v763 = vadd.f32 %v164, %v762
    %764 = vmatprep.mubr.bf16.mxu0 0
    %765 = vmatmul.mubr.bf16.gmra.mrb[0].mxu0 %v65
    %v766 = vpop.f32.mrb[0].mxu0
    %v767 = vadd.f32 %v160, %v766
    %v768 = vpop.f32.mrb[0].mxu0
    %v769 = vadd.f32 %v164, %v768
    %v770 = vpop.f32.mrb[0].mxu0
    %v771 = vadd.f32 %v160, %v770
    %v772 = vpop.f32.mrb[0].mxu0
    %v773 = vadd.f32 %v164, %v772
    %774 = vmatprep.mubr.bf16.mxu0 0
    %775 = vmatmul.mubr.bf16.gmra.mrb[0].mxu0 %v66
    %v776 = vpop.f32.mrb[0].mxu0
    %v777 = vadd.f32 %v160, %v776
    %v778 = vpop.f32.mrb[0].mxu0
    %v779 = vadd.f32 %v164, %v778
    %v780 = vpop.f32.mrb[0].mxu0
    %v781 = vadd.f32 %v160, %v780
    %v782 = vpop.f32.mrb[0].mxu0
    %v783 = vadd.f32 %v164, %v782
    %784 = vdwg.mxu0
    %785 = vst [vmem:[#allocation2] sm:$0xff] %v528
    %786 = vst [vmem:[#allocation2 + $0x8] sm:$0xff] %v530
    %787 = vst [vmem:[#allocation2 + $0x10] sm:$0xff] %v601
    %788 = vst [vmem:[#allocation2 + $0x18] sm:$0xff] %v603
    %789 = vst [vmem:[#allocation2 + $0x20] sm:$0xff] %v674
    %790 = vst [vmem:[#allocation2 + $0x28] sm:$0xff] %v676
    %791 = vst [vmem:[#allocation2 + $0x30] sm:$0xff] %v747
    %792 = vst [vmem:[#allocation2 + $0x38] sm:$0xff] %v749
    %793 = vst [vmem:[#allocation2 + $0x40] sm:$0xff] %v532
    %794 = vst [vmem:[#allocation2 + $0x48] sm:$0xff] %v534
    %795 = vst [vmem:[#allocation2 + $0x50] sm:$0xff] %v605
    %796 = vst [vmem:[#allocation2 + $0x58] sm:$0xff] %v607
    %797 = vst [vmem:[#allocation2 + $0x60] sm:$0xff] %v678
    %798 = vst [vmem:[#allocation2 + $0x68] sm:$0xff] %v680
    %799 = vst [vmem:[#allocation2 + $0x70] sm:$0xff] %v751
    %800 = vst [vmem:[#allocation2 + $0x78] sm:$0xff] %v753
    %801 = vst [vmem:[#allocation2 + $0x80] sm:$0xff] %v538
    %802 = vst [vmem:[#allocation2 + $0x88] sm:$0xff] %v540
    %803 = vst [vmem:[#allocation2 + $0x90] sm:$0xff] %v611
    %804 = vst [vmem:[#allocation2 + $0x98] sm:$0xff] %v613
    %805 = vst [vmem:[#allocation2 + $0xa0] sm:$0xff] %v684
    %806 = vst [vmem:[#allocation2 + $0xa8] sm:$0xff] %v686
    %807 = vst [vmem:[#allocation2 + $0xb0] sm:$0xff] %v757
    %808 = vst [vmem:[#allocation2 + $0xb8] sm:$0xff] %v759
    %809 = vst [vmem:[#allocation2 + $0xc0] sm:$0xff] %v542
    %810 = vst [vmem:[#allocation2 + $0xc8] sm:$0xff] %v544
    %811 = vst [vmem:[#allocation2 + $0xd0] sm:$0xff] %v615
    %812 = vst [vmem:[#allocation2 + $0xd8] sm:$0xff] %v617
    %813 = vst [vmem:[#allocation2 + $0xe0] sm:$0xff] %v688
    %814 = vst [vmem:[#allocation2 + $0xe8] sm:$0xff] %v690
    %815 = vst [vmem:[#allocation2 + $0xf0] sm:$0xff] %v761
    %816 = vst [vmem:[#allocation2 + $0xf8] sm:$0xff] %v763
    %817 = vst [vmem:[#allocation2 + $0x100] sm:$0xff] %v548
    %818 = vst [vmem:[#allocation2 + $0x108] sm:$0xff] %v550
    %819 = vst [vmem:[#allocation2 + $0x110] sm:$0xff] %v621
    %820 = vst [vmem:[#allocation2 + $0x118] sm:$0xff] %v623
    %821 = vst [vmem:[#allocation2 + $0x120] sm:$0xff] %v694
    %822 = vst [vmem:[#allocation2 + $0x128] sm:$0xff] %v696
    %823 = vst [vmem:[#allocation2 + $0x130] sm:$0xff] %v767
    %824 = vst [vmem:[#allocation2 + $0x138] sm:$0xff] %v769
    %825 = vst [vmem:[#allocation2 + $0x140] sm:$0xff] %v552
    %826 = vst [vmem:[#allocation2 + $0x148] sm:$0xff] %v554
    %827 = vst [vmem:[#allocation2 + $0x150] sm:$0xff] %v625
    %828 = vst [vmem:[#allocation2 + $0x158] sm:$0xff] %v627
    %829 = vst [vmem:[#allocation2 + $0x160] sm:$0xff] %v698
    %830 = vst [vmem:[#allocation2 + $0x168] sm:$0xff] %v700
    %831 = vst [vmem:[#allocation2 + $0x170] sm:$0xff] %v771
    %832 = vst [vmem:[#allocation2 + $0x178] sm:$0xff] %v773
    %833 = vst [vmem:[#allocation2 + $0x180] sm:$0xff] %v558
    %834 = vst [vmem:[#allocation2 + $0x188] sm:$0xff] %v560
    %835 = vst [vmem:[#allocation2 + $0x190] sm:$0xff] %v631
    %836 = vst [vmem:[#allocation2 + $0x198] sm:$0xff] %v633
    %837 = vst [vmem:[#allocation2 + $0x1a0] sm:$0xff] %v704
    %838 = vst [vmem:[#allocation2 + $0x1a8] sm:$0xff] %v706
    %839 = vst [vmem:[#allocation2 + $0x1b0] sm:$0xff] %v777
    %840 = vst [vmem:[#allocation2 + $0x1b8] sm:$0xff] %v779
    %841 = vst [vmem:[#allocation2 + $0x1c0] sm:$0xff] %v562
    %842 = vst [vmem:[#allocation2 + $0x1c8] sm:$0xff] %v564
    %843 = vst [vmem:[#allocation2 + $0x1d0] sm:$0xff] %v635
    %844 = vst [vmem:[#allocation2 + $0x1d8] sm:$0xff] %v637
    %845 = vst [vmem:[#allocation2 + $0x1e0] sm:$0xff] %v708
    %846 = vst [vmem:[#allocation2 + $0x1e8] sm:$0xff] %v710
    %847 = vst [vmem:[#allocation2 + $0x1f0] sm:$0xff] %v781
    %848 = vst [vmem:[#allocation2 + $0x1f8] sm:$0xff] %v783
    %v849 = vld [vmem:[#allocation5] sm:$0xff]
    %v850 = vld [vmem:[#allocation5 + $0x8] sm:$0xff]
    %v851 = vld [vmem:[#allocation5 + $0x10] sm:$0xff]
    %v852 = vld [vmem:[#allocation5 + $0x18] sm:$0xff]
    %v853 = vld [vmem:[#allocation5 + $0x20] sm:$0xff]
    %v854 = vld [vmem:[#allocation5 + $0x28] sm:$0xff]
    %v855 = vld [vmem:[#allocation5 + $0x30] sm:$0xff]
    %v856 = vld [vmem:[#allocation5 + $0x38] sm:$0xff]
    %v857 = vld [vmem:[#allocation5 + $0x40] sm:$0xff]
    %v858 = vld [vmem:[#allocation5 + $0x48] sm:$0xff]
    %v859 = vld [vmem:[#allocation5 + $0x50] sm:$0xff]
    %v860 = vld [vmem:[#allocation5 + $0x58] sm:$0xff]
    %v861 = vld [vmem:[#allocation5 + $0x60] sm:$0xff]
    %v862 = vld [vmem:[#allocation5 + $0x68] sm:$0xff]
    %v863 = vld [vmem:[#allocation5 + $0x70] sm:$0xff]
    %v864 = vld [vmem:[#allocation5 + $0x78] sm:$0xff]
    %v865 = vld [vmem:[#allocation5 + $0x80] sm:$0xff]
    %v866 = vld [vmem:[#allocation5 + $0x88] sm:$0xff]
    %v867 = vld [vmem:[#allocation5 + $0x90] sm:$0xff]
    %v868 = vld [vmem:[#allocation5 + $0x98] sm:$0xff]
    %v869 = vld [vmem:[#allocation5 + $0xa0] sm:$0xff]
    %v870 = vld [vmem:[#allocation5 + $0xa8] sm:$0xff]
    %v871 = vld [vmem:[#allocation5 + $0xb0] sm:$0xff]
    %v872 = vld [vmem:[#allocation5 + $0xb8] sm:$0xff]
    %v873 = vld [vmem:[#allocation5 + $0xc0] sm:$0xff]
    %v874 = vld [vmem:[#allocation5 + $0xc8] sm:$0xff]
    %v875 = vld [vmem:[#allocation5 + $0xd0] sm:$0xff]
    %v876 = vld [vmem:[#allocation5 + $0xd8] sm:$0xff]
    %v877 = vld [vmem:[#allocation5 + $0xe0] sm:$0xff]
    %v878 = vld [vmem:[#allocation5 + $0xe8] sm:$0xff]
    %v879 = vld [vmem:[#allocation5 + $0xf0] sm:$0xff]
    %v880 = vld [vmem:[#allocation5 + $0xf8] sm:$0xff]
    %v881 = vld [vmem:[#allocation5 + $0x100] sm:$0xff]
    %v882 = vld [vmem:[#allocation5 + $0x108] sm:$0xff]
    %v883 = vld [vmem:[#allocation5 + $0x110] sm:$0xff]
    %v884 = vld [vmem:[#allocation5 + $0x118] sm:$0xff]
    %v885 = vld [vmem:[#allocation5 + $0x120] sm:$0xff]
    %v886 = vld [vmem:[#allocation5 + $0x128] sm:$0xff]
    %v887 = vld [vmem:[#allocation5 + $0x130] sm:$0xff]
    %v888 = vld [vmem:[#allocation5 + $0x138] sm:$0xff]
    %v889 = vld [vmem:[#allocation5 + $0x140] sm:$0xff]
    %v890 = vld [vmem:[#allocation5 + $0x148] sm:$0xff]
    %v891 = vld [vmem:[#allocation5 + $0x150] sm:$0xff]
    %v892 = vld [vmem:[#allocation5 + $0x158] sm:$0xff]
    %v893 = vld [vmem:[#allocation5 + $0x160] sm:$0xff]
    %v894 = vld [vmem:[#allocation5 + $0x168] sm:$0xff]
    %v895 = vld [vmem:[#allocation5 + $0x170] sm:$0xff]
    %v896 = vld [vmem:[#allocation5 + $0x178] sm:$0xff]
    %v897 = vld [vmem:[#allocation5 + $0x180] sm:$0xff]
    %v898 = vld [vmem:[#allocation5 + $0x188] sm:$0xff]
    %v899 = vld [vmem:[#allocation5 + $0x190] sm:$0xff]
    %v900 = vld [vmem:[#allocation5 + $0x198] sm:$0xff]
    %v901 = vld [vmem:[#allocation5 + $0x1a0] sm:$0xff]
    %v902 = vld [vmem:[#allocation5 + $0x1a8] sm:$0xff]
    %v903 = vld [vmem:[#allocation5 + $0x1b0] sm:$0xff]
    %v904 = vld [vmem:[#allocation5 + $0x1b8] sm:$0xff]
    %v905 = vld [vmem:[#allocation5 + $0x1c0] sm:$0xff]
    %v906 = vld [vmem:[#allocation5 + $0x1c8] sm:$0xff]
    %v907 = vld [vmem:[#allocation5 + $0x1d0] sm:$0xff]
    %v908 = vld [vmem:[#allocation5 + $0x1d8] sm:$0xff]
    %v909 = vld [vmem:[#allocation5 + $0x1e0] sm:$0xff]
    %v910 = vld [vmem:[#allocation5 + $0x1e8] sm:$0xff]
    %v911 = vld [vmem:[#allocation5 + $0x1f0] sm:$0xff]
    %v912 = vld [vmem:[#allocation5 + $0x1f8] sm:$0xff]
    %v913 = vld [vmem:[#allocation5 + $0x200] sm:$0xff]
    %v914 = vld [vmem:[#allocation5 + $0x208] sm:$0xff]
    %v915 = vld [vmem:[#allocation5 + $0x210] sm:$0xff]
    %v916 = vld [vmem:[#allocation5 + $0x218] sm:$0xff]
    %v917 = vld [vmem:[#allocation5 + $0x220] sm:$0xff]
    %v918 = vld [vmem:[#allocation5 + $0x228] sm:$0xff]
    %v919 = vld [vmem:[#allocation5 + $0x230] sm:$0xff]
    %v920 = vld [vmem:[#allocation5 + $0x238] sm:$0xff]
    %v921 = vld [vmem:[#allocation5 + $0x240] sm:$0xff]
    %v922 = vld [vmem:[#allocation5 + $0x248] sm:$0xff]
    %v923 = vld [vmem:[#allocation5 + $0x250] sm:$0xff]
    %v924 = vld [vmem:[#allocation5 + $0x258] sm:$0xff]
    %v925 = vld [vmem:[#allocation5 + $0x260] sm:$0xff]
    %v926 = vld [vmem:[#allocation5 + $0x268] sm:$0xff]
    %v927 = vld [vmem:[#allocation5 + $0x270] sm:$0xff]
    %v928 = vld [vmem:[#allocation5 + $0x278] sm:$0xff]
    %v929 = vld [vmem:[#allocation5 + $0x280] sm:$0xff]
    %v930 = vld [vmem:[#allocation5 + $0x288] sm:$0xff]
    %v931 = vld [vmem:[#allocation5 + $0x290] sm:$0xff]
    %v932 = vld [vmem:[#allocation5 + $0x298] sm:$0xff]
    %v933 = vld [vmem:[#allocation5 + $0x2a0] sm:$0xff]
    %v934 = vld [vmem:[#allocation5 + $0x2a8] sm:$0xff]
    %v935 = vld [vmem:[#allocation5 + $0x2b0] sm:$0xff]
    %v936 = vld [vmem:[#allocation5 + $0x2b8] sm:$0xff]
    %v937 = vld [vmem:[#allocation5 + $0x2c0] sm:$0xff]
    %v938 = vld [vmem:[#allocation5 + $0x2c8] sm:$0xff]
    %v939 = vld [vmem:[#allocation5 + $0x2d0] sm:$0xff]
    %v940 = vld [vmem:[#allocation5 + $0x2d8] sm:$0xff]
    %v941 = vld [vmem:[#allocation5 + $0x2e0] sm:$0xff]
    %v942 = vld [vmem:[#allocation5 + $0x2e8] sm:$0xff]
    %v943 = vld [vmem:[#allocation5 + $0x2f0] sm:$0xff]
    %v944 = vld [vmem:[#allocation5 + $0x2f8] sm:$0xff]
    %v945 = vld [vmem:[#allocation5 + $0x300] sm:$0xff]
    %v946 = vld [vmem:[#allocation5 + $0x308] sm:$0xff]
    %v947 = vld [vmem:[#allocation5 + $0x310] sm:$0xff]
    %v948 = vld [vmem:[#allocation5 + $0x318] sm:$0xff]
    %v949 = vld [vmem:[#allocation5 + $0x320] sm:$0xff]
    %v950 = vld [vmem:[#allocation5 + $0x328] sm:$0xff]
    %v951 = vld [vmem:[#allocation5 + $0x330] sm:$0xff]
    %v952 = vld [vmem:[#allocation5 + $0x338] sm:$0xff]
    %v953 = vld [vmem:[#allocation5 + $0x340] sm:$0xff]
    %v954 = vld [vmem:[#allocation5 + $0x348] sm:$0xff]
    %v955 = vld [vmem:[#allocation5 + $0x350] sm:$0xff]
    %v956 = vld [vmem:[#allocation5 + $0x358] sm:$0xff]
    %v957 = vld [vmem:[#allocation5 + $0x360] sm:$0xff]
    %v958 = vld [vmem:[#allocation5 + $0x368] sm:$0xff]
    %v959 = vld [vmem:[#allocation5 + $0x370] sm:$0xff]
    %v960 = vld [vmem:[#allocation5 + $0x378] sm:$0xff]
    %v961 = vld [vmem:[#allocation5 + $0x380] sm:$0xff]
    %v962 = vld [vmem:[#allocation5 + $0x388] sm:$0xff]
    %v963 = vld [vmem:[#allocation5 + $0x390] sm:$0xff]
    %v964 = vld [vmem:[#allocation5 + $0x398] sm:$0xff]
    %v965 = vld [vmem:[#allocation5 + $0x3a0] sm:$0xff]
    %v966 = vld [vmem:[#allocation5 + $0x3a8] sm:$0xff]
    %v967 = vld [vmem:[#allocation5 + $0x3b0] sm:$0xff]
    %v968 = vld [vmem:[#allocation5 + $0x3b8] sm:$0xff]
    %v969 = vld [vmem:[#allocation5 + $0x3c0] sm:$0xff]
    %v970 = vld [vmem:[#allocation5 + $0x3c8] sm:$0xff]
    %v971 = vld [vmem:[#allocation5 + $0x3d0] sm:$0xff]
    %v972 = vld [vmem:[#allocation5 + $0x3d8] sm:$0xff]
    %v973 = vld [vmem:[#allocation5 + $0x3e0] sm:$0xff]
    %v974 = vld [vmem:[#allocation5 + $0x3e8] sm:$0xff]
    %v975 = vld [vmem:[#allocation5 + $0x3f0] sm:$0xff]
    %v976 = vld [vmem:[#allocation5 + $0x3f8] sm:$0xff]
    %v977 = vld [vmem:[%s1] sm:$0xff]
    %v978 = vld [vmem:[%s2] sm:$0xff]
    %s979 = scalar_lea.vmem %s1, 8
    %v980 = vld [vmem:[%s979] sm:$0xff]
    %s981 = scalar_lea.vmem %s2, 8
    %v982 = vld [vmem:[%s981] sm:$0xff]
    %v983 = vpack.c.bf16 %v977, %v977
    %v984 = vpack.c.bf16 %v980, %v980
    %v1113 = vunpack.c.l.b16 %v849
    %v1114 = vunpack.c.h.b16 %v849
    %v1115 = vunpack.c.l.b16 %v850
    %v1116 = vunpack.c.h.b16 %v850
    %v1117 = vunpack.c.l.b16 %v851
    %v1118 = vunpack.c.h.b16 %v851
    %v1119 = vunpack.c.l.b16 %v852
    %v1120 = vunpack.c.h.b16 %v852
    %v1121 = vunpack.c.l.b16 %v853
    %v1122 = vunpack.c.h.b16 %v853
    %v1123 = vunpack.c.l.b16 %v854
    %v1124 = vunpack.c.h.b16 %v854
    %v1125 = vunpack.c.l.b16 %v855
    %v1126 = vunpack.c.h.b16 %v855
    %v1127 = vunpack.c.l.b16 %v856
    %v1128 = vunpack.c.h.b16 %v856
    %v1129 = vunpack.c.l.b16 %v857
    %v1130 = vunpack.c.h.b16 %v857
    %v1131 = vunpack.c.l.b16 %v858
    %v1132 = vunpack.c.h.b16 %v858
    %v1133 = vunpack.c.l.b16 %v859
    %v1134 = vunpack.c.h.b16 %v859
    %v1135 = vunpack.c.l.b16 %v860
    %v1136 = vunpack.c.h.b16 %v860
    %v1137 = vunpack.c.l.b16 %v861
    %v1138 = vunpack.c.h.b16 %v861
    %v1139 = vunpack.c.l.b16 %v862
    %v1140 = vunpack.c.h.b16 %v862
    %v1141 = vunpack.c.l.b16 %v863
    %v1142 = vunpack.c.h.b16 %v863
    %v1143 = vunpack.c.l.b16 %v864
    %v1144 = vunpack.c.h.b16 %v864
    %v1145 = vunpack.c.l.b16 %v865
    %v1146 = vunpack.c.h.b16 %v865
    %v1147 = vunpack.c.l.b16 %v866
    %v1148 = vunpack.c.h.b16 %v866
    %v1149 = vunpack.c.l.b16 %v867
    %v1150 = vunpack.c.h.b16 %v867
    %v1151 = vunpack.c.l.b16 %v868
    %v1152 = vunpack.c.h.b16 %v868
    %v1153 = vunpack.c.l.b16 %v869
    %v1154 = vunpack.c.h.b16 %v869
    %v1155 = vunpack.c.l.b16 %v870
    %v1156 = vunpack.c.h.b16 %v870
    %v1157 = vunpack.c.l.b16 %v871
    %v1158 = vunpack.c.h.b16 %v871
    %v1159 = vunpack.c.l.b16 %v872
    %v1160 = vunpack.c.h.b16 %v872
    %v1161 = vunpack.c.l.b16 %v873
    %v1162 = vunpack.c.h.b16 %v873
    %v1163 = vunpack.c.l.b16 %v874
    %v1164 = vunpack.c.h.b16 %v874
    %v1165 = vunpack.c.l.b16 %v875
    %v1166 = vunpack.c.h.b16 %v875
    %v1167 = vunpack.c.l.b16 %v876
    %v1168 = vunpack.c.h.b16 %v876
    %v1169 = vunpack.c.l.b16 %v877
    %v1170 = vunpack.c.h.b16 %v877
    %v1171 = vunpack.c.l.b16 %v878
    %v1172 = vunpack.c.h.b16 %v878
    %v1173 = vunpack.c.l.b16 %v879
    %v1174 = vunpack.c.h.b16 %v879
    %v1175 = vunpack.c.l.b16 %v880
    %v1176 = vunpack.c.h.b16 %v880
    %v1177 = vunpack.c.l.b16 %v881
    %v1178 = vunpack.c.h.b16 %v881
    %v1179 = vunpack.c.l.b16 %v882
    %v1180 = vunpack.c.h.b16 %v882
    %v1181 = vunpack.c.l.b16 %v883
    %v1182 = vunpack.c.h.b16 %v883
    %v1183 = vunpack.c.l.b16 %v884
    %v1184 = vunpack.c.h.b16 %v884
    %v1185 = vunpack.c.l.b16 %v885
    %v1186 = vunpack.c.h.b16 %v885
    %v1187 = vunpack.c.l.b16 %v886
    %v1188 = vunpack.c.h.b16 %v886
    %v1189 = vunpack.c.l.b16 %v887
    %v1190 = vunpack.c.h.b16 %v887
    %v1191 = vunpack.c.l.b16 %v888
    %v1192 = vunpack.c.h.b16 %v888
    %v1193 = vunpack.c.l.b16 %v889
    %v1194 = vunpack.c.h.b16 %v889
    %v1195 = vunpack.c.l.b16 %v890
    %v1196 = vunpack.c.h.b16 %v890
    %v1197 = vunpack.c.l.b16 %v891
    %v1198 = vunpack.c.h.b16 %v891
    %v1199 = vunpack.c.l.b16 %v892
    %v1200 = vunpack.c.h.b16 %v892
    %v1201 = vunpack.c.l.b16 %v893
    %v1202 = vunpack.c.h.b16 %v893
    %v1203 = vunpack.c.l.b16 %v894
    %v1204 = vunpack.c.h.b16 %v894
    %v1205 = vunpack.c.l.b16 %v895
    %v1206 = vunpack.c.h.b16 %v895
    %v1207 = vunpack.c.l.b16 %v896
    %v1208 = vunpack.c.h.b16 %v896
    %v1209 = vunpack.c.l.b16 %v897
    %v1210 = vunpack.c.h.b16 %v897
    %v1211 = vunpack.c.l.b16 %v898
    %v1212 = vunpack.c.h.b16 %v898
    %v1213 = vunpack.c.l.b16 %v899
    %v1214 = vunpack.c.h.b16 %v899
    %v1215 = vunpack.c.l.b16 %v900
    %v1216 = vunpack.c.h.b16 %v900
    %v1217 = vunpack.c.l.b16 %v901
    %v1218 = vunpack.c.h.b16 %v901
    %v1219 = vunpack.c.l.b16 %v902
    %v1220 = vunpack.c.h.b16 %v902
    %v1221 = vunpack.c.l.b16 %v903
    %v1222 = vunpack.c.h.b16 %v903
    %v1223 = vunpack.c.l.b16 %v904
    %v1224 = vunpack.c.h.b16 %v904
    %v1225 = vunpack.c.l.b16 %v905
    %v1226 = vunpack.c.h.b16 %v905
    %v1227 = vunpack.c.l.b16 %v906
    %v1228 = vunpack.c.h.b16 %v906
    %v1229 = vunpack.c.l.b16 %v907
    %v1230 = vunpack.c.h.b16 %v907
    %v1231 = vunpack.c.l.b16 %v908
    %v1232 = vunpack.c.h.b16 %v908
    %v1233 = vunpack.c.l.b16 %v909
    %v1234 = vunpack.c.h.b16 %v909
    %v1235 = vunpack.c.l.b16 %v910
    %v1236 = vunpack.c.h.b16 %v910
    %v1237 = vunpack.c.l.b16 %v911
    %v1238 = vunpack.c.h.b16 %v911
    %v1239 = vunpack.c.l.b16 %v912
    %v1240 = vunpack.c.h.b16 %v912
    %v1241 = vunpack.c.l.b16 %v913
    %v1242 = vunpack.c.h.b16 %v913
    %v1243 = vunpack.c.l.b16 %v914
    %v1244 = vunpack.c.h.b16 %v914
    %v1245 = vunpack.c.l.b16 %v915
    %v1246 = vunpack.c.h.b16 %v915
    %v1247 = vunpack.c.l.b16 %v916
    %v1248 = vunpack.c.h.b16 %v916
    %v1249 = vunpack.c.l.b16 %v917
    %v1250 = vunpack.c.h.b16 %v917
    %v1251 = vunpack.c.l.b16 %v918
    %v1252 = vunpack.c.h.b16 %v918
    %v1253 = vunpack.c.l.b16 %v919
    %v1254 = vunpack.c.h.b16 %v919
    %v1255 = vunpack.c.l.b16 %v920
    %v1256 = vunpack.c.h.b16 %v920
    %v1257 = vunpack.c.l.b16 %v921
    %v1258 = vunpack.c.h.b16 %v921
    %v1259 = vunpack.c.l.b16 %v922
    %v1260 = vunpack.c.h.b16 %v922
    %v1261 = vunpack.c.l.b16 %v923
    %v1262 = vunpack.c.h.b16 %v923
    %v1263 = vunpack.c.l.b16 %v924
    %v1264 = vunpack.c.h.b16 %v924
    %v1265 = vunpack.c.l.b16 %v925
    %v1266 = vunpack.c.h.b16 %v925
    %v1267 = vunpack.c.l.b16 %v926
    %v1268 = vunpack.c.h.b16 %v926
    %v1269 = vunpack.c.l.b16 %v927
    %v1270 = vunpack.c.h.b16 %v927
    %v1271 = vunpack.c.l.b16 %v928
    %v1272 = vunpack.c.h.b16 %v928
    %v1273 = vunpack.c.l.b16 %v929
    %v1274 = vunpack.c.h.b16 %v929
    %v1275 = vunpack.c.l.b16 %v930
    %v1276 = vunpack.c.h.b16 %v930
    %v1277 = vunpack.c.l.b16 %v931
    %v1278 = vunpack.c.h.b16 %v931
    %v1279 = vunpack.c.l.b16 %v932
    %v1280 = vunpack.c.h.b16 %v932
    %v1281 = vunpack.c.l.b16 %v933
    %v1282 = vunpack.c.h.b16 %v933
    %v1283 = vunpack.c.l.b16 %v934
    %v1284 = vunpack.c.h.b16 %v934
    %v1285 = vunpack.c.l.b16 %v935
    %v1286 = vunpack.c.h.b16 %v935
    %v1287 = vunpack.c.l.b16 %v936
    %v1288 = vunpack.c.h.b16 %v936
    %v1289 = vunpack.c.l.b16 %v937
    %v1290 = vunpack.c.h.b16 %v937
    %v1291 = vunpack.c.l.b16 %v938
    %v1292 = vunpack.c.h.b16 %v938
    %v1293 = vunpack.c.l.b16 %v939
    %v1294 = vunpack.c.h.b16 %v939
    %v1295 = vunpack.c.l.b16 %v940
    %v1296 = vunpack.c.h.b16 %v940
    %v1297 = vunpack.c.l.b16 %v941
    %v1298 = vunpack.c.h.b16 %v941
    %v1299 = vunpack.c.l.b16 %v942
    %v1300 = vunpack.c.h.b16 %v942
    %v1301 = vunpack.c.l.b16 %v943
    %v1302 = vunpack.c.h.b16 %v943
    %v1303 = vunpack.c.l.b16 %v944
    %v1304 = vunpack.c.h.b16 %v944
    %v1305 = vunpack.c.l.b16 %v945
    %v1306 = vunpack.c.h.b16 %v945
    %v1307 = vunpack.c.l.b16 %v946
    %v1308 = vunpack.c.h.b16 %v946
    %v1309 = vunpack.c.l.b16 %v947
    %v1310 = vunpack.c.h.b16 %v947
    %v1311 = vunpack.c.l.b16 %v948
    %v1312 = vunpack.c.h.b16 %v948
    %v1313 = vunpack.c.l.b16 %v949
    %v1314 = vunpack.c.h.b16 %v949
    %v1315 = vunpack.c.l.b16 %v950
    %v1316 = vunpack.c.h.b16 %v950
    %v1317 = vunpack.c.l.b16 %v951
    %v1318 = vunpack.c.h.b16 %v951
    %v1319 = vunpack.c.l.b16 %v952
    %v1320 = vunpack.c.h.b16 %v952
    %v1321 = vunpack.c.l.b16 %v953
    %v1322 = vunpack.c.h.b16 %v953
    %v1323 = vunpack.c.l.b16 %v954
    %v1324 = vunpack.c.h.b16 %v954
    %v1325 = vunpack.c.l.b16 %v955
    %v1326 = vunpack.c.h.b16 %v955
    %v1327 = vunpack.c.l.b16 %v956
    %v1328 = vunpack.c.h.b16 %v956
    %v1329 = vunpack.c.l.b16 %v957
    %v1330 = vunpack.c.h.b16 %v957
    %v1331 = vunpack.c.l.b16 %v958
    %v1332 = vunpack.c.h.b16 %v958
    %v1333 = vunpack.c.l.b16 %v959
    %v1334 = vunpack.c.h.b16 %v959
    %v1335 = vunpack.c.l.b16 %v960
    %v1336 = vunpack.c.h.b16 %v960
    %v1337 = vunpack.c.l.b16 %v961
    %v1338 = vunpack.c.h.b16 %v961
    %v1339 = vunpack.c.l.b16 %v962
    %v1340 = vunpack.c.h.b16 %v962
    %v1341 = vunpack.c.l.b16 %v963
    %v1342 = vunpack.c.h.b16 %v963
    %v1343 = vunpack.c.l.b16 %v964
    %v1344 = vunpack.c.h.b16 %v964
    %v1345 = vunpack.c.l.b16 %v965
    %v1346 = vunpack.c.h.b16 %v965
    %v1347 = vunpack.c.l.b16 %v966
    %v1348 = vunpack.c.h.b16 %v966
    %v1349 = vunpack.c.l.b16 %v967
    %v1350 = vunpack.c.h.b16 %v967
    %v1351 = vunpack.c.l.b16 %v968
    %v1352 = vunpack.c.h.b16 %v968
    %v1353 = vunpack.c.l.b16 %v969
    %v1354 = vunpack.c.h.b16 %v969
    %v1355 = vunpack.c.l.b16 %v970
    %v1356 = vunpack.c.h.b16 %v970
    %v1357 = vunpack.c.l.b16 %v971
    %v1358 = vunpack.c.h.b16 %v971
    %v1359 = vunpack.c.l.b16 %v972
    %v1360 = vunpack.c.h.b16 %v972
    %v1361 = vunpack.c.l.b16 %v973
    %v1362 = vunpack.c.h.b16 %v973
    %v1363 = vunpack.c.l.b16 %v974
    %v1364 = vunpack.c.h.b16 %v974
    %v1365 = vunpack.c.l.b16 %v975
    %v1366 = vunpack.c.h.b16 %v975
    %v1367 = vunpack.c.l.b16 %v976
    %v1368 = vunpack.c.h.b16 %v976
    %v1369 = vpack.c.b16 %v1121, %v1113
    %v1370 = vpack.c.b16 %v1122, %v1114
    %v1371 = vpack.c.b16 %v1123, %v1115
    %v1372 = vpack.c.b16 %v1124, %v1116
    %v1373 = vpack.c.b16 %v1125, %v1117
    %v1374 = vpack.c.b16 %v1126, %v1118
    %v1375 = vpack.c.b16 %v1127, %v1119
    %v1376 = vpack.c.b16 %v1128, %v1120
    %v1377 = vpack.c.b16 %v1137, %v1129
    %v1378 = vpack.c.b16 %v1138, %v1130
    %v1379 = vpack.c.b16 %v1139, %v1131
    %v1380 = vpack.c.b16 %v1140, %v1132
    %v1381 = vpack.c.b16 %v1141, %v1133
    %v1382 = vpack.c.b16 %v1142, %v1134
    %v1383 = vpack.c.b16 %v1143, %v1135
    %v1384 = vpack.c.b16 %v1144, %v1136
    %v1385 = vpack.c.b16 %v1153, %v1145
    %v1386 = vpack.c.b16 %v1154, %v1146
    %v1387 = vpack.c.b16 %v1155, %v1147
    %v1388 = vpack.c.b16 %v1156, %v1148
    %v1389 = vpack.c.b16 %v1157, %v1149
    %v1390 = vpack.c.b16 %v1158, %v1150
    %v1391 = vpack.c.b16 %v1159, %v1151
    %v1392 = vpack.c.b16 %v1160, %v1152
    %v1393 = vpack.c.b16 %v1169, %v1161
    %v1394 = vpack.c.b16 %v1170, %v1162
    %v1395 = vpack.c.b16 %v1171, %v1163
    %v1396 = vpack.c.b16 %v1172, %v1164
    %v1397 = vpack.c.b16 %v1173, %v1165
    %v1398 = vpack.c.b16 %v1174, %v1166
    %v1399 = vpack.c.b16 %v1175, %v1167
    %v1400 = vpack.c.b16 %v1176, %v1168
    %v1401 = vpack.c.b16 %v1185, %v1177
    %v1402 = vpack.c.b16 %v1186, %v1178
    %v1403 = vpack.c.b16 %v1187, %v1179
    %v1404 = vpack.c.b16 %v1188, %v1180
    %v1405 = vpack.c.b16 %v1189, %v1181
    %v1406 = vpack.c.b16 %v1190, %v1182
    %v1407 = vpack.c.b16 %v1191, %v1183
    %v1408 = vpack.c.b16 %v1192, %v1184
    %v1409 = vpack.c.b16 %v1201, %v1193
    %v1410 = vpack.c.b16 %v1202, %v1194
    %v1411 = vpack.c.b16 %v1203, %v1195
    %v1412 = vpack.c.b16 %v1204, %v1196
    %v1413 = vpack.c.b16 %v1205, %v1197
    %v1414 = vpack.c.b16 %v1206, %v1198
    %v1415 = vpack.c.b16 %v1207, %v1199
    %v1416 = vpack.c.b16 %v1208, %v1200
    %v1417 = vpack.c.b16 %v1217, %v1209
    %v1418 = vpack.c.b16 %v1218, %v1210
    %v1419 = vpack.c.b16 %v1219, %v1211
    %v1420 = vpack.c.b16 %v1220, %v1212
    %v1421 = vpack.c.b16 %v1221, %v1213
    %v1422 = vpack.c.b16 %v1222, %v1214
    %v1423 = vpack.c.b16 %v1223, %v1215
    %v1424 = vpack.c.b16 %v1224, %v1216
    %v1425 = vpack.c.b16 %v1233, %v1225
    %v1426 = vpack.c.b16 %v1234, %v1226
    %v1427 = vpack.c.b16 %v1235, %v1227
    %v1428 = vpack.c.b16 %v1236, %v1228
    %v1429 = vpack.c.b16 %v1237, %v1229
    %v1430 = vpack.c.b16 %v1238, %v1230
    %v1431 = vpack.c.b16 %v1239, %v1231
    %v1432 = vpack.c.b16 %v1240, %v1232
    %v1433 = vpack.c.b16 %v1249, %v1241
    %v1434 = vpack.c.b16 %v1250, %v1242
    %v1435 = vpack.c.b16 %v1251, %v1243
    %v1436 = vpack.c.b16 %v1252, %v1244
    %v1437 = vpack.c.b16 %v1253, %v1245
    %v1438 = vpack.c.b16 %v1254, %v1246
    %v1439 = vpack.c.b16 %v1255, %v1247
    %v1440 = vpack.c.b16 %v1256, %v1248
    %v1441 = vpack.c.b16 %v1265, %v1257
    %v1442 = vpack.c.b16 %v1266, %v1258
    %v1443 = vpack.c.b16 %v1267, %v1259
    %v1444 = vpack.c.b16 %v1268, %v1260
    %v1445 = vpack.c.b16 %v1269, %v1261
    %v1446 = vpack.c.b16 %v1270, %v1262
    %v1447 = vpack.c.b16 %v1271, %v1263
    %v1448 = vpack.c.b16 %v1272, %v1264
    %v1449 = vpack.c.b16 %v1281, %v1273
    %v1450 = vpack.c.b16 %v1282, %v1274
    %v1451 = vpack.c.b16 %v1283, %v1275
    %v1452 = vpack.c.b16 %v1284, %v1276
    %v1453 = vpack.c.b16 %v1285, %v1277
    %v1454 = vpack.c.b16 %v1286, %v1278
    %v1455 = vpack.c.b16 %v1287, %v1279
    %v1456 = vpack.c.b16 %v1288, %v1280
    %v1457 = vpack.c.b16 %v1297, %v1289
    %v1458 = vpack.c.b16 %v1298, %v1290
    %v1459 = vpack.c.b16 %v1299, %v1291
    %v1460 = vpack.c.b16 %v1300, %v1292
    %v1461 = vpack.c.b16 %v1301, %v1293
    %v1462 = vpack.c.b16 %v1302, %v1294
    %v1463 = vpack.c.b16 %v1303, %v1295
    %v1464 = vpack.c.b16 %v1304, %v1296
    %v1465 = vpack.c.b16 %v1313, %v1305
    %v1466 = vpack.c.b16 %v1314, %v1306
    %v1467 = vpack.c.b16 %v1315, %v1307
    %v1468 = vpack.c.b16 %v1316, %v1308
    %v1469 = vpack.c.b16 %v1317, %v1309
    %v1470 = vpack.c.b16 %v1318, %v1310
    %v1471 = vpack.c.b16 %v1319, %v1311
    %v1472 = vpack.c.b16 %v1320, %v1312
    %v1473 = vpack.c.b16 %v1329, %v1321
    %v1474 = vpack.c.b16 %v1330, %v1322
    %v1475 = vpack.c.b16 %v1331, %v1323
    %v1476 = vpack.c.b16 %v1332, %v1324
    %v1477 = vpack.c.b16 %v1333, %v1325
    %v1478 = vpack.c.b16 %v1334, %v1326
    %v1479 = vpack.c.b16 %v1335, %v1327
    %v1480 = vpack.c.b16 %v1336, %v1328
    %v1481 = vpack.c.b16 %v1345, %v1337
    %v1482 = vpack.c.b16 %v1346, %v1338
    %v1483 = vpack.c.b16 %v1347, %v1339
    %v1484 = vpack.c.b16 %v1348, %v1340
    %v1485 = vpack.c.b16 %v1349, %v1341
    %v1486 = vpack.c.b16 %v1350, %v1342
    %v1487 = vpack.c.b16 %v1351, %v1343
    %v1488 = vpack.c.b16 %v1352, %v1344
    %v1489 = vpack.c.b16 %v1361, %v1353
    %v1490 = vpack.c.b16 %v1362, %v1354
    %v1491 = vpack.c.b16 %v1363, %v1355
    %v1492 = vpack.c.b16 %v1364, %v1356
    %v1493 = vpack.c.b16 %v1365, %v1357
    %v1494 = vpack.c.b16 %v1366, %v1358
    %v1495 = vpack.c.b16 %v1367, %v1359
    %v1496 = vpack.c.b16 %v1368, %v1360
    %1625 = vmatprep.subr.bf16.mxu0 %v1370
    %1626 = vmatpush1.bf16.msra.mxu0 %v1369
    %1627 = vmatprep.subr.bf16.mxu0 %v1378
    %1628 = vmatpush1.bf16.msra.mxu0 %v1377
    %1629 = vmatprep.subr.bf16.mxu0 %v1386
    %1630 = vmatpush1.bf16.msra.mxu0 %v1385
    %1631 = vmatprep.subr.bf16.mxu0 %v1394
    %1632 = vmatpush1.bf16.msra.mxu0 %v1393
    %1633 = vmatprep.subr.bf16.mxu0 %v1402
    %1634 = vmatpush1.bf16.msra.mxu0 %v1401
    %1635 = vmatprep.subr.bf16.mxu0 %v1410
    %1636 = vmatpush1.bf16.msra.mxu0 %v1409
    %1637 = vmatprep.subr.bf16.mxu0 %v1418
    %1638 = vmatpush1.bf16.msra.mxu0 %v1417
    %1639 = vmatprep.subr.bf16.mxu0 %v1426
    %1640 = vmatpush1.bf16.msra.mxu0 %v1425
    %1641 = vmatprep.subr.bf16.mxu0 %v1434
    %1642 = vmatpush1.bf16.msra.mxu0 %v1433
    %1643 = vmatprep.subr.bf16.mxu0 %v1442
    %1644 = vmatpush1.bf16.msra.mxu0 %v1441
    %1645 = vmatprep.subr.bf16.mxu0 %v1450
    %1646 = vmatpush1.bf16.msra.mxu0 %v1449
    %1647 = vmatprep.subr.bf16.mxu0 %v1458
    %1648 = vmatpush1.bf16.msra.mxu0 %v1457
    %1649 = vmatprep.subr.bf16.mxu0 %v1466
    %1650 = vmatpush1.bf16.msra.mxu0 %v1465
    %1651 = vmatprep.subr.bf16.mxu0 %v1474
    %1652 = vmatpush1.bf16.msra.mxu0 %v1473
    %1653 = vmatprep.subr.bf16.mxu0 %v1482
    %1654 = vmatpush1.bf16.msra.mxu0 %v1481
    %1655 = vmatprep.subr.bf16.mxu0 %v1490
    %1656 = vmatpush1.bf16.msra.mxu0 %v1489
    %1657 = vmatprep.mubr.bf16.mxu0 %v984
    %1658 = vmatmul.mubr.bf16.gmra.mrb[0].mxu0 %v983
    %v1659 = vpop.f32.mrb[0].mxu0
    %v1660 = vadd.f32 0.0, %v1659
    %v1661 = vpop.f32.mrb[0].mxu0
    %v1662 = vadd.f32 0.0, %v1661
    %v1663 = vpop.f32.mrb[0].mxu0
    %v1664 = vpop.f32.mrb[0].mxu0
    %1665 = vdwg.mxu0
    %1666 = vmatprep.subr.bf16.mxu0 %v1372
    %1667 = vmatpush1.bf16.msra.mxu0 %v1371
    %1668 = vmatprep.subr.bf16.mxu0 %v1380
    %1669 = vmatpush1.bf16.msra.mxu0 %v1379
    %1670 = vmatprep.subr.bf16.mxu0 %v1388
    %1671 = vmatpush1.bf16.msra.mxu0 %v1387
    %1672 = vmatprep.subr.bf16.mxu0 %v1396
    %1673 = vmatpush1.bf16.msra.mxu0 %v1395
    %1674 = vmatprep.subr.bf16.mxu0 %v1404
    %1675 = vmatpush1.bf16.msra.mxu0 %v1403
    %1676 = vmatprep.subr.bf16.mxu0 %v1412
    %1677 = vmatpush1.bf16.msra.mxu0 %v1411
    %1678 = vmatprep.subr.bf16.mxu0 %v1420
    %1679 = vmatpush1.bf16.msra.mxu0 %v1419
    %1680 = vmatprep.subr.bf16.mxu0 %v1428
    %1681 = vmatpush1.bf16.msra.mxu0 %v1427
    %1682 = vmatprep.subr.bf16.mxu0 %v1436
    %1683 = vmatpush1.bf16.msra.mxu0 %v1435
    %1684 = vmatprep.subr.bf16.mxu0 %v1444
    %1685 = vmatpush1.bf16.msra.mxu0 %v1443
    %1686 = vmatprep.subr.bf16.mxu0 %v1452
    %1687 = vmatpush1.bf16.msra.mxu0 %v1451
    %1688 = vmatprep.subr.bf16.mxu0 %v1460
    %1689 = vmatpush1.bf16.msra.mxu0 %v1459
    %1690 = vmatprep.subr.bf16.mxu0 %v1468
    %1691 = vmatpush1.bf16.msra.mxu0 %v1467
    %1692 = vmatprep.subr.bf16.mxu0 %v1476
    %1693 = vmatpush1.bf16.msra.mxu0 %v1475
    %1694 = vmatprep.subr.bf16.mxu0 %v1484
    %1695 = vmatpush1.bf16.msra.mxu0 %v1483
    %1696 = vmatprep.subr.bf16.mxu0 %v1492
    %1697 = vmatpush1.bf16.msra.mxu0 %v1491
    %1698 = vmatprep.mubr.bf16.mxu0 %v984
    %1699 = vmatmul.mubr.bf16.gmra.mrb[0].mxu0 %v983
    %v1700 = vpop.f32.mrb[0].mxu0
    %v1701 = vadd.f32 0.0, %v1700
    %v1702 = vpop.f32.mrb[0].mxu0
    %v1703 = vadd.f32 0.0, %v1702
    %v1704 = vpop.f32.mrb[0].mxu0
    %v1705 = vpop.f32.mrb[0].mxu0
    %1706 = vdwg.mxu0
    %1707 = vmatprep.subr.bf16.mxu0 %v1374
    %1708 = vmatpush1.bf16.msra.mxu0 %v1373
    %1709 = vmatprep.subr.bf16.mxu0 %v1382
    %1710 = vmatpush1.bf16.msra.mxu0 %v1381
    %1711 = vmatprep.subr.bf16.mxu0 %v1390
    %1712 = vmatpush1.bf16.msra.mxu0 %v1389
    %1713 = vmatprep.subr.bf16.mxu0 %v1398
    %1714 = vmatpush1.bf16.msra.mxu0 %v1397
    %1715 = vmatprep.subr.bf16.mxu0 %v1406
    %1716 = vmatpush1.bf16.msra.mxu0 %v1405
    %1717 = vmatprep.subr.bf16.mxu0 %v1414
    %1718 = vmatpush1.bf16.msra.mxu0 %v1413
    %1719 = vmatprep.subr.bf16.mxu0 %v1422
    %1720 = vmatpush1.bf16.msra.mxu0 %v1421
    %1721 = vmatprep.subr.bf16.mxu0 %v1430
    %1722 = vmatpush1.bf16.msra.mxu0 %v1429
    %1723 = vmatprep.subr.bf16.mxu0 %v1438
    %1724 = vmatpush1.bf16.msra.mxu0 %v1437
    %1725 = vmatprep.subr.bf16.mxu0 %v1446
    %1726 = vmatpush1.bf16.msra.mxu0 %v1445
    %1727 = vmatprep.subr.bf16.mxu0 %v1454
    %1728 = vmatpush1.bf16.msra.mxu0 %v1453
    %1729 = vmatprep.subr.bf16.mxu0 %v1462
    %1730 = vmatpush1.bf16.msra.mxu0 %v1461
    %1731 = vmatprep.subr.bf16.mxu0 %v1470
    %1732 = vmatpush1.bf16.msra.mxu0 %v1469
    %1733 = vmatprep.subr.bf16.mxu0 %v1478
    %1734 = vmatpush1.bf16.msra.mxu0 %v1477
    %1735 = vmatprep.subr.bf16.mxu0 %v1486
    %1736 = vmatpush1.bf16.msra.mxu0 %v1485
    %1737 = vmatprep.subr.bf16.mxu0 %v1494
    %1738 = vmatpush1.bf16.msra.mxu0 %v1493
    %1739 = vmatprep.mubr.bf16.mxu0 %v984
    %1740 = vmatmul.mubr.bf16.gmra.mrb[0].mxu0 %v983
    %v1741 = vpop.f32.mrb[0].mxu0
    %v1742 = vadd.f32 0.0, %v1741
    %v1743 = vpop.f32.mrb[0].mxu0
    %v1744 = vadd.f32 0.0, %v1743
    %v1745 = vpop.f32.mrb[0].mxu0
    %v1746 = vpop.f32.mrb[0].mxu0
    %1747 = vdwg.mxu0
    %1748 = vmatprep.subr.bf16.mxu0 %v1376
    %1749 = vmatpush1.bf16.msra.mxu0 %v1375
    %1750 = vmatprep.subr.bf16.mxu0 %v1384
    %1751 = vmatpush1.bf16.msra.mxu0 %v1383
    %1752 = vmatprep.subr.bf16.mxu0 %v1392
    %1753 = vmatpush1.bf16.msra.mxu0 %v1391
    %1754 = vmatprep.subr.bf16.mxu0 %v1400
    %1755 = vmatpush1.bf16.msra.mxu0 %v1399
    %1756 = vmatprep.subr.bf16.mxu0 %v1408
    %1757 = vmatpush1.bf16.msra.mxu0 %v1407
    %1758 = vmatprep.subr.bf16.mxu0 %v1416
    %1759 = vmatpush1.bf16.msra.mxu0 %v1415
    %1760 = vmatprep.subr.bf16.mxu0 %v1424
    %1761 = vmatpush1.bf16.msra.mxu0 %v1423
    %1762 = vmatprep.subr.bf16.mxu0 %v1432
    %1763 = vmatpush1.bf16.msra.mxu0 %v1431
    %1764 = vmatprep.subr.bf16.mxu0 %v1440
    %1765 = vmatpush1.bf16.msra.mxu0 %v1439
    %1766 = vmatprep.subr.bf16.mxu0 %v1448
    %1767 = vmatpush1.bf16.msra.mxu0 %v1447
    %1768 = vmatprep.subr.bf16.mxu0 %v1456
    %1769 = vmatpush1.bf16.msra.mxu0 %v1455
    %1770 = vmatprep.subr.bf16.mxu0 %v1464
    %1771 = vmatpush1.bf16.msra.mxu0 %v1463
    %1772 = vmatprep.subr.bf16.mxu0 %v1472
    %1773 = vmatpush1.bf16.msra.mxu0 %v1471
    %1774 = vmatprep.subr.bf16.mxu0 %v1480
    %1775 = vmatpush1.bf16.msra.mxu0 %v1479
    %1776 = vmatprep.subr.bf16.mxu0 %v1488
    %1777 = vmatpush1.bf16.msra.mxu0 %v1487
    %1778 = vmatprep.subr.bf16.mxu0 %v1496
    %1779 = vmatpush1.bf16.msra.mxu0 %v1495
    %1780 = vmatprep.mubr.bf16.mxu0 %v984
    %1781 = vmatmul.mubr.bf16.gmra.mrb[0].mxu0 %v983
    %v1782 = vpop.f32.mrb[0].mxu0
    %v1783 = vadd.f32 0.0, %v1782
    %v1784 = vpop.f32.mrb[0].mxu0
    %v1785 = vadd.f32 0.0, %v1784
    %v1786 = vpop.f32.mrb[0].mxu0
    %v1787 = vpop.f32.mrb[0].mxu0
    %1788 = vdwg.mxu0
    %v1789 = vld [vmem:[#allocation2] sm:$0xff]
    %v1790 = vld [vmem:[#allocation2 + $0x8] sm:$0xff]
    %v1791 = vld [vmem:[#allocation2 + $0x10] sm:$0xff]
    %v1792 = vld [vmem:[#allocation2 + $0x18] sm:$0xff]
    %v1793 = vld [vmem:[#allocation2 + $0x1e0] sm:$0xff]
    %v1794 = vld [vmem:[#allocation2 + $0x1e8] sm:$0xff]
    %v1795 = vld [vmem:[#allocation2 + $0x1f0] sm:$0xff]
    %v1796 = vld [vmem:[#allocation2 + $0x1f8] sm:$0xff]
    %v1797 = vadd.f32 %v1660, %v1789
    %v1798 = vadd.f32 %v1662, %v1790
    %v1799 = vadd.f32 %v1701, %v1791
    %v1800 = vadd.f32 %v1703, %v1792
    %v1801 = vxor.u32 %v1797, 2147483648
    %v1802 = vmul.f32 %v1801, 1.442695
    %v1803 = vpow.pop %v1802
    %v1804 = vadd.f32 %v1803, 1.0
    %v1805 = vrcp.pop %v1804
    %v1806 = vmul.f32 1.0, %v1805
    %v1807 = vxor.u32 %v1798, 2147483648
    %v1808 = vmul.f32 %v1807, 1.442695
    %v1809 = vpow.pop %v1808
    %v1810 = vadd.f32 %v1809, 1.0
    %v1811 = vrcp.pop %v1810
    %v1812 = vmul.f32 1.0, %v1811
    %v1813 = vtanh.pop %v1799
    %v1814 = vxor.u32 %v1800, 2147483648
    %v1815 = vmul.f32 %v1814, 1.442695
    %v1816 = vpow.pop %v1815
    %v1817 = vadd.f32 %v1816, 1.0
    %v1818 = vrcp.pop %v1817
    %v1819 = vmul.f32 1.0, %v1818
    %v1820 = vmul.f32 %v1812, %v978
    %v1821 = vmul.f32 %v1806, %v1813
    %v1822 = vadd.f32 %v1820, %v1821
    %v1823 = vtanh.pop %v1822
    %v1824 = vmul.f32 %v1819, %v1823
    %v1825 = vadd.f32 %v1742, %v1793
    %v1826 = vadd.f32 %v1744, %v1794
    %v1827 = vadd.f32 %v1783, %v1795
    %v1828 = vadd.f32 %v1785, %v1796
    %v1829 = vxor.u32 %v1825, 2147483648
    %v1830 = vmul.f32 %v1829, 1.442695
    %v1831 = vpow.pop %v1830
    %v1832 = vadd.f32 %v1831, 1.0
    %v1833 = vrcp.pop %v1832
    %v1834 = vmul.f32 1.0, %v1833
    %v1835 = vxor.u32 %v1826, 2147483648
    %v1836 = vmul.f32 %v1835, 1.442695
    %v1837 = vpow.pop %v1836
    %v1838 = vadd.f32 %v1837, 1.0
    %v1839 = vrcp.pop %v1838
    %v1840 = vmul.f32 1.0, %v1839
    %v1841 = vtanh.pop %v1827
    %v1842 = vxor.u32 %v1828, 2147483648
    %v1843 = vmul.f32 %v1842, 1.442695
    %v1844 = vpow.pop %v1843
    %v1845 = vadd.f32 %v1844, 1.0
    %v1846 = vrcp.pop %v1845
    %v1847 = vmul.f32 1.0, %v1846
    %v1848 = vmul.f32 %v1840, %v982
    %v1849 = vmul.f32 %v1834, %v1841
    %v1850 = vadd.f32 %v1848, %v1849
    %v1851 = vtanh.pop %v1850
    %v1852 = vmul.f32 %v1847, %v1851
    %1853 = vst [vmem:[%s6] sm:$0xff] %v1824
    %s1854 = scalar_lea.vmem %s6, 112
    %1855 = vst [vmem:[%s1854 + $0x8] sm:$0xff] %v1852
    %v1856 = vpack.c.bf16 %v1824, %v1824
    %v1857 = vpack.c.bf16 %v1852, %v1852
    %1858 = vmatprep.subr.bf16.mxu0 %v1370
    %1859 = vmatpush1.bf16.msra.mxu0 %v1369
    %1860 = vmatprep.subr.bf16.mxu0 %v1378
    %1861 = vmatpush1.bf16.msra.mxu0 %v1377
    %1862 = vmatprep.subr.bf16.mxu0 %v1386
    %1863 = vmatpush1.bf16.msra.mxu0 %v1385
    %1864 = vmatprep.subr.bf16.mxu0 %v1394
    %1865 = vmatpush1.bf16.msra.mxu0 %v1393
    %1866 = vmatprep.subr.bf16.mxu0 %v1402
    %1867 = vmatpush1.bf16.msra.mxu0 %v1401
    %1868 = vmatprep.subr.bf16.mxu0 %v1410
    %1869 = vmatpush1.bf16.msra.mxu0 %v1409
    %1870 = vmatprep.subr.bf16.mxu0 %v1418
    %1871 = vmatpush1.bf16.msra.mxu0 %v1417
    %1872 = vmatprep.subr.bf16.mxu0 %v1426
    %1873 = vmatpush1.bf16.msra.mxu0 %v1425
    %1874 = vmatprep.subr.bf16.mxu0 %v1434
    %1875 = vmatpush1.bf16.msra.mxu0 %v1433
    %1876 = vmatprep.subr.bf16.mxu0 %v1442
    %1877 = vmatpush1.bf16.msra.mxu0 %v1441
    %1878 = vmatprep.subr.bf16.mxu0 %v1450
    %1879 = vmatpush1.bf16.msra.mxu0 %v1449
    %1880 = vmatprep.subr.bf16.mxu0 %v1458
    %1881 = vmatpush1.bf16.msra.mxu0 %v1457
    %1882 = vmatprep.subr.bf16.mxu0 %v1466
    %1883 = vmatpush1.bf16.msra.mxu0 %v1465
    %1884 = vmatprep.subr.bf16.mxu0 %v1474
    %1885 = vmatpush1.bf16.msra.mxu0 %v1473
    %1886 = vmatprep.subr.bf16.mxu0 %v1482
    %1887 = vmatpush1.bf16.msra.mxu0 %v1481
    %1888 = vmatprep.subr.bf16.mxu0 %v1490
    %1889 = vmatpush1.bf16.msra.mxu0 %v1489
    %1890 = vmatprep.mubr.bf16.mxu0 %v1857
    %1891 = vmatmul.mubr.bf16.gmra.mrb[0].mxu0 %v1856
    %v1892 = vpop.f32.mrb[0].mxu0
    %v1893 = vadd.f32 0.0, %v1892
    %v1894 = vpop.f32.mrb[0].mxu0
    %v1895 = vadd.f32 0.0, %v1894
    %v1896 = vpop.f32.mrb[0].mxu0
    %v1897 = vpop.f32.mrb[0].mxu0
    %1898 = vdwg.mxu0
    %1899 = vmatprep.subr.bf16.mxu0 %v1372
    %1900 = vmatpush1.bf16.msra.mxu0 %v1371
    %1901 = vmatprep.subr.bf16.mxu0 %v1380
    %1902 = vmatpush1.bf16.msra.mxu0 %v1379
    %1903 = vmatprep.subr.bf16.mxu0 %v1388
    %1904 = vmatpush1.bf16.msra.mxu0 %v1387
    %1905 = vmatprep.subr.bf16.mxu0 %v1396
    %1906 = vmatpush1.bf16.msra.mxu0 %v1395
    %1907 = vmatprep.subr.bf16.mxu0 %v1404
    %1908 = vmatpush1.bf16.msra.mxu0 %v1403
    %1909 = vmatprep.subr.bf16.mxu0 %v1412
    %1910 = vmatpush1.bf16.msra.mxu0 %v1411
    %1911 = vmatprep.subr.bf16.mxu0 %v1420
    %1912 = vmatpush1.bf16.msra.mxu0 %v1419
    %1913 = vmatprep.subr.bf16.mxu0 %v1428
    %1914 = vmatpush1.bf16.msra.mxu0 %v1427
    %1915 = vmatprep.subr.bf16.mxu0 %v1436
    %1916 = vmatpush1.bf16.msra.mxu0 %v1435
    %1917 = vmatprep.subr.bf16.mxu0 %v1444
    %1918 = vmatpush1.bf16.msra.mxu0 %v1443
    %1919 = vmatprep.subr.bf16.mxu0 %v1452
    %1920 = vmatpush1.bf16.msra.mxu0 %v1451
    %1921 = vmatprep.subr.bf16.mxu0 %v1460
    %1922 = vmatpush1.bf16.msra.mxu0 %v1459
    %1923 = vmatprep.subr.bf16.mxu0 %v1468
    %1924 = vmatpush1.bf16.msra.mxu0 %v1467
    %1925 = vmatprep.subr.bf16.mxu0 %v1476
    %1926 = vmatpush1.bf16.msra.mxu0 %v1475
    %1927 = vmatprep.subr.bf16.mxu0 %v1484
    %1928 = vmatpush1.bf16.msra.mxu0 %v1483
    %1929 = vmatprep.subr.bf16.mxu0 %v1492
    %1930 = vmatpush1.bf16.msra.mxu0 %v1491
    %1931 = vmatprep.mubr.bf16.mxu0 %v1857
    %1932 = vmatmul.mubr.bf16.gmra.mrb[0].mxu0 %v1856
    %v1933 = vpop.f32.mrb[0].mxu0
    %v1934 = vadd.f32 0.0, %v1933
    %v1935 = vpop.f32.mrb[0].mxu0
    %v1936 = vadd.f32 0.0, %v1935
    %v1937 = vpop.f32.mrb[0].mxu0
    %v1938 = vpop.f32.mrb[0].mxu0
    %1939 = vdwg.mxu0
    %1940 = vmatprep.subr.bf16.mxu0 %v1374
    %1941 = vmatpush1.bf16.msra.mxu0 %v1373
    %1942 = vmatprep.subr.bf16.mxu0 %v1382
    %1943 = vmatpush1.bf16.msra.mxu0 %v1381
    %1944 = vmatprep.subr.bf16.mxu0 %v1390
    %1945 = vmatpush1.bf16.msra.mxu0 %v1389
    %1946 = vmatprep.subr.bf16.mxu0 %v1398
    %1947 = vmatpush1.bf16.msra.mxu0 %v1397
    %1948 = vmatprep.subr.bf16.mxu0 %v1406
    %1949 = vmatpush1.bf16.msra.mxu0 %v1405
    %1950 = vmatprep.subr.bf16.mxu0 %v1414
    %1951 = vmatpush1.bf16.msra.mxu0 %v1413
    %1952 = vmatprep.subr.bf16.mxu0 %v1422
    %1953 = vmatpush1.bf16.msra.mxu0 %v1421
    %1954 = vmatprep.subr.bf16.mxu0 %v1430
    %1955 = vmatpush1.bf16.msra.mxu0 %v1429
    %1956 = vmatprep.subr.bf16.mxu0 %v1438
    %1957 = vmatpush1.bf16.msra.mxu0 %v1437
    %1958 = vmatprep.subr.bf16.mxu0 %v1446
    %1959 = vmatpush1.bf16.msra.mxu0 %v1445
    %1960 = vmatprep.subr.bf16.mxu0 %v1454
    %1961 = vmatpush1.bf16.msra.mxu0 %v1453
    %1962 = vmatprep.subr.bf16.mxu0 %v1462
    %1963 = vmatpush1.bf16.msra.mxu0 %v1461
    %1964 = vmatprep.subr.bf16.mxu0 %v1470
    %1965 = vmatpush1.bf16.msra.mxu0 %v1469
    %1966 = vmatprep.subr.bf16.mxu0 %v1478
    %1967 = vmatpush1.bf16.msra.mxu0 %v1477
    %1968 = vmatprep.subr.bf16.mxu0 %v1486
    %1969 = vmatpush1.bf16.msra.mxu0 %v1485
    %1970 = vmatprep.subr.bf16.mxu0 %v1494
    %1971 = vmatpush1.bf16.msra.mxu0 %v1493
    %1972 = vmatprep.mubr.bf16.mxu0 %v1857
    %1973 = vmatmul.mubr.bf16.gmra.mrb[0].mxu0 %v1856
    %v1974 = vpop.f32.mrb[0].mxu0
    %v1975 = vadd.f32 0.0, %v1974
    %v1976 = vpop.f32.mrb[0].mxu0
    %v1977 = vadd.f32 0.0, %v1976
    %v1978 = vpop.f32.mrb[0].mxu0
    %v1979 = vpop.f32.mrb[0].mxu0
    %1980 = vdwg.mxu0
    %1981 = vmatprep.subr.bf16.mxu0 %v1376
    %1982 = vmatpush1.bf16.msra.mxu0 %v1375
    %1983 = vmatprep.subr.bf16.mxu0 %v1384
    %1984 = vmatpush1.bf16.msra.mxu0 %v1383
    %1985 = vmatprep.subr.bf16.mxu0 %v1392
    %1986 = vmatpush1.bf16.msra.mxu0 %v1391
    %1987 = vmatprep.subr.bf16.mxu0 %v1400
    %1988 = vmatpush1.bf16.msra.mxu0 %v1399
    %1989 = vmatprep.subr.bf16.mxu0 %v1408
    %1990 = vmatpush1.bf16.msra.mxu0 %v1407
    %1991 = vmatprep.subr.bf16.mxu0 %v1416
    %1992 = vmatpush1.bf16.msra.mxu0 %v1415
    %1993 = vmatprep.subr.bf16.mxu0 %v1424
    %1994 = vmatpush1.bf16.msra.mxu0 %v1423
    %1995 = vmatprep.subr.bf16.mxu0 %v1432
    %1996 = vmatpush1.bf16.msra.mxu0 %v1431
    %1997 = vmatprep.subr.bf16.mxu0 %v1440
    %1998 = vmatpush1.bf16.msra.mxu0 %v1439
    %1999 = vmatprep.subr.bf16.mxu0 %v1448
    %2000 = vmatpush1.bf16.msra.mxu0 %v1447
    %2001 = vmatprep.subr.bf16.mxu0 %v1456
    %2002 = vmatpush1.bf16.msra.mxu0 %v1455
    %2003 = vmatprep.subr.bf16.mxu0 %v1464
    %2004 = vmatpush1.bf16.msra.mxu0 %v1463
    %2005 = vmatprep.subr.bf16.mxu0 %v1472
    %2006 = vmatpush1.bf16.msra.mxu0 %v1471
    %2007 = vmatprep.subr.bf16.mxu0 %v1480
    %2008 = vmatpush1.bf16.msra.mxu0 %v1479
    %2009 = vmatprep.subr.bf16.mxu0 %v1488
    %2010 = vmatpush1.bf16.msra.mxu0 %v1487
    %2011 = vmatprep.subr.bf16.mxu0 %v1496
    %2012 = vmatpush1.bf16.msra.mxu0 %v1495
    %2013 = vmatprep.mubr.bf16.mxu0 %v1857
    %2014 = vmatmul.mubr.bf16.gmra.mrb[0].mxu0 %v1856
    %v2015 = vpop.f32.mrb[0].mxu0
    %v2016 = vadd.f32 0.0, %v2015
    %v2017 = vpop.f32.mrb[0].mxu0
    %v2018 = vadd.f32 0.0, %v2017
    %v2019 = vpop.f32.mrb[0].mxu0
    %v2020 = vpop.f32.mrb[0].mxu0
    %2021 = vdwg.mxu0
    %v2022 = vld [vmem:[#allocation2 + $0x40] sm:$0xff]
    %v2023 = vld [vmem:[#allocation2 + $0x48] sm:$0xff]
    %v2024 = vld [vmem:[#allocation2 + $0x50] sm:$0xff]
    %v2025 = vld [vmem:[#allocation2 + $0x58] sm:$0xff]
    %v2026 = vld [vmem:[#allocation2 + $0x1a0] sm:$0xff]
    %v2027 = vld [vmem:[#allocation2 + $0x1a8] sm:$0xff]
    %v2028 = vld [vmem:[#allocation2 + $0x1b0] sm:$0xff]
    %v2029 = vld [vmem:[#allocation2 + $0x1b8] sm:$0xff]
    %v2030 = vadd.f32 %v1893, %v2022
    %v2031 = vadd.f32 %v1895, %v2023
    %v2032 = vadd.f32 %v1934, %v2024
    %v2033 = vadd.f32 %v1936, %v2025
    %v2034 = vxor.u32 %v2030, 2147483648
    %v2035 = vmul.f32 %v2034, 1.442695
    %v2036 = vpow.pop %v2035
    %v2037 = vadd.f32 %v2036, 1.0
    %v2038 = vrcp.pop %v2037
    %v2039 = vmul.f32 1.0, %v2038
    %v2040 = vxor.u32 %v2031, 2147483648
    %v2041 = vmul.f32 %v2040, 1.442695
    %v2042 = vpow.pop %v2041
    %v2043 = vadd.f32 %v2042, 1.0
    %v2044 = vrcp.pop %v2043
    %v2045 = vmul.f32 1.0, %v2044
    %v2046 = vtanh.pop %v2032
    %v2047 = vxor.u32 %v2033, 2147483648
    %v2048 = vmul.f32 %v2047, 1.442695
    %v2049 = vpow.pop %v2048
    %v2050 = vadd.f32 %v2049, 1.0
    %v2051 = vrcp.pop %v2050
    %v2052 = vmul.f32 1.0, %v2051
    %v2053 = vmul.f32 %v2045, %v1822
    %v2054 = vmul.f32 %v2039, %v2046
    %v2055 = vadd.f32 %v2053, %v2054
    %v2056 = vtanh.pop %v2055
    %v2057 = vmul.f32 %v2052, %v2056
    %v2058 = vadd.f32 %v1975, %v2026
    %v2059 = vadd.f32 %v1977, %v2027
    %v2060 = vadd.f32 %v2016, %v2028
    %v2061 = vadd.f32 %v2018, %v2029
    %v2062 = vxor.u32 %v2058, 2147483648
    %v2063 = vmul.f32 %v2062, 1.442695
    %v2064 = vpow.pop %v2063
    %v2065 = vadd.f32 %v2064, 1.0
    %v2066 = vrcp.pop %v2065
    %v2067 = vmul.f32 1.0, %v2066
    %v2068 = vxor.u32 %v2059, 2147483648
    %v2069 = vmul.f32 %v2068, 1.442695
    %v2070 = vpow.pop %v2069
    %v2071 = vadd.f32 %v2070, 1.0
    %v2072 = vrcp.pop %v2071
    %v2073 = vmul.f32 1.0, %v2072
    %v2074 = vtanh.pop %v2060
    %v2075 = vxor.u32 %v2061, 2147483648
    %v2076 = vmul.f32 %v2075, 1.442695
    %v2077 = vpow.pop %v2076
    %v2078 = vadd.f32 %v2077, 1.0
    %v2079 = vrcp.pop %v2078
    %v2080 = vmul.f32 1.0, %v2079
    %v2081 = vmul.f32 %v2073, %v1850
    %v2082 = vmul.f32 %v2067, %v2074
    %v2083 = vadd.f32 %v2081, %v2082
    %v2084 = vtanh.pop %v2083
    %v2085 = vmul.f32 %v2080, %v2084
    %s2086 = scalar_lea.vmem %s6, 16
    %2087 = vst [vmem:[%s2086] sm:$0xff] %v2057
    %s2088 = scalar_lea.vmem %s6, 96
    %2089 = vst [vmem:[%s2088 + $0x8] sm:$0xff] %v2085
    %v2090 = vpack.c.bf16 %v2057, %v2057
    %v2091 = vpack.c.bf16 %v2085, %v2085
    %2092 = vmatprep.subr.bf16.mxu0 %v1370
    %2093 = vmatpush1.bf16.msra.mxu0 %v1369
    %2094 = vmatprep.subr.bf16.mxu0 %v1378
    %2095 = vmatpush1.bf16.msra.mxu0 %v1377
    %2096 = vmatprep.subr.bf16.mxu0 %v1386
    %2097 = vmatpush1.bf16.msra.mxu0 %v1385
    %2098 = vmatprep.subr.bf16.mxu0 %v1394
    %2099 = vmatpush1.bf16.msra.mxu0 %v1393
    %2100 = vmatprep.subr.bf16.mxu0 %v1402
    %2101 = vmatpush1.bf16.msra.mxu0 %v1401
    %2102 = vmatprep.subr.bf16.mxu0 %v1410
    %2103 = vmatpush1.bf16.msra.mxu0 %v1409
    %2104 = vmatprep.subr.bf16.mxu0 %v1418
    %2105 = vmatpush1.bf16.msra.mxu0 %v1417
    %2106 = vmatprep.subr.bf16.mxu0 %v1426
    %2107 = vmatpush1.bf16.msra.mxu0 %v1425
    %2108 = vmatprep.subr.bf16.mxu0 %v1434
    %2109 = vmatpush1.bf16.msra.mxu0 %v1433
    %2110 = vmatprep.subr.bf16.mxu0 %v1442
    %2111 = vmatpush1.bf16.msra.mxu0 %v1441
    %2112 = vmatprep.subr.bf16.mxu0 %v1450
    %2113 = vmatpush1.bf16.msra.mxu0 %v1449
    %2114 = vmatprep.subr.bf16.mxu0 %v1458
    %2115 = vmatpush1.bf16.msra.mxu0 %v1457
    %2116 = vmatprep.subr.bf16.mxu0 %v1466
    %2117 = vmatpush1.bf16.msra.mxu0 %v1465
    %2118 = vmatprep.subr.bf16.mxu0 %v1474
    %2119 = vmatpush1.bf16.msra.mxu0 %v1473
    %2120 = vmatprep.subr.bf16.mxu0 %v1482
    %2121 = vmatpush1.bf16.msra.mxu0 %v1481
    %2122 = vmatprep.subr.bf16.mxu0 %v1490
    %2123 = vmatpush1.bf16.msra.mxu0 %v1489
    %2124 = vmatprep.mubr.bf16.mxu0 %v2091
    %2125 = vmatmul.mubr.bf16.gmra.mrb[0].mxu0 %v2090
    %v2126 = vpop.f32.mrb[0].mxu0
    %v2127 = vadd.f32 0.0, %v2126
    %v2128 = vpop.f32.mrb[0].mxu0
    %v2129 = vadd.f32 0.0, %v2128
    %v2130 = vpop.f32.mrb[0].mxu0
    %v2131 = vpop.f32.mrb[0].mxu0
    %2132 = vdwg.mxu0
    %2133 = vmatprep.subr.bf16.mxu0 %v1372
    %2134 = vmatpush1.bf16.msra.mxu0 %v1371
    %2135 = vmatprep.subr.bf16.mxu0 %v1380
    %2136 = vmatpush1.bf16.msra.mxu0 %v1379
    %2137 = vmatprep.subr.bf16.mxu0 %v1388
    %2138 = vmatpush1.bf16.msra.mxu0 %v1387
    %2139 = vmatprep.subr.bf16.mxu0 %v1396
    %2140 = vmatpush1.bf16.msra.mxu0 %v1395
    %2141 = vmatprep.subr.bf16.mxu0 %v1404
    %2142 = vmatpush1.bf16.msra.mxu0 %v1403
    %2143 = vmatprep.subr.bf16.mxu0 %v1412
    %2144 = vmatpush1.bf16.msra.mxu0 %v1411
    %2145 = vmatprep.subr.bf16.mxu0 %v1420
    %2146 = vmatpush1.bf16.msra.mxu0 %v1419
    %2147 = vmatprep.subr.bf16.mxu0 %v1428
    %2148 = vmatpush1.bf16.msra.mxu0 %v1427
    %2149 = vmatprep.subr.bf16.mxu0 %v1436
    %2150 = vmatpush1.bf16.msra.mxu0 %v1435
    %2151 = vmatprep.subr.bf16.mxu0 %v1444
    %2152 = vmatpush1.bf16.msra.mxu0 %v1443
    %2153 = vmatprep.subr.bf16.mxu0 %v1452
    %2154 = vmatpush1.bf16.msra.mxu0 %v1451
    %2155 = vmatprep.subr.bf16.mxu0 %v1460
    %2156 = vmatpush1.bf16.msra.mxu0 %v1459
    %2157 = vmatprep.subr.bf16.mxu0 %v1468
    %2158 = vmatpush1.bf16.msra.mxu0 %v1467
    %2159 = vmatprep.subr.bf16.mxu0 %v1476
    %2160 = vmatpush1.bf16.msra.mxu0 %v1475
    %2161 = vmatprep.subr.bf16.mxu0 %v1484
    %2162 = vmatpush1.bf16.msra.mxu0 %v1483
    %2163 = vmatprep.subr.bf16.mxu0 %v1492
    %2164 = vmatpush1.bf16.msra.mxu0 %v1491
    %2165 = vmatprep.mubr.bf16.mxu0 %v2091
    %2166 = vmatmul.mubr.bf16.gmra.mrb[0].mxu0 %v2090
    %v2167 = vpop.f32.mrb[0].mxu0
    %v2168 = vadd.f32 0.0, %v2167
    %v2169 = vpop.f32.mrb[0].mxu0
    %v2170 = vadd.f32 0.0, %v2169
    %v2171 = vpop.f32.mrb[0].mxu0
    %v2172 = vpop.f32.mrb[0].mxu0
    %2173 = vdwg.mxu0
    %2174 = vmatprep.subr.bf16.mxu0 %v1374
    %2175 = vmatpush1.bf16.msra.mxu0 %v1373
    %2176 = vmatprep.subr.bf16.mxu0 %v1382
    %2177 = vmatpush1.bf16.msra.mxu0 %v1381
    %2178 = vmatprep.subr.bf16.mxu0 %v1390
    %2179 = vmatpush1.bf16.msra.mxu0 %v1389
    %2180 = vmatprep.subr.bf16.mxu0 %v1398
    %2181 = vmatpush1.bf16.msra.mxu0 %v1397
    %2182 = vmatprep.subr.bf16.mxu0 %v1406
    %2183 = vmatpush1.bf16.msra.mxu0 %v1405
    %2184 = vmatprep.subr.bf16.mxu0 %v1414
    %2185 = vmatpush1.bf16.msra.mxu0 %v1413
    %2186 = vmatprep.subr.bf16.mxu0 %v1422
    %2187 = vmatpush1.bf16.msra.mxu0 %v1421
    %2188 = vmatprep.subr.bf16.mxu0 %v1430
    %2189 = vmatpush1.bf16.msra.mxu0 %v1429
    %2190 = vmatprep.subr.bf16.mxu0 %v1438
    %2191 = vmatpush1.bf16.msra.mxu0 %v1437
    %2192 = vmatprep.subr.bf16.mxu0 %v1446
    %2193 = vmatpush1.bf16.msra.mxu0 %v1445
    %2194 = vmatprep.subr.bf16.mxu0 %v1454
    %2195 = vmatpush1.bf16.msra.mxu0 %v1453
    %2196 = vmatprep.subr.bf16.mxu0 %v1462
    %2197 = vmatpush1.bf16.msra.mxu0 %v1461
    %2198 = vmatprep.subr.bf16.mxu0 %v1470
    %2199 = vmatpush1.bf16.msra.mxu0 %v1469
    %2200 = vmatprep.subr.bf16.mxu0 %v1478
    %2201 = vmatpush1.bf16.msra.mxu0 %v1477
    %2202 = vmatprep.subr.bf16.mxu0 %v1486
    %2203 = vmatpush1.bf16.msra.mxu0 %v1485
    %2204 = vmatprep.subr.bf16.mxu0 %v1494
    %2205 = vmatpush1.bf16.msra.mxu0 %v1493
    %2206 = vmatprep.mubr.bf16.mxu0 %v2091
    %2207 = vmatmul.mubr.bf16.gmra.mrb[0].mxu0 %v2090
    %v2208 = vpop.f32.mrb[0].mxu0
    %v2209 = vadd.f32 0.0, %v2208
    %v2210 = vpop.f32.mrb[0].mxu0
    %v2211 = vadd.f32 0.0, %v2210
    %v2212 = vpop.f32.mrb[0].mxu0
    %v2213 = vpop.f32.mrb[0].mxu0
    %2214 = vdwg.mxu0
    %2215 = vmatprep.subr.bf16.mxu0 %v1376
    %2216 = vmatpush1.bf16.msra.mxu0 %v1375
    %2217 = vmatprep.subr.bf16.mxu0 %v1384
    %2218 = vmatpush1.bf16.msra.mxu0 %v1383
    %2219 = vmatprep.subr.bf16.mxu0 %v1392
    %2220 = vmatpush1.bf16.msra.mxu0 %v1391
    %2221 = vmatprep.subr.bf16.mxu0 %v1400
    %2222 = vmatpush1.bf16.msra.mxu0 %v1399
    %2223 = vmatprep.subr.bf16.mxu0 %v1408
    %2224 = vmatpush1.bf16.msra.mxu0 %v1407
    %2225 = vmatprep.subr.bf16.mxu0 %v1416
    %2226 = vmatpush1.bf16.msra.mxu0 %v1415
    %2227 = vmatprep.subr.bf16.mxu0 %v1424
    %2228 = vmatpush1.bf16.msra.mxu0 %v1423
    %2229 = vmatprep.subr.bf16.mxu0 %v1432
    %2230 = vmatpush1.bf16.msra.mxu0 %v1431
    %2231 = vmatprep.subr.bf16.mxu0 %v1440
    %2232 = vmatpush1.bf16.msra.mxu0 %v1439
    %2233 = vmatprep.subr.bf16.mxu0 %v1448
    %2234 = vmatpush1.bf16.msra.mxu0 %v1447
    %2235 = vmatprep.subr.bf16.mxu0 %v1456
    %2236 = vmatpush1.bf16.msra.mxu0 %v1455
    %2237 = vmatprep.subr.bf16.mxu0 %v1464
    %2238 = vmatpush1.bf16.msra.mxu0 %v1463
    %2239 = vmatprep.subr.bf16.mxu0 %v1472
    %2240 = vmatpush1.bf16.msra.mxu0 %v1471
    %2241 = vmatprep.subr.bf16.mxu0 %v1480
    %2242 = vmatpush1.bf16.msra.mxu0 %v1479
    %2243 = vmatprep.subr.bf16.mxu0 %v1488
    %2244 = vmatpush1.bf16.msra.mxu0 %v1487
    %2245 = vmatprep.subr.bf16.mxu0 %v1496
    %2246 = vmatpush1.bf16.msra.mxu0 %v1495
    %2247 = vmatprep.mubr.bf16.mxu0 %v2091
    %2248 = vmatmul.mubr.bf16.gmra.mrb[0].mxu0 %v2090
    %v2249 = vpop.f32.mrb[0].mxu0
    %v2250 = vadd.f32 0.0, %v2249
    %v2251 = vpop.f32.mrb[0].mxu0
    %v2252 = vadd.f32 0.0, %v2251
    %v2253 = vpop.f32.mrb[0].mxu0
    %v2254 = vpop.f32.mrb[0].mxu0
    %2255 = vdwg.mxu0
    %v2256 = vld [vmem:[#allocation2 + $0x80] sm:$0xff]
    %v2257 = vld [vmem:[#allocation2 + $0x88] sm:$0xff]
    %v2258 = vld [vmem:[#allocation2 + $0x90] sm:$0xff]
    %v2259 = vld [vmem:[#allocation2 + $0x98] sm:$0xff]
    %v2260 = vld [vmem:[#allocation2 + $0x160] sm:$0xff]
    %v2261 = vld [vmem:[#allocation2 + $0x168] sm:$0xff]
    %v2262 = vld [vmem:[#allocation2 + $0x170] sm:$0xff]
    %v2263 = vld [vmem:[#allocation2 + $0x178] sm:$0xff]
    %v2264 = vadd.f32 %v2127, %v2256
    %v2265 = vadd.f32 %v2129, %v2257
    %v2266 = vadd.f32 %v2168, %v2258
    %v2267 = vadd.f32 %v2170, %v2259
    %v2268 = vxor.u32 %v2264, 2147483648
    %v2269 = vmul.f32 %v2268, 1.442695
    %v2270 = vpow.pop %v2269
    %v2271 = vadd.f32 %v2270, 1.0
    %v2272 = vrcp.pop %v2271
    %v2273 = vmul.f32 1.0, %v2272
    %v2274 = vxor.u32 %v2265, 2147483648
    %v2275 = vmul.f32 %v2274, 1.442695
    %v2276 = vpow.pop %v2275
    %v2277 = vadd.f32 %v2276, 1.0
    %v2278 = vrcp.pop %v2277
    %v2279 = vmul.f32 1.0, %v2278
    %v2280 = vtanh.pop %v2266
    %v2281 = vxor.u32 %v2267, 2147483648
    %v2282 = vmul.f32 %v2281, 1.442695
    %v2283 = vpow.pop %v2282
    %v2284 = vadd.f32 %v2283, 1.0
    %v2285 = vrcp.pop %v2284
    %v2286 = vmul.f32 1.0, %v2285
    %v2287 = vmul.f32 %v2279, %v2055
    %v2288 = vmul.f32 %v2273, %v2280
    %v2289 = vadd.f32 %v2287, %v2288
    %v2290 = vtanh.pop %v2289
    %v2291 = vmul.f32 %v2286, %v2290
    %v2292 = vadd.f32 %v2209, %v2260
    %v2293 = vadd.f32 %v2211, %v2261
    %v2294 = vadd.f32 %v2250, %v2262
    %v2295 = vadd.f32 %v2252, %v2263
    %v2296 = vxor.u32 %v2292, 2147483648
    %v2297 = vmul.f32 %v2296, 1.442695
    %v2298 = vpow.pop %v2297
    %v2299 = vadd.f32 %v2298, 1.0
    %v2300 = vrcp.pop %v2299
    %v2301 = vmul.f32 1.0, %v2300
    %v2302 = vxor.u32 %v2293, 2147483648
    %v2303 = vmul.f32 %v2302, 1.442695
    %v2304 = vpow.pop %v2303
    %v2305 = vadd.f32 %v2304, 1.0
    %v2306 = vrcp.pop %v2305
    %v2307 = vmul.f32 1.0, %v2306
    %v2308 = vtanh.pop %v2294
    %v2309 = vxor.u32 %v2295, 2147483648
    %v2310 = vmul.f32 %v2309, 1.442695
    %v2311 = vpow.pop %v2310
    %v2312 = vadd.f32 %v2311, 1.0
    %v2313 = vrcp.pop %v2312
    %v2314 = vmul.f32 1.0, %v2313
    %v2315 = vmul.f32 %v2307, %v2083
    %v2316 = vmul.f32 %v2301, %v2308
    %v2317 = vadd.f32 %v2315, %v2316
    %v2318 = vtanh.pop %v2317
    %v2319 = vmul.f32 %v2314, %v2318
    %s2320 = scalar_lea.vmem %s6, 32
    %2321 = vst [vmem:[%s2320] sm:$0xff] %v2291
    %s2322 = scalar_lea.vmem %s6, 80
    %2323 = vst [vmem:[%s2322 + $0x8] sm:$0xff] %v2319
    %v2324 = vpack.c.bf16 %v2291, %v2291
    %v2325 = vpack.c.bf16 %v2319, %v2319
    %2326 = vmatprep.subr.bf16.mxu0 %v1370
    %2327 = vmatpush1.bf16.msra.mxu0 %v1369
    %2328 = vmatprep.subr.bf16.mxu0 %v1378
    %2329 = vmatpush1.bf16.msra.mxu0 %v1377
    %2330 = vmatprep.subr.bf16.mxu0 %v1386
    %2331 = vmatpush1.bf16.msra.mxu0 %v1385
    %2332 = vmatprep.subr.bf16.mxu0 %v1394
    %2333 = vmatpush1.bf16.msra.mxu0 %v1393
    %2334 = vmatprep.subr.bf16.mxu0 %v1402
    %2335 = vmatpush1.bf16.msra.mxu0 %v1401
    %2336 = vmatprep.subr.bf16.mxu0 %v1410
    %2337 = vmatpush1.bf16.msra.mxu0 %v1409
    %2338 = vmatprep.subr.bf16.mxu0 %v1418
    %2339 = vmatpush1.bf16.msra.mxu0 %v1417
    %2340 = vmatprep.subr.bf16.mxu0 %v1426
    %2341 = vmatpush1.bf16.msra.mxu0 %v1425
    %2342 = vmatprep.subr.bf16.mxu0 %v1434
    %2343 = vmatpush1.bf16.msra.mxu0 %v1433
    %2344 = vmatprep.subr.bf16.mxu0 %v1442
    %2345 = vmatpush1.bf16.msra.mxu0 %v1441
    %2346 = vmatprep.subr.bf16.mxu0 %v1450
    %2347 = vmatpush1.bf16.msra.mxu0 %v1449
    %2348 = vmatprep.subr.bf16.mxu0 %v1458
    %2349 = vmatpush1.bf16.msra.mxu0 %v1457
    %2350 = vmatprep.subr.bf16.mxu0 %v1466
    %2351 = vmatpush1.bf16.msra.mxu0 %v1465
    %2352 = vmatprep.subr.bf16.mxu0 %v1474
    %2353 = vmatpush1.bf16.msra.mxu0 %v1473
    %2354 = vmatprep.subr.bf16.mxu0 %v1482
    %2355 = vmatpush1.bf16.msra.mxu0 %v1481
    %2356 = vmatprep.subr.bf16.mxu0 %v1490
    %2357 = vmatpush1.bf16.msra.mxu0 %v1489
    %2358 = vmatprep.mubr.bf16.mxu0 %v2325
    %2359 = vmatmul.mubr.bf16.gmra.mrb[0].mxu0 %v2324
    %v2360 = vpop.f32.mrb[0].mxu0
    %v2361 = vadd.f32 0.0, %v2360
    %v2362 = vpop.f32.mrb[0].mxu0
    %v2363 = vadd.f32 0.0, %v2362
    %v2364 = vpop.f32.mrb[0].mxu0
    %v2365 = vpop.f32.mrb[0].mxu0
    %2366 = vdwg.mxu0
    %2367 = vmatprep.subr.bf16.mxu0 %v1372
    %2368 = vmatpush1.bf16.msra.mxu0 %v1371
    %2369 = vmatprep.subr.bf16.mxu0 %v1380
    %2370 = vmatpush1.bf16.msra.mxu0 %v1379
    %2371 = vmatprep.subr.bf16.mxu0 %v1388
    %2372 = vmatpush1.bf16.msra.mxu0 %v1387
    %2373 = vmatprep.subr.bf16.mxu0 %v1396
    %2374 = vmatpush1.bf16.msra.mxu0 %v1395
    %2375 = vmatprep.subr.bf16.mxu0 %v1404
    %2376 = vmatpush1.bf16.msra.mxu0 %v1403
    %2377 = vmatprep.subr.bf16.mxu0 %v1412
    %2378 = vmatpush1.bf16.msra.mxu0 %v1411
    %2379 = vmatprep.subr.bf16.mxu0 %v1420
    %2380 = vmatpush1.bf16.msra.mxu0 %v1419
    %2381 = vmatprep.subr.bf16.mxu0 %v1428
    %2382 = vmatpush1.bf16.msra.mxu0 %v1427
    %2383 = vmatprep.subr.bf16.mxu0 %v1436
    %2384 = vmatpush1.bf16.msra.mxu0 %v1435
    %2385 = vmatprep.subr.bf16.mxu0 %v1444
    %2386 = vmatpush1.bf16.msra.mxu0 %v1443
    %2387 = vmatprep.subr.bf16.mxu0 %v1452
    %2388 = vmatpush1.bf16.msra.mxu0 %v1451
    %2389 = vmatprep.subr.bf16.mxu0 %v1460
    %2390 = vmatpush1.bf16.msra.mxu0 %v1459
    %2391 = vmatprep.subr.bf16.mxu0 %v1468
    %2392 = vmatpush1.bf16.msra.mxu0 %v1467
    %2393 = vmatprep.subr.bf16.mxu0 %v1476
    %2394 = vmatpush1.bf16.msra.mxu0 %v1475
    %2395 = vmatprep.subr.bf16.mxu0 %v1484
    %2396 = vmatpush1.bf16.msra.mxu0 %v1483
    %2397 = vmatprep.subr.bf16.mxu0 %v1492
    %2398 = vmatpush1.bf16.msra.mxu0 %v1491
    %2399 = vmatprep.mubr.bf16.mxu0 %v2325
    %2400 = vmatmul.mubr.bf16.gmra.mrb[0].mxu0 %v2324
    %v2401 = vpop.f32.mrb[0].mxu0
    %v2402 = vadd.f32 0.0, %v2401
    %v2403 = vpop.f32.mrb[0].mxu0
    %v2404 = vadd.f32 0.0, %v2403
    %v2405 = vpop.f32.mrb[0].mxu0
    %v2406 = vpop.f32.mrb[0].mxu0
    %2407 = vdwg.mxu0
    %2408 = vmatprep.subr.bf16.mxu0 %v1374
    %2409 = vmatpush1.bf16.msra.mxu0 %v1373
    %2410 = vmatprep.subr.bf16.mxu0 %v1382
    %2411 = vmatpush1.bf16.msra.mxu0 %v1381
    %2412 = vmatprep.subr.bf16.mxu0 %v1390
    %2413 = vmatpush1.bf16.msra.mxu0 %v1389
    %2414 = vmatprep.subr.bf16.mxu0 %v1398
    %2415 = vmatpush1.bf16.msra.mxu0 %v1397
    %2416 = vmatprep.subr.bf16.mxu0 %v1406
    %2417 = vmatpush1.bf16.msra.mxu0 %v1405
    %2418 = vmatprep.subr.bf16.mxu0 %v1414
    %2419 = vmatpush1.bf16.msra.mxu0 %v1413
    %2420 = vmatprep.subr.bf16.mxu0 %v1422
    %2421 = vmatpush1.bf16.msra.mxu0 %v1421
    %2422 = vmatprep.subr.bf16.mxu0 %v1430
    %2423 = vmatpush1.bf16.msra.mxu0 %v1429
    %2424 = vmatprep.subr.bf16.mxu0 %v1438
    %2425 = vmatpush1.bf16.msra.mxu0 %v1437
    %2426 = vmatprep.subr.bf16.mxu0 %v1446
    %2427 = vmatpush1.bf16.msra.mxu0 %v1445
    %2428 = vmatprep.subr.bf16.mxu0 %v1454
    %2429 = vmatpush1.bf16.msra.mxu0 %v1453
    %2430 = vmatprep.subr.bf16.mxu0 %v1462
    %2431 = vmatpush1.bf16.msra.mxu0 %v1461
    %2432 = vmatprep.subr.bf16.mxu0 %v1470
    %2433 = vmatpush1.bf16.msra.mxu0 %v1469
    %2434 = vmatprep.subr.bf16.mxu0 %v1478
    %2435 = vmatpush1.bf16.msra.mxu0 %v1477
    %2436 = vmatprep.subr.bf16.mxu0 %v1486
    %2437 = vmatpush1.bf16.msra.mxu0 %v1485
    %2438 = vmatprep.subr.bf16.mxu0 %v1494
    %2439 = vmatpush1.bf16.msra.mxu0 %v1493
    %2440 = vmatprep.mubr.bf16.mxu0 %v2325
    %2441 = vmatmul.mubr.bf16.gmra.mrb[0].mxu0 %v2324
    %v2442 = vpop.f32.mrb[0].mxu0
    %v2443 = vadd.f32 0.0, %v2442
    %v2444 = vpop.f32.mrb[0].mxu0
    %v2445 = vadd.f32 0.0, %v2444
    %v2446 = vpop.f32.mrb[0].mxu0
    %v2447 = vpop.f32.mrb[0].mxu0
    %2448 = vdwg.mxu0
    %2449 = vmatprep.subr.bf16.mxu0 %v1376
    %2450 = vmatpush1.bf16.msra.mxu0 %v1375
    %2451 = vmatprep.subr.bf16.mxu0 %v1384
    %2452 = vmatpush1.bf16.msra.mxu0 %v1383
    %2453 = vmatprep.subr.bf16.mxu0 %v1392
    %2454 = vmatpush1.bf16.msra.mxu0 %v1391
    %2455 = vmatprep.subr.bf16.mxu0 %v1400
    %2456 = vmatpush1.bf16.msra.mxu0 %v1399
    %2457 = vmatprep.subr.bf16.mxu0 %v1408
    %2458 = vmatpush1.bf16.msra.mxu0 %v1407
    %2459 = vmatprep.subr.bf16.mxu0 %v1416
    %2460 = vmatpush1.bf16.msra.mxu0 %v1415
    %2461 = vmatprep.subr.bf16.mxu0 %v1424
    %2462 = vmatpush1.bf16.msra.mxu0 %v1423
    %2463 = vmatprep.subr.bf16.mxu0 %v1432
    %2464 = vmatpush1.bf16.msra.mxu0 %v1431
    %2465 = vmatprep.subr.bf16.mxu0 %v1440
    %2466 = vmatpush1.bf16.msra.mxu0 %v1439
    %2467 = vmatprep.subr.bf16.mxu0 %v1448
    %2468 = vmatpush1.bf16.msra.mxu0 %v1447
    %2469 = vmatprep.subr.bf16.mxu0 %v1456
    %2470 = vmatpush1.bf16.msra.mxu0 %v1455
    %2471 = vmatprep.subr.bf16.mxu0 %v1464
    %2472 = vmatpush1.bf16.msra.mxu0 %v1463
    %2473 = vmatprep.subr.bf16.mxu0 %v1472
    %2474 = vmatpush1.bf16.msra.mxu0 %v1471
    %2475 = vmatprep.subr.bf16.mxu0 %v1480
    %2476 = vmatpush1.bf16.msra.mxu0 %v1479
    %2477 = vmatprep.subr.bf16.mxu0 %v1488
    %2478 = vmatpush1.bf16.msra.mxu0 %v1487
    %2479 = vmatprep.subr.bf16.mxu0 %v1496
    %2480 = vmatpush1.bf16.msra.mxu0 %v1495
    %2481 = vmatprep.mubr.bf16.mxu0 %v2325
    %2482 = vmatmul.mubr.bf16.gmra.mrb[0].mxu0 %v2324
    %v2483 = vpop.f32.mrb[0].mxu0
    %v2484 = vadd.f32 0.0, %v2483
    %v2485 = vpop.f32.mrb[0].mxu0
    %v2486 = vadd.f32 0.0, %v2485
    %v2487 = vpop.f32.mrb[0].mxu0
    %v2488 = vpop.f32.mrb[0].mxu0
    %2489 = vdwg.mxu0
    %v2490 = vld [vmem:[#allocation2 + $0xc0] sm:$0xff]
    %v2491 = vld [vmem:[#allocation2 + $0xc8] sm:$0xff]
    %v2492 = vld [vmem:[#allocation2 + $0xd0] sm:$0xff]
    %v2493 = vld [vmem:[#allocation2 + $0xd8] sm:$0xff]
    %v2494 = vld [vmem:[#allocation2 + $0x120] sm:$0xff]
    %v2495 = vld [vmem:[#allocation2 + $0x128] sm:$0xff]
    %v2496 = vld [vmem:[#allocation2 + $0x130] sm:$0xff]
    %v2497 = vld [vmem:[#allocation2 + $0x138] sm:$0xff]
    %v2498 = vadd.f32 %v2361, %v2490
    %v2499 = vadd.f32 %v2363, %v2491
    %v2500 = vadd.f32 %v2402, %v2492
    %v2501 = vadd.f32 %v2404, %v2493
    %v2502 = vxor.u32 %v2498, 2147483648
    %v2503 = vmul.f32 %v2502, 1.442695
    %v2504 = vpow.pop %v2503
    %v2505 = vadd.f32 %v2504, 1.0
    %v2506 = vrcp.pop %v2505
    %v2507 = vmul.f32 1.0, %v2506
    %v2508 = vxor.u32 %v2499, 2147483648
    %v2509 = vmul.f32 %v2508, 1.442695
    %v2510 = vpow.pop %v2509
    %v2511 = vadd.f32 %v2510, 1.0
    %v2512 = vrcp.pop %v2511
    %v2513 = vmul.f32 1.0, %v2512
    %v2514 = vtanh.pop %v2500
    %v2515 = vxor.u32 %v2501, 2147483648
    %v2516 = vmul.f32 %v2515, 1.442695
    %v2517 = vpow.pop %v2516
    %v2518 = vadd.f32 %v2517, 1.0
    %v2519 = vrcp.pop %v2518
    %v2520 = vmul.f32 1.0, %v2519
    %v2521 = vmul.f32 %v2513, %v2289
    %v2522 = vmul.f32 %v2507, %v2514
    %v2523 = vadd.f32 %v2521, %v2522
    %v2524 = vtanh.pop %v2523
    %v2525 = vmul.f32 %v2520, %v2524
    %v2526 = vadd.f32 %v2443, %v2494
    %v2527 = vadd.f32 %v2445, %v2495
    %v2528 = vadd.f32 %v2484, %v2496
    %v2529 = vadd.f32 %v2486, %v2497
    %v2530 = vxor.u32 %v2526, 2147483648
    %v2531 = vmul.f32 %v2530, 1.442695
    %v2532 = vpow.pop %v2531
    %v2533 = vadd.f32 %v2532, 1.0
    %v2534 = vrcp.pop %v2533
    %v2535 = vmul.f32 1.0, %v2534
    %v2536 = vxor.u32 %v2527, 2147483648
    %v2537 = vmul.f32 %v2536, 1.442695
    %v2538 = vpow.pop %v2537
    %v2539 = vadd.f32 %v2538, 1.0
    %v2540 = vrcp.pop %v2539
    %v2541 = vmul.f32 1.0, %v2540
    %v2542 = vtanh.pop %v2528
    %v2543 = vxor.u32 %v2529, 2147483648
    %v2544 = vmul.f32 %v2543, 1.442695
    %v2545 = vpow.pop %v2544
    %v2546 = vadd.f32 %v2545, 1.0
    %v2547 = vrcp.pop %v2546
    %v2548 = vmul.f32 1.0, %v2547
    %v2549 = vmul.f32 %v2541, %v2317
    %v2550 = vmul.f32 %v2535, %v2542
    %v2551 = vadd.f32 %v2549, %v2550
    %v2552 = vtanh.pop %v2551
    %v2553 = vmul.f32 %v2548, %v2552
    %s2554 = scalar_lea.vmem %s6, 48
    %2555 = vst [vmem:[%s2554] sm:$0xff] %v2525
    %s2556 = scalar_lea.vmem %s6, 64
    %2557 = vst [vmem:[%s2556 + $0x8] sm:$0xff] %v2553
    %v2558 = vpack.c.bf16 %v2525, %v2525
    %v2559 = vpack.c.bf16 %v2553, %v2553
    %2560 = vmatprep.subr.bf16.mxu0 %v1370
    %2561 = vmatpush1.bf16.msra.mxu0 %v1369
    %2562 = vmatprep.subr.bf16.mxu0 %v1378
    %2563 = vmatpush1.bf16.msra.mxu0 %v1377
    %2564 = vmatprep.subr.bf16.mxu0 %v1386
    %2565 = vmatpush1.bf16.msra.mxu0 %v1385
    %2566 = vmatprep.subr.bf16.mxu0 %v1394
    %2567 = vmatpush1.bf16.msra.mxu0 %v1393
    %2568 = vmatprep.subr.bf16.mxu0 %v1402
    %2569 = vmatpush1.bf16.msra.mxu0 %v1401
    %2570 = vmatprep.subr.bf16.mxu0 %v1410
    %2571 = vmatpush1.bf16.msra.mxu0 %v1409
    %2572 = vmatprep.subr.bf16.mxu0 %v1418
    %2573 = vmatpush1.bf16.msra.mxu0 %v1417
    %2574 = vmatprep.subr.bf16.mxu0 %v1426
    %2575 = vmatpush1.bf16.msra.mxu0 %v1425
    %2576 = vmatprep.subr.bf16.mxu0 %v1434
    %2577 = vmatpush1.bf16.msra.mxu0 %v1433
    %2578 = vmatprep.subr.bf16.mxu0 %v1442
    %2579 = vmatpush1.bf16.msra.mxu0 %v1441
    %2580 = vmatprep.subr.bf16.mxu0 %v1450
    %2581 = vmatpush1.bf16.msra.mxu0 %v1449
    %2582 = vmatprep.subr.bf16.mxu0 %v1458
    %2583 = vmatpush1.bf16.msra.mxu0 %v1457
    %2584 = vmatprep.subr.bf16.mxu0 %v1466
    %2585 = vmatpush1.bf16.msra.mxu0 %v1465
    %2586 = vmatprep.subr.bf16.mxu0 %v1474
    %2587 = vmatpush1.bf16.msra.mxu0 %v1473
    %2588 = vmatprep.subr.bf16.mxu0 %v1482
    %2589 = vmatpush1.bf16.msra.mxu0 %v1481
    %2590 = vmatprep.subr.bf16.mxu0 %v1490
    %2591 = vmatpush1.bf16.msra.mxu0 %v1489
    %2592 = vmatprep.mubr.bf16.mxu0 %v2559
    %2593 = vmatmul.mubr.bf16.gmra.mrb[0].mxu0 %v2558
    %v2594 = vpop.f32.mrb[0].mxu0
    %v2595 = vadd.f32 0.0, %v2594
    %v2596 = vpop.f32.mrb[0].mxu0
    %v2597 = vadd.f32 0.0, %v2596
    %v2598 = vpop.f32.mrb[0].mxu0
    %v2599 = vpop.f32.mrb[0].mxu0
    %2600 = vdwg.mxu0
    %2601 = vmatprep.subr.bf16.mxu0 %v1372
    %2602 = vmatpush1.bf16.msra.mxu0 %v1371
    %2603 = vmatprep.subr.bf16.mxu0 %v1380
    %2604 = vmatpush1.bf16.msra.mxu0 %v1379
    %2605 = vmatprep.subr.bf16.mxu0 %v1388
    %2606 = vmatpush1.bf16.msra.mxu0 %v1387
    %2607 = vmatprep.subr.bf16.mxu0 %v1396
    %2608 = vmatpush1.bf16.msra.mxu0 %v1395
    %2609 = vmatprep.subr.bf16.mxu0 %v1404
    %2610 = vmatpush1.bf16.msra.mxu0 %v1403
    %2611 = vmatprep.subr.bf16.mxu0 %v1412
    %2612 = vmatpush1.bf16.msra.mxu0 %v1411
    %2613 = vmatprep.subr.bf16.mxu0 %v1420
    %2614 = vmatpush1.bf16.msra.mxu0 %v1419
    %2615 = vmatprep.subr.bf16.mxu0 %v1428
    %2616 = vmatpush1.bf16.msra.mxu0 %v1427
    %2617 = vmatprep.subr.bf16.mxu0 %v1436
    %2618 = vmatpush1.bf16.msra.mxu0 %v1435
    %2619 = vmatprep.subr.bf16.mxu0 %v1444
    %2620 = vmatpush1.bf16.msra.mxu0 %v1443
    %2621 = vmatprep.subr.bf16.mxu0 %v1452
    %2622 = vmatpush1.bf16.msra.mxu0 %v1451
    %2623 = vmatprep.subr.bf16.mxu0 %v1460
    %2624 = vmatpush1.bf16.msra.mxu0 %v1459
    %2625 = vmatprep.subr.bf16.mxu0 %v1468
    %2626 = vmatpush1.bf16.msra.mxu0 %v1467
    %2627 = vmatprep.subr.bf16.mxu0 %v1476
    %2628 = vmatpush1.bf16.msra.mxu0 %v1475
    %2629 = vmatprep.subr.bf16.mxu0 %v1484
    %2630 = vmatpush1.bf16.msra.mxu0 %v1483
    %2631 = vmatprep.subr.bf16.mxu0 %v1492
    %2632 = vmatpush1.bf16.msra.mxu0 %v1491
    %2633 = vmatprep.mubr.bf16.mxu0 %v2559
    %2634 = vmatmul.mubr.bf16.gmra.mrb[0].mxu0 %v2558
    %v2635 = vpop.f32.mrb[0].mxu0
    %v2636 = vadd.f32 0.0, %v2635
    %v2637 = vpop.f32.mrb[0].mxu0
    %v2638 = vadd.f32 0.0, %v2637
    %v2639 = vpop.f32.mrb[0].mxu0
    %v2640 = vpop.f32.mrb[0].mxu0
    %2641 = vdwg.mxu0
    %2642 = vmatprep.subr.bf16.mxu0 %v1374
    %2643 = vmatpush1.bf16.msra.mxu0 %v1373
    %2644 = vmatprep.subr.bf16.mxu0 %v1382
    %2645 = vmatpush1.bf16.msra.mxu0 %v1381
    %2646 = vmatprep.subr.bf16.mxu0 %v1390
    %2647 = vmatpush1.bf16.msra.mxu0 %v1389
    %2648 = vmatprep.subr.bf16.mxu0 %v1398
    %2649 = vmatpush1.bf16.msra.mxu0 %v1397
    %2650 = vmatprep.subr.bf16.mxu0 %v1406
    %2651 = vmatpush1.bf16.msra.mxu0 %v1405
    %2652 = vmatprep.subr.bf16.mxu0 %v1414
    %2653 = vmatpush1.bf16.msra.mxu0 %v1413
    %2654 = vmatprep.subr.bf16.mxu0 %v1422
    %2655 = vmatpush1.bf16.msra.mxu0 %v1421
    %2656 = vmatprep.subr.bf16.mxu0 %v1430
    %2657 = vmatpush1.bf16.msra.mxu0 %v1429
    %2658 = vmatprep.subr.bf16.mxu0 %v1438
    %2659 = vmatpush1.bf16.msra.mxu0 %v1437
    %2660 = vmatprep.subr.bf16.mxu0 %v1446
    %2661 = vmatpush1.bf16.msra.mxu0 %v1445
    %2662 = vmatprep.subr.bf16.mxu0 %v1454
    %2663 = vmatpush1.bf16.msra.mxu0 %v1453
    %2664 = vmatprep.subr.bf16.mxu0 %v1462
    %2665 = vmatpush1.bf16.msra.mxu0 %v1461
    %2666 = vmatprep.subr.bf16.mxu0 %v1470
    %2667 = vmatpush1.bf16.msra.mxu0 %v1469
    %2668 = vmatprep.subr.bf16.mxu0 %v1478
    %2669 = vmatpush1.bf16.msra.mxu0 %v1477
    %2670 = vmatprep.subr.bf16.mxu0 %v1486
    %2671 = vmatpush1.bf16.msra.mxu0 %v1485
    %2672 = vmatprep.subr.bf16.mxu0 %v1494
    %2673 = vmatpush1.bf16.msra.mxu0 %v1493
    %2674 = vmatprep.mubr.bf16.mxu0 %v2559
    %2675 = vmatmul.mubr.bf16.gmra.mrb[0].mxu0 %v2558
    %v2676 = vpop.f32.mrb[0].mxu0
    %v2677 = vadd.f32 0.0, %v2676
    %v2678 = vpop.f32.mrb[0].mxu0
    %v2679 = vadd.f32 0.0, %v2678
    %v2680 = vpop.f32.mrb[0].mxu0
    %v2681 = vpop.f32.mrb[0].mxu0
    %2682 = vdwg.mxu0
    %2683 = vmatprep.subr.bf16.mxu0 %v1376
    %2684 = vmatpush1.bf16.msra.mxu0 %v1375
    %2685 = vmatprep.subr.bf16.mxu0 %v1384
    %2686 = vmatpush1.bf16.msra.mxu0 %v1383
    %2687 = vmatprep.subr.bf16.mxu0 %v1392
    %2688 = vmatpush1.bf16.msra.mxu0 %v1391
    %2689 = vmatprep.subr.bf16.mxu0 %v1400
    %2690 = vmatpush1.bf16.msra.mxu0 %v1399
    %2691 = vmatprep.subr.bf16.mxu0 %v1408
    %2692 = vmatpush1.bf16.msra.mxu0 %v1407
    %2693 = vmatprep.subr.bf16.mxu0 %v1416
    %2694 = vmatpush1.bf16.msra.mxu0 %v1415
    %2695 = vmatprep.subr.bf16.mxu0 %v1424
    %2696 = vmatpush1.bf16.msra.mxu0 %v1423
    %2697 = vmatprep.subr.bf16.mxu0 %v1432
    %2698 = vmatpush1.bf16.msra.mxu0 %v1431
    %2699 = vmatprep.subr.bf16.mxu0 %v1440
    %2700 = vmatpush1.bf16.msra.mxu0 %v1439
    %2701 = vmatprep.subr.bf16.mxu0 %v1448
    %2702 = vmatpush1.bf16.msra.mxu0 %v1447
    %2703 = vmatprep.subr.bf16.mxu0 %v1456
    %2704 = vmatpush1.bf16.msra.mxu0 %v1455
    %2705 = vmatprep.subr.bf16.mxu0 %v1464
    %2706 = vmatpush1.bf16.msra.mxu0 %v1463
    %2707 = vmatprep.subr.bf16.mxu0 %v1472
    %2708 = vmatpush1.bf16.msra.mxu0 %v1471
    %2709 = vmatprep.subr.bf16.mxu0 %v1480
    %2710 = vmatpush1.bf16.msra.mxu0 %v1479
    %2711 = vmatprep.subr.bf16.mxu0 %v1488
    %2712 = vmatpush1.bf16.msra.mxu0 %v1487
    %2713 = vmatprep.subr.bf16.mxu0 %v1496
    %2714 = vmatpush1.bf16.msra.mxu0 %v1495
    %2715 = vmatprep.mubr.bf16.mxu0 %v2559
    %2716 = vmatmul.mubr.bf16.gmra.mrb[0].mxu0 %v2558
    %v2717 = vpop.f32.mrb[0].mxu0
    %v2718 = vadd.f32 0.0, %v2717
    %v2719 = vpop.f32.mrb[0].mxu0
    %v2720 = vadd.f32 0.0, %v2719
    %v2721 = vpop.f32.mrb[0].mxu0
    %v2722 = vpop.f32.mrb[0].mxu0
    %2723 = vdwg.mxu0
    %v2724 = vld [vmem:[#allocation2 + $0x100] sm:$0xff]
    %v2725 = vld [vmem:[#allocation2 + $0x108] sm:$0xff]
    %v2726 = vld [vmem:[#allocation2 + $0x110] sm:$0xff]
    %v2727 = vld [vmem:[#allocation2 + $0x118] sm:$0xff]
    %v2728 = vld [vmem:[#allocation2 + $0xe0] sm:$0xff]
    %v2729 = vld [vmem:[#allocation2 + $0xe8] sm:$0xff]
    %v2730 = vld [vmem:[#allocation2 + $0xf0] sm:$0xff]
    %v2731 = vld [vmem:[#allocation2 + $0xf8] sm:$0xff]
    %v2732 = vadd.f32 %v2595, %v2724
    %v2733 = vadd.f32 %v2597, %v2725
    %v2734 = vadd.f32 %v2636, %v2726
    %v2735 = vadd.f32 %v2638, %v2727
    %v2736 = vxor.u32 %v2732, 2147483648
    %v2737 = vmul.f32 %v2736, 1.442695
    %v2738 = vpow.pop %v2737
    %v2739 = vadd.f32 %v2738, 1.0
    %v2740 = vrcp.pop %v2739
    %v2741 = vmul.f32 1.0, %v2740
    %v2742 = vxor.u32 %v2733, 2147483648
    %v2743 = vmul.f32 %v2742, 1.442695
    %v2744 = vpow.pop %v2743
    %v2745 = vadd.f32 %v2744, 1.0
    %v2746 = vrcp.pop %v2745
    %v2747 = vmul.f32 1.0, %v2746
    %v2748 = vtanh.pop %v2734
    %v2749 = vxor.u32 %v2735, 2147483648
    %v2750 = vmul.f32 %v2749, 1.442695
    %v2751 = vpow.pop %v2750
    %v2752 = vadd.f32 %v2751, 1.0
    %v2753 = vrcp.pop %v2752
    %v2754 = vmul.f32 1.0, %v2753
    %v2755 = vmul.f32 %v2747, %v2523
    %v2756 = vmul.f32 %v2741, %v2748
    %v2757 = vadd.f32 %v2755, %v2756
    %v2758 = vtanh.pop %v2757
    %v2759 = vmul.f32 %v2754, %v2758
    %v2760 = vadd.f32 %v2677, %v2728
    %v2761 = vadd.f32 %v2679, %v2729
    %v2762 = vadd.f32 %v2718, %v2730
    %v2763 = vadd.f32 %v2720, %v2731
    %v2764 = vxor.u32 %v2760, 2147483648
    %v2765 = vmul.f32 %v2764, 1.442695
    %v2766 = vpow.pop %v2765
    %v2767 = vadd.f32 %v2766, 1.0
    %v2768 = vrcp.pop %v2767
    %v2769 = vmul.f32 1.0, %v2768
    %v2770 = vxor.u32 %v2761, 2147483648
    %v2771 = vmul.f32 %v2770, 1.442695
    %v2772 = vpow.pop %v2771
    %v2773 = vadd.f32 %v2772, 1.0
    %v2774 = vrcp.pop %v2773
    %v2775 = vmul.f32 1.0, %v2774
    %v2776 = vtanh.pop %v2762
    %v2777 = vxor.u32 %v2763, 2147483648
    %v2778 = vmul.f32 %v2777, 1.442695
    %v2779 = vpow.pop %v2778
    %v2780 = vadd.f32 %v2779, 1.0
    %v2781 = vrcp.pop %v2780
    %v2782 = vmul.f32 1.0, %v2781
    %v2783 = vmul.f32 %v2775, %v2551
    %v2784 = vmul.f32 %v2769, %v2776
    %v2785 = vadd.f32 %v2783, %v2784
    %v2786 = vtanh.pop %v2785
    %v2787 = vmul.f32 %v2782, %v2786
    %2788 = vst [vmem:[%s2556] sm:$0xff] %v2759
    %2789 = vst [vmem:[%s2554 + $0x8] sm:$0xff] %v2787
    %v2790 = vpack.c.bf16 %v2759, %v2759
    %v2791 = vpack.c.bf16 %v2787, %v2787
    %2792 = vmatprep.subr.bf16.mxu0 %v1370
    %2793 = vmatpush1.bf16.msra.mxu0 %v1369
    %2794 = vmatprep.subr.bf16.mxu0 %v1378
    %2795 = vmatpush1.bf16.msra.mxu0 %v1377
    %2796 = vmatprep.subr.bf16.mxu0 %v1386
    %2797 = vmatpush1.bf16.msra.mxu0 %v1385
    %2798 = vmatprep.subr.bf16.mxu0 %v1394
    %2799 = vmatpush1.bf16.msra.mxu0 %v1393
    %2800 = vmatprep.subr.bf16.mxu0 %v1402
    %2801 = vmatpush1.bf16.msra.mxu0 %v1401
    %2802 = vmatprep.subr.bf16.mxu0 %v1410
    %2803 = vmatpush1.bf16.msra.mxu0 %v1409
    %2804 = vmatprep.subr.bf16.mxu0 %v1418
    %2805 = vmatpush1.bf16.msra.mxu0 %v1417
    %2806 = vmatprep.subr.bf16.mxu0 %v1426
    %2807 = vmatpush1.bf16.msra.mxu0 %v1425
    %2808 = vmatprep.subr.bf16.mxu0 %v1434
    %2809 = vmatpush1.bf16.msra.mxu0 %v1433
    %2810 = vmatprep.subr.bf16.mxu0 %v1442
    %2811 = vmatpush1.bf16.msra.mxu0 %v1441
    %2812 = vmatprep.subr.bf16.mxu0 %v1450
    %2813 = vmatpush1.bf16.msra.mxu0 %v1449
    %2814 = vmatprep.subr.bf16.mxu0 %v1458
    %2815 = vmatpush1.bf16.msra.mxu0 %v1457
    %2816 = vmatprep.subr.bf16.mxu0 %v1466
    %2817 = vmatpush1.bf16.msra.mxu0 %v1465
    %2818 = vmatprep.subr.bf16.mxu0 %v1474
    %2819 = vmatpush1.bf16.msra.mxu0 %v1473
    %2820 = vmatprep.subr.bf16.mxu0 %v1482
    %2821 = vmatpush1.bf16.msra.mxu0 %v1481
    %2822 = vmatprep.subr.bf16.mxu0 %v1490
    %2823 = vmatpush1.bf16.msra.mxu0 %v1489
    %2824 = vmatprep.mubr.bf16.mxu0 %v2791
    %2825 = vmatmul.mubr.bf16.gmra.mrb[0].mxu0 %v2790
    %v2826 = vpop.f32.mrb[0].mxu0
    %v2827 = vadd.f32 0.0, %v2826
    %v2828 = vpop.f32.mrb[0].mxu0
    %v2829 = vadd.f32 0.0, %v2828
    %v2830 = vpop.f32.mrb[0].mxu0
    %v2831 = vpop.f32.mrb[0].mxu0
    %2832 = vdwg.mxu0
    %2833 = vmatprep.subr.bf16.mxu0 %v1372
    %2834 = vmatpush1.bf16.msra.mxu0 %v1371
    %2835 = vmatprep.subr.bf16.mxu0 %v1380
    %2836 = vmatpush1.bf16.msra.mxu0 %v1379
    %2837 = vmatprep.subr.bf16.mxu0 %v1388
    %2838 = vmatpush1.bf16.msra.mxu0 %v1387
    %2839 = vmatprep.subr.bf16.mxu0 %v1396
    %2840 = vmatpush1.bf16.msra.mxu0 %v1395
    %2841 = vmatprep.subr.bf16.mxu0 %v1404
    %2842 = vmatpush1.bf16.msra.mxu0 %v1403
    %2843 = vmatprep.subr.bf16.mxu0 %v1412
    %2844 = vmatpush1.bf16.msra.mxu0 %v1411
    %2845 = vmatprep.subr.bf16.mxu0 %v1420
    %2846 = vmatpush1.bf16.msra.mxu0 %v1419
    %2847 = vmatprep.subr.bf16.mxu0 %v1428
    %2848 = vmatpush1.bf16.msra.mxu0 %v1427
    %2849 = vmatprep.subr.bf16.mxu0 %v1436
    %2850 = vmatpush1.bf16.msra.mxu0 %v1435
    %2851 = vmatprep.subr.bf16.mxu0 %v1444
    %2852 = vmatpush1.bf16.msra.mxu0 %v1443
    %2853 = vmatprep.subr.bf16.mxu0 %v1452
    %2854 = vmatpush1.bf16.msra.mxu0 %v1451
    %2855 = vmatprep.subr.bf16.mxu0 %v1460
    %2856 = vmatpush1.bf16.msra.mxu0 %v1459
    %2857 = vmatprep.subr.bf16.mxu0 %v1468
    %2858 = vmatpush1.bf16.msra.mxu0 %v1467
    %2859 = vmatprep.subr.bf16.mxu0 %v1476
    %2860 = vmatpush1.bf16.msra.mxu0 %v1475
    %2861 = vmatprep.subr.bf16.mxu0 %v1484
    %2862 = vmatpush1.bf16.msra.mxu0 %v1483
    %2863 = vmatprep.subr.bf16.mxu0 %v1492
    %2864 = vmatpush1.bf16.msra.mxu0 %v1491
    %2865 = vmatprep.mubr.bf16.mxu0 %v2791
    %2866 = vmatmul.mubr.bf16.gmra.mrb[0].mxu0 %v2790
    %v2867 = vpop.f32.mrb[0].mxu0
    %v2868 = vadd.f32 0.0, %v2867
    %v2869 = vpop.f32.mrb[0].mxu0
    %v2870 = vadd.f32 0.0, %v2869
    %v2871 = vpop.f32.mrb[0].mxu0
    %v2872 = vpop.f32.mrb[0].mxu0
    %2873 = vdwg.mxu0
    %2874 = vmatprep.subr.bf16.mxu0 %v1374
    %2875 = vmatpush1.bf16.msra.mxu0 %v1373
    %2876 = vmatprep.subr.bf16.mxu0 %v1382
    %2877 = vmatpush1.bf16.msra.mxu0 %v1381
    %2878 = vmatprep.subr.bf16.mxu0 %v1390
    %2879 = vmatpush1.bf16.msra.mxu0 %v1389
    %2880 = vmatprep.subr.bf16.mxu0 %v1398
    %2881 = vmatpush1.bf16.msra.mxu0 %v1397
    %2882 = vmatprep.subr.bf16.mxu0 %v1406
    %2883 = vmatpush1.bf16.msra.mxu0 %v1405
    %2884 = vmatprep.subr.bf16.mxu0 %v1414
    %2885 = vmatpush1.bf16.msra.mxu0 %v1413
    %2886 = vmatprep.subr.bf16.mxu0 %v1422
    %2887 = vmatpush1.bf16.msra.mxu0 %v1421
    %2888 = vmatprep.subr.bf16.mxu0 %v1430
    %2889 = vmatpush1.bf16.msra.mxu0 %v1429
    %2890 = vmatprep.subr.bf16.mxu0 %v1438
    %2891 = vmatpush1.bf16.msra.mxu0 %v1437
    %2892 = vmatprep.subr.bf16.mxu0 %v1446
    %2893 = vmatpush1.bf16.msra.mxu0 %v1445
    %2894 = vmatprep.subr.bf16.mxu0 %v1454
    %2895 = vmatpush1.bf16.msra.mxu0 %v1453
    %2896 = vmatprep.subr.bf16.mxu0 %v1462
    %2897 = vmatpush1.bf16.msra.mxu0 %v1461
    %2898 = vmatprep.subr.bf16.mxu0 %v1470
    %2899 = vmatpush1.bf16.msra.mxu0 %v1469
    %2900 = vmatprep.subr.bf16.mxu0 %v1478
    %2901 = vmatpush1.bf16.msra.mxu0 %v1477
    %2902 = vmatprep.subr.bf16.mxu0 %v1486
    %2903 = vmatpush1.bf16.msra.mxu0 %v1485
    %2904 = vmatprep.subr.bf16.mxu0 %v1494
    %2905 = vmatpush1.bf16.msra.mxu0 %v1493
    %2906 = vmatprep.mubr.bf16.mxu0 %v2791
    %2907 = vmatmul.mubr.bf16.gmra.mrb[0].mxu0 %v2790
    %v2908 = vpop.f32.mrb[0].mxu0
    %v2909 = vadd.f32 0.0, %v2908
    %v2910 = vpop.f32.mrb[0].mxu0
    %v2911 = vadd.f32 0.0, %v2910
    %v2912 = vpop.f32.mrb[0].mxu0
    %v2913 = vpop.f32.mrb[0].mxu0
    %2914 = vdwg.mxu0
    %2915 = vmatprep.subr.bf16.mxu0 %v1376
    %2916 = vmatpush1.bf16.msra.mxu0 %v1375
    %2917 = vmatprep.subr.bf16.mxu0 %v1384
    %2918 = vmatpush1.bf16.msra.mxu0 %v1383
    %2919 = vmatprep.subr.bf16.mxu0 %v1392
    %2920 = vmatpush1.bf16.msra.mxu0 %v1391
    %2921 = vmatprep.subr.bf16.mxu0 %v1400
    %2922 = vmatpush1.bf16.msra.mxu0 %v1399
    %2923 = vmatprep.subr.bf16.mxu0 %v1408
    %2924 = vmatpush1.bf16.msra.mxu0 %v1407
    %2925 = vmatprep.subr.bf16.mxu0 %v1416
    %2926 = vmatpush1.bf16.msra.mxu0 %v1415
    %2927 = vmatprep.subr.bf16.mxu0 %v1424
    %2928 = vmatpush1.bf16.msra.mxu0 %v1423
    %2929 = vmatprep.subr.bf16.mxu0 %v1432
    %2930 = vmatpush1.bf16.msra.mxu0 %v1431
    %2931 = vmatprep.subr.bf16.mxu0 %v1440
    %2932 = vmatpush1.bf16.msra.mxu0 %v1439
    %2933 = vmatprep.subr.bf16.mxu0 %v1448
    %2934 = vmatpush1.bf16.msra.mxu0 %v1447
    %2935 = vmatprep.subr.bf16.mxu0 %v1456
    %2936 = vmatpush1.bf16.msra.mxu0 %v1455
    %2937 = vmatprep.subr.bf16.mxu0 %v1464
    %2938 = vmatpush1.bf16.msra.mxu0 %v1463
    %2939 = vmatprep.subr.bf16.mxu0 %v1472
    %2940 = vmatpush1.bf16.msra.mxu0 %v1471
    %2941 = vmatprep.subr.bf16.mxu0 %v1480
    %2942 = vmatpush1.bf16.msra.mxu0 %v1479
    %2943 = vmatprep.subr.bf16.mxu0 %v1488
    %2944 = vmatpush1.bf16.msra.mxu0 %v1487
    %2945 = vmatprep.subr.bf16.mxu0 %v1496
    %2946 = vmatpush1.bf16.msra.mxu0 %v1495
    %2947 = vmatprep.mubr.bf16.mxu0 %v2791
    %2948 = vmatmul.mubr.bf16.gmra.mrb[0].mxu0 %v2790
    %v2949 = vpop.f32.mrb[0].mxu0
    %v2950 = vadd.f32 0.0, %v2949
    %v2951 = vpop.f32.mrb[0].mxu0
    %v2952 = vadd.f32 0.0, %v2951
    %v2953 = vpop.f32.mrb[0].mxu0
    %v2954 = vpop.f32.mrb[0].mxu0
    %2955 = vdwg.mxu0
    %v2956 = vld [vmem:[#allocation2 + $0x140] sm:$0xff]
    %v2957 = vld [vmem:[#allocation2 + $0x148] sm:$0xff]
    %v2958 = vld [vmem:[#allocation2 + $0x150] sm:$0xff]
    %v2959 = vld [vmem:[#allocation2 + $0x158] sm:$0xff]
    %v2960 = vld [vmem:[#allocation2 + $0xa0] sm:$0xff]
    %v2961 = vld [vmem:[#allocation2 + $0xa8] sm:$0xff]
    %v2962 = vld [vmem:[#allocation2 + $0xb0] sm:$0xff]
    %v2963 = vld [vmem:[#allocation2 + $0xb8] sm:$0xff]
    %v2964 = vadd.f32 %v2827, %v2956
    %v2965 = vadd.f32 %v2829, %v2957
    %v2966 = vadd.f32 %v2868, %v2958
    %v2967 = vadd.f32 %v2870, %v2959
    %v2968 = vxor.u32 %v2964, 2147483648
    %v2969 = vmul.f32 %v2968, 1.442695
    %v2970 = vpow.pop %v2969
    %v2971 = vadd.f32 %v2970, 1.0
    %v2972 = vrcp.pop %v2971
    %v2973 = vmul.f32 1.0, %v2972
    %v2974 = vxor.u32 %v2965, 2147483648
    %v2975 = vmul.f32 %v2974, 1.442695
    %v2976 = vpow.pop %v2975
    %v2977 = vadd.f32 %v2976, 1.0
    %v2978 = vrcp.pop %v2977
    %v2979 = vmul.f32 1.0, %v2978
    %v2980 = vtanh.pop %v2966
    %v2981 = vxor.u32 %v2967, 2147483648
    %v2982 = vmul.f32 %v2981, 1.442695
    %v2983 = vpow.pop %v2982
    %v2984 = vadd.f32 %v2983, 1.0
    %v2985 = vrcp.pop %v2984
    %v2986 = vmul.f32 1.0, %v2985
    %v2987 = vmul.f32 %v2979, %v2757
    %v2988 = vmul.f32 %v2973, %v2980
    %v2989 = vadd.f32 %v2987, %v2988
    %v2990 = vtanh.pop %v2989
    %v2991 = vmul.f32 %v2986, %v2990
    %v2992 = vadd.f32 %v2909, %v2960
    %v2993 = vadd.f32 %v2911, %v2961
    %v2994 = vadd.f32 %v2950, %v2962
    %v2995 = vadd.f32 %v2952, %v2963
    %v2996 = vxor.u32 %v2992, 2147483648
    %v2997 = vmul.f32 %v2996, 1.442695
    %v2998 = vpow.pop %v2997
    %v2999 = vadd.f32 %v2998, 1.0
    %v3000 = vrcp.pop %v2999
    %v3001 = vmul.f32 1.0, %v3000
    %v3002 = vxor.u32 %v2993, 2147483648
    %v3003 = vmul.f32 %v3002, 1.442695
    %v3004 = vpow.pop %v3003
    %v3005 = vadd.f32 %v3004, 1.0
    %v3006 = vrcp.pop %v3005
    %v3007 = vmul.f32 1.0, %v3006
    %v3008 = vtanh.pop %v2994
    %v3009 = vxor.u32 %v2995, 2147483648
    %v3010 = vmul.f32 %v3009, 1.442695
    %v3011 = vpow.pop %v3010
    %v3012 = vadd.f32 %v3011, 1.0
    %v3013 = vrcp.pop %v3012
    %v3014 = vmul.f32 1.0, %v3013
    %v3015 = vmul.f32 %v3007, %v2785
    %v3016 = vmul.f32 %v3001, %v3008
    %v3017 = vadd.f32 %v3015, %v3016
    %v3018 = vtanh.pop %v3017
    %v3019 = vmul.f32 %v3014, %v3018
    %3020 = vst [vmem:[%s2322] sm:$0xff] %v2991
    %3021 = vst [vmem:[%s2320 + $0x8] sm:$0xff] %v3019
    %v3022 = vpack.c.bf16 %v2991, %v2991
    %v3023 = vpack.c.bf16 %v3019, %v3019
    %3024 = vmatprep.subr.bf16.mxu0 %v1370
    %3025 = vmatpush1.bf16.msra.mxu0 %v1369
    %3026 = vmatprep.subr.bf16.mxu0 %v1378
    %3027 = vmatpush1.bf16.msra.mxu0 %v1377
    %3028 = vmatprep.subr.bf16.mxu0 %v1386
    %3029 = vmatpush1.bf16.msra.mxu0 %v1385
    %3030 = vmatprep.subr.bf16.mxu0 %v1394
    %3031 = vmatpush1.bf16.msra.mxu0 %v1393
    %3032 = vmatprep.subr.bf16.mxu0 %v1402
    %3033 = vmatpush1.bf16.msra.mxu0 %v1401
    %3034 = vmatprep.subr.bf16.mxu0 %v1410
    %3035 = vmatpush1.bf16.msra.mxu0 %v1409
    %3036 = vmatprep.subr.bf16.mxu0 %v1418
    %3037 = vmatpush1.bf16.msra.mxu0 %v1417
    %3038 = vmatprep.subr.bf16.mxu0 %v1426
    %3039 = vmatpush1.bf16.msra.mxu0 %v1425
    %3040 = vmatprep.subr.bf16.mxu0 %v1434
    %3041 = vmatpush1.bf16.msra.mxu0 %v1433
    %3042 = vmatprep.subr.bf16.mxu0 %v1442
    %3043 = vmatpush1.bf16.msra.mxu0 %v1441
    %3044 = vmatprep.subr.bf16.mxu0 %v1450
    %3045 = vmatpush1.bf16.msra.mxu0 %v1449
    %3046 = vmatprep.subr.bf16.mxu0 %v1458
    %3047 = vmatpush1.bf16.msra.mxu0 %v1457
    %3048 = vmatprep.subr.bf16.mxu0 %v1466
    %3049 = vmatpush1.bf16.msra.mxu0 %v1465
    %3050 = vmatprep.subr.bf16.mxu0 %v1474
    %3051 = vmatpush1.bf16.msra.mxu0 %v1473
    %3052 = vmatprep.subr.bf16.mxu0 %v1482
    %3053 = vmatpush1.bf16.msra.mxu0 %v1481
    %3054 = vmatprep.subr.bf16.mxu0 %v1490
    %3055 = vmatpush1.bf16.msra.mxu0 %v1489
    %3056 = vmatprep.mubr.bf16.mxu0 %v3023
    %3057 = vmatmul.mubr.bf16.gmra.mrb[0].mxu0 %v3022
    %v3058 = vpop.f32.mrb[0].mxu0
    %v3059 = vadd.f32 0.0, %v3058
    %v3060 = vpop.f32.mrb[0].mxu0
    %v3061 = vadd.f32 0.0, %v3060
    %v3062 = vpop.f32.mrb[0].mxu0
    %v3063 = vpop.f32.mrb[0].mxu0
    %3064 = vdwg.mxu0
    %3065 = vmatprep.subr.bf16.mxu0 %v1372
    %3066 = vmatpush1.bf16.msra.mxu0 %v1371
    %3067 = vmatprep.subr.bf16.mxu0 %v1380
    %3068 = vmatpush1.bf16.msra.mxu0 %v1379
    %3069 = vmatprep.subr.bf16.mxu0 %v1388
    %3070 = vmatpush1.bf16.msra.mxu0 %v1387
    %3071 = vmatprep.subr.bf16.mxu0 %v1396
    %3072 = vmatpush1.bf16.msra.mxu0 %v1395
    %3073 = vmatprep.subr.bf16.mxu0 %v1404
    %3074 = vmatpush1.bf16.msra.mxu0 %v1403
    %3075 = vmatprep.subr.bf16.mxu0 %v1412
    %3076 = vmatpush1.bf16.msra.mxu0 %v1411
    %3077 = vmatprep.subr.bf16.mxu0 %v1420
    %3078 = vmatpush1.bf16.msra.mxu0 %v1419
    %3079 = vmatprep.subr.bf16.mxu0 %v1428
    %3080 = vmatpush1.bf16.msra.mxu0 %v1427
    %3081 = vmatprep.subr.bf16.mxu0 %v1436
    %3082 = vmatpush1.bf16.msra.mxu0 %v1435
    %3083 = vmatprep.subr.bf16.mxu0 %v1444
    %3084 = vmatpush1.bf16.msra.mxu0 %v1443
    %3085 = vmatprep.subr.bf16.mxu0 %v1452
    %3086 = vmatpush1.bf16.msra.mxu0 %v1451
    %3087 = vmatprep.subr.bf16.mxu0 %v1460
    %3088 = vmatpush1.bf16.msra.mxu0 %v1459
    %3089 = vmatprep.subr.bf16.mxu0 %v1468
    %3090 = vmatpush1.bf16.msra.mxu0 %v1467
    %3091 = vmatprep.subr.bf16.mxu0 %v1476
    %3092 = vmatpush1.bf16.msra.mxu0 %v1475
    %3093 = vmatprep.subr.bf16.mxu0 %v1484
    %3094 = vmatpush1.bf16.msra.mxu0 %v1483
    %3095 = vmatprep.subr.bf16.mxu0 %v1492
    %3096 = vmatpush1.bf16.msra.mxu0 %v1491
    %3097 = vmatprep.mubr.bf16.mxu0 %v3023
    %3098 = vmatmul.mubr.bf16.gmra.mrb[0].mxu0 %v3022
    %v3099 = vpop.f32.mrb[0].mxu0
    %v3100 = vadd.f32 0.0, %v3099
    %v3101 = vpop.f32.mrb[0].mxu0
    %v3102 = vadd.f32 0.0, %v3101
    %v3103 = vpop.f32.mrb[0].mxu0
    %v3104 = vpop.f32.mrb[0].mxu0
    %3105 = vdwg.mxu0
    %3106 = vmatprep.subr.bf16.mxu0 %v1374
    %3107 = vmatpush1.bf16.msra.mxu0 %v1373
    %3108 = vmatprep.subr.bf16.mxu0 %v1382
    %3109 = vmatpush1.bf16.msra.mxu0 %v1381
    %3110 = vmatprep.subr.bf16.mxu0 %v1390
    %3111 = vmatpush1.bf16.msra.mxu0 %v1389
    %3112 = vmatprep.subr.bf16.mxu0 %v1398
    %3113 = vmatpush1.bf16.msra.mxu0 %v1397
    %3114 = vmatprep.subr.bf16.mxu0 %v1406
    %3115 = vmatpush1.bf16.msra.mxu0 %v1405
    %3116 = vmatprep.subr.bf16.mxu0 %v1414
    %3117 = vmatpush1.bf16.msra.mxu0 %v1413
    %3118 = vmatprep.subr.bf16.mxu0 %v1422
    %3119 = vmatpush1.bf16.msra.mxu0 %v1421
    %3120 = vmatprep.subr.bf16.mxu0 %v1430
    %3121 = vmatpush1.bf16.msra.mxu0 %v1429
    %3122 = vmatprep.subr.bf16.mxu0 %v1438
    %3123 = vmatpush1.bf16.msra.mxu0 %v1437
    %3124 = vmatprep.subr.bf16.mxu0 %v1446
    %3125 = vmatpush1.bf16.msra.mxu0 %v1445
    %3126 = vmatprep.subr.bf16.mxu0 %v1454
    %3127 = vmatpush1.bf16.msra.mxu0 %v1453
    %3128 = vmatprep.subr.bf16.mxu0 %v1462
    %3129 = vmatpush1.bf16.msra.mxu0 %v1461
    %3130 = vmatprep.subr.bf16.mxu0 %v1470
    %3131 = vmatpush1.bf16.msra.mxu0 %v1469
    %3132 = vmatprep.subr.bf16.mxu0 %v1478
    %3133 = vmatpush1.bf16.msra.mxu0 %v1477
    %3134 = vmatprep.subr.bf16.mxu0 %v1486
    %3135 = vmatpush1.bf16.msra.mxu0 %v1485
    %3136 = vmatprep.subr.bf16.mxu0 %v1494
    %3137 = vmatpush1.bf16.msra.mxu0 %v1493
    %3138 = vmatprep.mubr.bf16.mxu0 %v3023
    %3139 = vmatmul.mubr.bf16.gmra.mrb[0].mxu0 %v3022
    %v3140 = vpop.f32.mrb[0].mxu0
    %v3141 = vadd.f32 0.0, %v3140
    %v3142 = vpop.f32.mrb[0].mxu0
    %v3143 = vadd.f32 0.0, %v3142
    %v3144 = vpop.f32.mrb[0].mxu0
    %v3145 = vpop.f32.mrb[0].mxu0
    %3146 = vdwg.mxu0
    %3147 = vmatprep.subr.bf16.mxu0 %v1376
    %3148 = vmatpush1.bf16.msra.mxu0 %v1375
    %3149 = vmatprep.subr.bf16.mxu0 %v1384
    %3150 = vmatpush1.bf16.msra.mxu0 %v1383
    %3151 = vmatprep.subr.bf16.mxu0 %v1392
    %3152 = vmatpush1.bf16.msra.mxu0 %v1391
    %3153 = vmatprep.subr.bf16.mxu0 %v1400
    %3154 = vmatpush1.bf16.msra.mxu0 %v1399
    %3155 = vmatprep.subr.bf16.mxu0 %v1408
    %3156 = vmatpush1.bf16.msra.mxu0 %v1407
    %3157 = vmatprep.subr.bf16.mxu0 %v1416
    %3158 = vmatpush1.bf16.msra.mxu0 %v1415
    %3159 = vmatprep.subr.bf16.mxu0 %v1424
    %3160 = vmatpush1.bf16.msra.mxu0 %v1423
    %3161 = vmatprep.subr.bf16.mxu0 %v1432
    %3162 = vmatpush1.bf16.msra.mxu0 %v1431
    %3163 = vmatprep.subr.bf16.mxu0 %v1440
    %3164 = vmatpush1.bf16.msra.mxu0 %v1439
    %3165 = vmatprep.subr.bf16.mxu0 %v1448
    %3166 = vmatpush1.bf16.msra.mxu0 %v1447
    %3167 = vmatprep.subr.bf16.mxu0 %v1456
    %3168 = vmatpush1.bf16.msra.mxu0 %v1455
    %3169 = vmatprep.subr.bf16.mxu0 %v1464
    %3170 = vmatpush1.bf16.msra.mxu0 %v1463
    %3171 = vmatprep.subr.bf16.mxu0 %v1472
    %3172 = vmatpush1.bf16.msra.mxu0 %v1471
    %3173 = vmatprep.subr.bf16.mxu0 %v1480
    %3174 = vmatpush1.bf16.msra.mxu0 %v1479
    %3175 = vmatprep.subr.bf16.mxu0 %v1488
    %3176 = vmatpush1.bf16.msra.mxu0 %v1487
    %3177 = vmatprep.subr.bf16.mxu0 %v1496
    %3178 = vmatpush1.bf16.msra.mxu0 %v1495
    %3179 = vmatprep.mubr.bf16.mxu0 %v3023
    %3180 = vmatmul.mubr.bf16.gmra.mrb[0].mxu0 %v3022
    %v3181 = vpop.f32.mrb[0].mxu0
    %v3182 = vadd.f32 0.0, %v3181
    %v3183 = vpop.f32.mrb[0].mxu0
    %v3184 = vadd.f32 0.0, %v3183
    %v3185 = vpop.f32.mrb[0].mxu0
    %v3186 = vpop.f32.mrb[0].mxu0
    %3187 = vdwg.mxu0
    %v3188 = vld [vmem:[#allocation2 + $0x180] sm:$0xff]
    %v3189 = vld [vmem:[#allocation2 + $0x188] sm:$0xff]
    %v3190 = vld [vmem:[#allocation2 + $0x190] sm:$0xff]
    %v3191 = vld [vmem:[#allocation2 + $0x198] sm:$0xff]
    %v3192 = vld [vmem:[#allocation2 + $0x60] sm:$0xff]
    %v3193 = vld [vmem:[#allocation2 + $0x68] sm:$0xff]
    %v3194 = vld [vmem:[#allocation2 + $0x70] sm:$0xff]
    %v3195 = vld [vmem:[#allocation2 + $0x78] sm:$0xff]
    %v3196 = vadd.f32 %v3059, %v3188
    %v3197 = vadd.f32 %v3061, %v3189
    %v3198 = vadd.f32 %v3100, %v3190
    %v3199 = vadd.f32 %v3102, %v3191
    %v3200 = vxor.u32 %v3196, 2147483648
    %v3201 = vmul.f32 %v3200, 1.442695
    %v3202 = vpow.pop %v3201
    %v3203 = vadd.f32 %v3202, 1.0
    %v3204 = vrcp.pop %v3203
    %v3205 = vmul.f32 1.0, %v3204
    %v3206 = vxor.u32 %v3197, 2147483648
    %v3207 = vmul.f32 %v3206, 1.442695
    %v3208 = vpow.pop %v3207
    %v3209 = vadd.f32 %v3208, 1.0
    %v3210 = vrcp.pop %v3209
    %v3211 = vmul.f32 1.0, %v3210
    %v3212 = vtanh.pop %v3198
    %v3213 = vxor.u32 %v3199, 2147483648
    %v3214 = vmul.f32 %v3213, 1.442695
    %v3215 = vpow.pop %v3214
    %v3216 = vadd.f32 %v3215, 1.0
    %v3217 = vrcp.pop %v3216
    %v3218 = vmul.f32 1.0, %v3217
    %v3219 = vmul.f32 %v3211, %v2989
    %v3220 = vmul.f32 %v3205, %v3212
    %v3221 = vadd.f32 %v3219, %v3220
    %v3222 = vtanh.pop %v3221
    %v3223 = vmul.f32 %v3218, %v3222
    %v3224 = vadd.f32 %v3141, %v3192
    %v3225 = vadd.f32 %v3143, %v3193
    %v3226 = vadd.f32 %v3182, %v3194
    %v3227 = vadd.f32 %v3184, %v3195
    %v3228 = vxor.u32 %v3224, 2147483648
    %v3229 = vmul.f32 %v3228, 1.442695
    %v3230 = vpow.pop %v3229
    %v3231 = vadd.f32 %v3230, 1.0
    %v3232 = vrcp.pop %v3231
    %v3233 = vmul.f32 1.0, %v3232
    %v3234 = vxor.u32 %v3225, 2147483648
    %v3235 = vmul.f32 %v3234, 1.442695
    %v3236 = vpow.pop %v3235
    %v3237 = vadd.f32 %v3236, 1.0
    %v3238 = vrcp.pop %v3237
    %v3239 = vmul.f32 1.0, %v3238
    %v3240 = vtanh.pop %v3226
    %v3241 = vxor.u32 %v3227, 2147483648
    %v3242 = vmul.f32 %v3241, 1.442695
    %v3243 = vpow.pop %v3242
    %v3244 = vadd.f32 %v3243, 1.0
    %v3245 = vrcp.pop %v3244
    %v3246 = vmul.f32 1.0, %v3245
    %v3247 = vmul.f32 %v3239, %v3017
    %v3248 = vmul.f32 %v3233, %v3240
    %v3249 = vadd.f32 %v3247, %v3248
    %v3250 = vtanh.pop %v3249
    %v3251 = vmul.f32 %v3246, %v3250
    %3252 = vst [vmem:[%s2088] sm:$0xff] %v3223
    %3253 = vst [vmem:[%s2086 + $0x8] sm:$0xff] %v3251
    %v3254 = vpack.c.bf16 %v3223, %v3223
    %v3255 = vpack.c.bf16 %v3251, %v3251
    %3256 = vmatprep.subr.bf16.mxu0 %v1370
    %3257 = vmatpush1.bf16.msra.mxu0 %v1369
    %3258 = vmatprep.subr.bf16.mxu0 %v1378
    %3259 = vmatpush1.bf16.msra.mxu0 %v1377
    %3260 = vmatprep.subr.bf16.mxu0 %v1386
    %3261 = vmatpush1.bf16.msra.mxu0 %v1385
    %3262 = vmatprep.subr.bf16.mxu0 %v1394
    %3263 = vmatpush1.bf16.msra.mxu0 %v1393
    %3264 = vmatprep.subr.bf16.mxu0 %v1402
    %3265 = vmatpush1.bf16.msra.mxu0 %v1401
    %3266 = vmatprep.subr.bf16.mxu0 %v1410
    %3267 = vmatpush1.bf16.msra.mxu0 %v1409
    %3268 = vmatprep.subr.bf16.mxu0 %v1418
    %3269 = vmatpush1.bf16.msra.mxu0 %v1417
    %3270 = vmatprep.subr.bf16.mxu0 %v1426
    %3271 = vmatpush1.bf16.msra.mxu0 %v1425
    %3272 = vmatprep.subr.bf16.mxu0 %v1434
    %3273 = vmatpush1.bf16.msra.mxu0 %v1433
    %3274 = vmatprep.subr.bf16.mxu0 %v1442
    %3275 = vmatpush1.bf16.msra.mxu0 %v1441
    %3276 = vmatprep.subr.bf16.mxu0 %v1450
    %3277 = vmatpush1.bf16.msra.mxu0 %v1449
    %3278 = vmatprep.subr.bf16.mxu0 %v1458
    %3279 = vmatpush1.bf16.msra.mxu0 %v1457
    %3280 = vmatprep.subr.bf16.mxu0 %v1466
    %3281 = vmatpush1.bf16.msra.mxu0 %v1465
    %3282 = vmatprep.subr.bf16.mxu0 %v1474
    %3283 = vmatpush1.bf16.msra.mxu0 %v1473
    %3284 = vmatprep.subr.bf16.mxu0 %v1482
    %3285 = vmatpush1.bf16.msra.mxu0 %v1481
    %3286 = vmatprep.subr.bf16.mxu0 %v1490
    %3287 = vmatpush1.bf16.msra.mxu0 %v1489
    %3288 = vmatprep.mubr.bf16.mxu0 %v3255
    %3289 = vmatmul.mubr.bf16.gmra.mrb[0].mxu0 %v3254
    %v3290 = vpop.f32.mrb[0].mxu0
    %v3291 = vadd.f32 0.0, %v3290
    %v3292 = vpop.f32.mrb[0].mxu0
    %v3293 = vadd.f32 0.0, %v3292
    %v3294 = vpop.f32.mrb[0].mxu0
    %v3295 = vpop.f32.mrb[0].mxu0
    %3296 = vdwg.mxu0
    %3297 = vmatprep.subr.bf16.mxu0 %v1372
    %3298 = vmatpush1.bf16.msra.mxu0 %v1371
    %3299 = vmatprep.subr.bf16.mxu0 %v1380
    %3300 = vmatpush1.bf16.msra.mxu0 %v1379
    %3301 = vmatprep.subr.bf16.mxu0 %v1388
    %3302 = vmatpush1.bf16.msra.mxu0 %v1387
    %3303 = vmatprep.subr.bf16.mxu0 %v1396
    %3304 = vmatpush1.bf16.msra.mxu0 %v1395
    %3305 = vmatprep.subr.bf16.mxu0 %v1404
    %3306 = vmatpush1.bf16.msra.mxu0 %v1403
    %3307 = vmatprep.subr.bf16.mxu0 %v1412
    %3308 = vmatpush1.bf16.msra.mxu0 %v1411
    %3309 = vmatprep.subr.bf16.mxu0 %v1420
    %3310 = vmatpush1.bf16.msra.mxu0 %v1419
    %3311 = vmatprep.subr.bf16.mxu0 %v1428
    %3312 = vmatpush1.bf16.msra.mxu0 %v1427
    %3313 = vmatprep.subr.bf16.mxu0 %v1436
    %3314 = vmatpush1.bf16.msra.mxu0 %v1435
    %3315 = vmatprep.subr.bf16.mxu0 %v1444
    %3316 = vmatpush1.bf16.msra.mxu0 %v1443
    %3317 = vmatprep.subr.bf16.mxu0 %v1452
    %3318 = vmatpush1.bf16.msra.mxu0 %v1451
    %3319 = vmatprep.subr.bf16.mxu0 %v1460
    %3320 = vmatpush1.bf16.msra.mxu0 %v1459
    %3321 = vmatprep.subr.bf16.mxu0 %v1468
    %3322 = vmatpush1.bf16.msra.mxu0 %v1467
    %3323 = vmatprep.subr.bf16.mxu0 %v1476
    %3324 = vmatpush1.bf16.msra.mxu0 %v1475
    %3325 = vmatprep.subr.bf16.mxu0 %v1484
    %3326 = vmatpush1.bf16.msra.mxu0 %v1483
    %3327 = vmatprep.subr.bf16.mxu0 %v1492
    %3328 = vmatpush1.bf16.msra.mxu0 %v1491
    %3329 = vmatprep.mubr.bf16.mxu0 %v3255
    %3330 = vmatmul.mubr.bf16.gmra.mrb[0].mxu0 %v3254
    %v3331 = vpop.f32.mrb[0].mxu0
    %v3332 = vadd.f32 0.0, %v3331
    %v3333 = vpop.f32.mrb[0].mxu0
    %v3334 = vadd.f32 0.0, %v3333
    %v3335 = vpop.f32.mrb[0].mxu0
    %v3336 = vpop.f32.mrb[0].mxu0
    %3337 = vdwg.mxu0
    %3338 = vmatprep.subr.bf16.mxu0 %v1374
    %3339 = vmatpush1.bf16.msra.mxu0 %v1373
    %3340 = vmatprep.subr.bf16.mxu0 %v1382
    %3341 = vmatpush1.bf16.msra.mxu0 %v1381
    %3342 = vmatprep.subr.bf16.mxu0 %v1390
    %3343 = vmatpush1.bf16.msra.mxu0 %v1389
    %3344 = vmatprep.subr.bf16.mxu0 %v1398
    %3345 = vmatpush1.bf16.msra.mxu0 %v1397
    %3346 = vmatprep.subr.bf16.mxu0 %v1406
    %3347 = vmatpush1.bf16.msra.mxu0 %v1405
    %3348 = vmatprep.subr.bf16.mxu0 %v1414
    %3349 = vmatpush1.bf16.msra.mxu0 %v1413
    %3350 = vmatprep.subr.bf16.mxu0 %v1422
    %3351 = vmatpush1.bf16.msra.mxu0 %v1421
    %3352 = vmatprep.subr.bf16.mxu0 %v1430
    %3353 = vmatpush1.bf16.msra.mxu0 %v1429
    %3354 = vmatprep.subr.bf16.mxu0 %v1438
    %3355 = vmatpush1.bf16.msra.mxu0 %v1437
    %3356 = vmatprep.subr.bf16.mxu0 %v1446
    %3357 = vmatpush1.bf16.msra.mxu0 %v1445
    %3358 = vmatprep.subr.bf16.mxu0 %v1454
    %3359 = vmatpush1.bf16.msra.mxu0 %v1453
    %3360 = vmatprep.subr.bf16.mxu0 %v1462
    %3361 = vmatpush1.bf16.msra.mxu0 %v1461
    %3362 = vmatprep.subr.bf16.mxu0 %v1470
    %3363 = vmatpush1.bf16.msra.mxu0 %v1469
    %3364 = vmatprep.subr.bf16.mxu0 %v1478
    %3365 = vmatpush1.bf16.msra.mxu0 %v1477
    %3366 = vmatprep.subr.bf16.mxu0 %v1486
    %3367 = vmatpush1.bf16.msra.mxu0 %v1485
    %3368 = vmatprep.subr.bf16.mxu0 %v1494
    %3369 = vmatpush1.bf16.msra.mxu0 %v1493
    %3370 = vmatprep.mubr.bf16.mxu0 %v3255
    %3371 = vmatmul.mubr.bf16.gmra.mrb[0].mxu0 %v3254
    %v3372 = vpop.f32.mrb[0].mxu0
    %v3373 = vadd.f32 0.0, %v3372
    %v3374 = vpop.f32.mrb[0].mxu0
    %v3375 = vadd.f32 0.0, %v3374
    %v3376 = vpop.f32.mrb[0].mxu0
    %v3377 = vpop.f32.mrb[0].mxu0
    %3378 = vdwg.mxu0
    %3379 = vmatprep.subr.bf16.mxu0 %v1376
    %3380 = vmatpush1.bf16.msra.mxu0 %v1375
    %3381 = vmatprep.subr.bf16.mxu0 %v1384
    %3382 = vmatpush1.bf16.msra.mxu0 %v1383
    %3383 = vmatprep.subr.bf16.mxu0 %v1392
    %3384 = vmatpush1.bf16.msra.mxu0 %v1391
    %3385 = vmatprep.subr.bf16.mxu0 %v1400
    %3386 = vmatpush1.bf16.msra.mxu0 %v1399
    %3387 = vmatprep.subr.bf16.mxu0 %v1408
    %3388 = vmatpush1.bf16.msra.mxu0 %v1407
    %3389 = vmatprep.subr.bf16.mxu0 %v1416
    %3390 = vmatpush1.bf16.msra.mxu0 %v1415
    %3391 = vmatprep.subr.bf16.mxu0 %v1424
    %3392 = vmatpush1.bf16.msra.mxu0 %v1423
    %3393 = vmatprep.subr.bf16.mxu0 %v1432
    %3394 = vmatpush1.bf16.msra.mxu0 %v1431
    %3395 = vmatprep.subr.bf16.mxu0 %v1440
    %3396 = vmatpush1.bf16.msra.mxu0 %v1439
    %3397 = vmatprep.subr.bf16.mxu0 %v1448
    %3398 = vmatpush1.bf16.msra.mxu0 %v1447
    %3399 = vmatprep.subr.bf16.mxu0 %v1456
    %3400 = vmatpush1.bf16.msra.mxu0 %v1455
    %3401 = vmatprep.subr.bf16.mxu0 %v1464
    %3402 = vmatpush1.bf16.msra.mxu0 %v1463
    %3403 = vmatprep.subr.bf16.mxu0 %v1472
    %3404 = vmatpush1.bf16.msra.mxu0 %v1471
    %3405 = vmatprep.subr.bf16.mxu0 %v1480
    %3406 = vmatpush1.bf16.msra.mxu0 %v1479
    %3407 = vmatprep.subr.bf16.mxu0 %v1488
    %3408 = vmatpush1.bf16.msra.mxu0 %v1487
    %3409 = vmatprep.subr.bf16.mxu0 %v1496
    %3410 = vmatpush1.bf16.msra.mxu0 %v1495
    %3411 = vmatprep.mubr.bf16.mxu0 %v3255
    %3412 = vmatmul.mubr.bf16.gmra.mrb[0].mxu0 %v3254
    %v3413 = vpop.f32.mrb[0].mxu0
    %v3414 = vadd.f32 0.0, %v3413
    %v3415 = vpop.f32.mrb[0].mxu0
    %v3416 = vadd.f32 0.0, %v3415
    %v3417 = vpop.f32.mrb[0].mxu0
    %v3418 = vpop.f32.mrb[0].mxu0
    %3419 = vdwg.mxu0
    %v3420 = vld [vmem:[#allocation2 + $0x1c0] sm:$0xff]
    %v3421 = vld [vmem:[#allocation2 + $0x1c8] sm:$0xff]
    %v3422 = vld [vmem:[#allocation2 + $0x1d0] sm:$0xff]
    %v3423 = vld [vmem:[#allocation2 + $0x1d8] sm:$0xff]
    %v3424 = vld [vmem:[#allocation2 + $0x20] sm:$0xff]
    %v3425 = vld [vmem:[#allocation2 + $0x28] sm:$0xff]
    %v3426 = vld [vmem:[#allocation2 + $0x30] sm:$0xff]
    %v3427 = vld [vmem:[#allocation2 + $0x38] sm:$0xff]
    %v3428 = vadd.f32 %v3291, %v3420
    %v3429 = vadd.f32 %v3293, %v3421
    %v3430 = vadd.f32 %v3332, %v3422
    %v3431 = vadd.f32 %v3334, %v3423
    %v3432 = vxor.u32 %v3428, 2147483648
    %v3433 = vmul.f32 %v3432, 1.442695
    %v3434 = vpow.pop %v3433
    %v3435 = vadd.f32 %v3434, 1.0
    %v3436 = vrcp.pop %v3435
    %v3437 = vmul.f32 1.0, %v3436
    %v3438 = vxor.u32 %v3429, 2147483648
    %v3439 = vmul.f32 %v3438, 1.442695
    %v3440 = vpow.pop %v3439
    %v3441 = vadd.f32 %v3440, 1.0
    %v3442 = vrcp.pop %v3441
    %v3443 = vmul.f32 1.0, %v3442
    %v3444 = vtanh.pop %v3430
    %v3445 = vxor.u32 %v3431, 2147483648
    %v3446 = vmul.f32 %v3445, 1.442695
    %v3447 = vpow.pop %v3446
    %v3448 = vadd.f32 %v3447, 1.0
    %v3449 = vrcp.pop %v3448
    %v3450 = vmul.f32 1.0, %v3449
    %v3451 = vmul.f32 %v3443, %v3221
    %v3452 = vmul.f32 %v3437, %v3444
    %v3453 = vadd.f32 %v3451, %v3452
    %v3454 = vtanh.pop %v3453
    %v3455 = vmul.f32 %v3450, %v3454
    %v3456 = vadd.f32 %v3373, %v3424
    %v3457 = vadd.f32 %v3375, %v3425
    %v3458 = vadd.f32 %v3414, %v3426
    %v3459 = vadd.f32 %v3416, %v3427
    %v3460 = vxor.u32 %v3456, 2147483648
    %v3461 = vmul.f32 %v3460, 1.442695
    %v3462 = vpow.pop %v3461
    %v3463 = vadd.f32 %v3462, 1.0
    %v3464 = vrcp.pop %v3463
    %v3465 = vmul.f32 1.0, %v3464
    %v3466 = vxor.u32 %v3457, 2147483648
    %v3467 = vmul.f32 %v3466, 1.442695
    %v3468 = vpow.pop %v3467
    %v3469 = vadd.f32 %v3468, 1.0
    %v3470 = vrcp.pop %v3469
    %v3471 = vmul.f32 1.0, %v3470
    %v3472 = vtanh.pop %v3458
    %v3473 = vxor.u32 %v3459, 2147483648
    %v3474 = vmul.f32 %v3473, 1.442695
    %v3475 = vpow.pop %v3474
    %v3476 = vadd.f32 %v3475, 1.0
    %v3477 = vrcp.pop %v3476
    %v3478 = vmul.f32 1.0, %v3477
    %v3479 = vmul.f32 %v3471, %v3249
    %v3480 = vmul.f32 %v3465, %v3472
    %v3481 = vadd.f32 %v3479, %v3480
    %v3482 = vtanh.pop %v3481
    %v3483 = vmul.f32 %v3478, %v3482
    %3484 = vst [vmem:[%s1854] sm:$0xff] %v3455
    %3485 = vst [vmem:[%s6 + $0x8] sm:$0xff] %v3483
    %3486 = vst [vmem:[%s7] sm:$0xff] %v3455
    %s3487 = scalar_lea.vmem %s7, 8
    %3488 = vst [vmem:[%s3487] sm:$0xff] %v3483
    %3489 = vst [vmem:[%s8] sm:$0xff] %v3453
    %s3490 = scalar_lea.vmem %s8, 8
    %3491 = vst [vmem:[%s3490] sm:$0xff] %v3481
    // Predicated region
    $region34: #{encoder_forward.1} parent=1 // pred_check
      _
    $region35: #{encoder_forward.1} parent=1 // pred_check_branch
      %3493 = sbr.rel (0) target = $region37
    $region36: #{encoder_forward.1} parent=1 // pred_region
      _
    $region37: #{encoder_forward.1} parent=1 // pred_fallthru
      _
    // Predicated region
    $region38: #{encoder_forward.1} parent=1 // pred_check
      _
    $region39: #{encoder_forward.1} parent=1 // pred_check_branch
      %3495 = sbr.rel (0) target = $region41
    $region40: #{encoder_forward.1} parent=1 // pred_region
      _
    $region41: #{encoder_forward.1} parent=1 // pred_fallthru
      _
    // Predicated region
    $region42: #{encoder_forward.1} parent=1 // pred_check
      _
    $region43: #{encoder_forward.1} parent=1 // pred_check_branch
      %3497 = sbr.rel (0) target = $region45
    $region44: #{encoder_forward.1} parent=1 // pred_region
      _
    $region45: #{encoder_forward.1} parent=1 // pred_fallthru
      _
    // Predicated region
    $region46: #{encoder_forward.1} parent=1 // pred_check
      _
    $region47: #{encoder_forward.1} parent=1 // pred_check_branch
      %3499 = sbr.rel (0) target = $region49
    $region48: #{encoder_forward.1} parent=1 // pred_region
      _
    $region49: #{encoder_forward.1} parent=1 // pred_fallthru
      _
    // Predicated region
    $region50: #{encoder_forward.1} parent=1 // pred_check
      _
    $region51: #{encoder_forward.1} parent=1 // pred_check_branch
      %3501 = sbr.rel (0) target = $region53
    $region52: #{encoder_forward.1} parent=1 // pred_region
      _
    $region53: #{encoder_forward.1} parent=1 // pred_fallthru
      _
    // Predicated region
    $region54: #{encoder_forward.1} parent=1 // pred_check
      _
    $region55: #{encoder_forward.1} parent=1 // pred_check_branch
      %3503 = sbr.rel (0) target = $region57
    $region56: #{encoder_forward.1} parent=1 // pred_region
      _
    $region57: #{encoder_forward.1} parent=1 // pred_fallthru
      _
    %3504 = vsyncpa [#allocation4], 1
    %3505 = vsyncpa [#allocation6], 1

</llo_original>
